<compile_context>
chip_gen: v5e
topology: v5e:2x2
jax: 0.10.0
libtpu: 0.0.40
codegen_flags: <defaults>
</compile_context>

<pallas_src>
import numpy as np
import jax
import jax.numpy as jnp
from jax import lax
from jax.experimental import pallas as pl
from jax.experimental.pallas import tpu as pltpu


_TAPS2 = ((0, 0), (0, 1), (1, 0), (1, 1))                            # ConvT polyphase taps
_TAPS3 = tuple((dy, dx) for dy in (-1, 0, 1) for dx in (-1, 0, 1))   # 3x3 conv taps


# ---------------------------------------------------------------------------
# Fused kernel (one image per grid step, everything in S2D (HW, C) layout)
# ---------------------------------------------------------------------------
def _make_fused_kernel(Hl, Wl, c2, Fo, eps):
    HW = Hl * Wl                      # low-res pixels ( = full-res pixels / 4 )
    inv_n = 1.0 / (4.0 * HW)          # 1 / (full-res H*W)

    def kernel(x_ref, skip_ref, mask_ref, wt_ref, w0s_ref, w0u_ref,
               wr1_ref, wr2_ref, w1_ref, b1_ref, alpha_ref, o_ref):
        masks = mask_ref[...]                                   # (HW, 9) f32, hoisted once
        tap_m = [masks[:, t:t + 1] for t in range(9)]           # (HW, 1) border masks

        def shifted(v, dy, dx):
            # v[(y, x)] -> v[(y+dy, x+dx)], zero outside the image: a sublane rotation of
            # the row-major (HW, C) tensor (XLU) + border mask (VPU).  pltpu.roll follows
            # jnp.roll semantics: out[i] = v[(i - shift) % HW].
            if dy == 0 and dx == 0:
                return v
            sh = (-(dy * Wl + dx)) % HW
            return pltpu.roll(v, shift=sh, axis=0) * tap_m[(dy + 1) * 3 + (dx + 1)]

        def conv_taps(v, taps, w_ref, acc=None):
            # One MXU matmul per tap against a (n_taps, Cin, Cout) bf16 slab; f32 accumulate.
            for ti, (dy, dx) in enumerate(taps):
                vt = shifted(v, dy, dx).astype(jnp.bfloat16)
                d = jnp.dot(vt, w_ref[ti], preferred_element_type=jnp.float32)
                acc = d if acc is None else acc + d
            return acc

        def inorm_prelu(acc, C, alpha):
            # acc: (HW, 4C) f32, lanes [phase*C + c].  InstanceNorm2d(affine=False) stats per
            # original channel c over all 4*HW full-res pixels; mean-shifted two-pass var.
            s1 = jnp.sum(acc, axis=0, keepdims=True)
            mean = (s1[:, 0:C] + s1[:, C:2 * C]
                    + s1[:, 2 * C:3 * C] + s1[:, 3 * C:4 * C]) * inv_n
            cen = acc - jnp.concatenate([mean] * 4, axis=-1)
            s2 = jnp.sum(cen * cen, axis=0, keepdims=True)
            var = (s2[:, 0:C] + s2[:, C:2 * C]
                   + s2[:, 2 * C:3 * C] + s2[:, 3 * C:4 * C]) * inv_n
            inv = jnp.concatenate([lax.rsqrt(var + eps)] * 4, axis=-1)
            y = cen * inv
            return jnp.where(y >= 0, y, alpha * y)              # PReLU (single shared param)

        # --- ConvTranspose2d(c2, c2, k=3, s=2, p=1, out=2Hx2W) as a dense 2x2 polyphase conv.
        #     (conv biases followed by InstanceNorm cancel exactly and are omitted.) ---
        up = inorm_prelu(conv_taps(x_ref[...], _TAPS2, wt_ref), c2, alpha_ref[0])

        # --- Conv3x3(in_chans -> out_chans) over torch.cat([skip, up], dim=1); the concat is
        #     folded into two weight blocks, so nothing is concatenated in VMEM. ---
        acc0 = conv_taps(skip_ref[...], _TAPS3, w0s_ref)
        acc0 = conv_taps(up, _TAPS3, w0u_ref, acc0)
        h = inorm_prelu(acc0, Fo, alpha_ref[1])

        # --- ResidualBlock.conv_block: (Conv3x3 + IN + PReLU) x 2 ---
        r = inorm_prelu(conv_taps(h, _TAPS3, wr1_ref), Fo, alpha_ref[2])
        r = inorm_prelu(conv_taps(r, _TAPS3, wr2_ref), Fo, alpha_ref[3])

        # --- ResidualBlock: conv_1x1(h) + conv_block(h); uses the live `h` value.
        #     (block-diag 1x1 weight; could be split into 4 per-phase dots if ever MXU-bound)
        out = jnp.dot(h.astype(jnp.bfloat16), w1_ref[...],
                      preferred_element_type=jnp.float32)
        o_ref[...] = out + b1_ref[...] + r

    return kernel


# ---------------------------------------------------------------------------
# Host-side weight re-layout into the per-tap S2D form consumed by the kernel
# ---------------------------------------------------------------------------
def _convT_s2d(wt):
    """ConvTranspose2d weight (Cin, Cout, 3, 3), s=2, p=1 -> per-tap (4, Cin, 4*Cout)."""
    Cin, Cout = wt.shape[:2]
    WT = np.zeros((4, Cin, 4 * Cout), np.float32)
    kmap = {(0, 0): 1, (1, 0): 2, (1, 1): 0}   # (output parity, low-res tap) -> kernel index
    for dy in (0, 1):
        for dx in (0, 1):
            for py in (0, 1):
                for px in (0, 1):
                    kh, kw = kmap.get((py, dy)), kmap.get((px, dx))
                    if kh is None or kw is None:
                        continue
                    go = py * 2 + px
                    WT[dy * 2 + dx, :, go * Cout:(go + 1) * Cout] = wt[:, :, kh, kw]
    return WT


def _conv3_s2d(w):
    """Full-res 3x3 conv weight (Cout, Cin, 3, 3), pad=1 -> low-res taps (9, 4*Cin, 4*Cout)."""
    Cout, Cin = w.shape[:2]
    WB = np.zeros((9, 4 * Cin, 4 * Cout), np.float32)
    for oy in (-1, 0, 1):
        for ox in (-1, 0, 1):
            t = (oy + 1) * 3 + (ox + 1)
            for ry in (0, 1):
                for rx in (0, 1):
                    for py in (0, 1):
                        for px in (0, 1):
                            ky = 2 * oy + ry - py + 1
                            kx = 2 * ox + rx - px + 1
                            if 0 <= ky <= 2 and 0 <= kx <= 2:
                                gi, go = ry * 2 + rx, py * 2 + px
                                WB[t, gi * Cin:(gi + 1) * Cin,
                                   go * Cout:(go + 1) * Cout] = w[:, :, ky, kx].T
    return WB


def init_params(key, in_chans, out_chans):
    """Raw parameters in PyTorch layouts (deterministic synthetic init)."""
    c2, Fo = in_chans // 2, out_chans
    ks = jax.random.split(key, 10)
    nrm = lambda k, s, sc=0.1: jax.random.normal(k, s, jnp.float32) * sc
    return dict(
        wt=nrm(ks[0], (c2, c2, 3, 3)), bt=nrm(ks[1], (c2,)), alpha_up=jnp.float32(0.25),
        w0=nrm(ks[2], (Fo, in_chans, 3, 3)), b0=nrm(ks[3], (Fo,)), alpha0=jnp.float32(0.20),
        wr1=nrm(ks[4], (Fo, Fo, 3, 3)), br1=nrm(ks[5], (Fo,)), ar1=jnp.float32(0.30),
        wr2=nrm(ks[6], (Fo, Fo, 3, 3)), br2=nrm(ks[7], (Fo,)), ar2=jnp.float32(0.15),
        w1=nrm(ks[8], (Fo, Fo, 1, 1)), b1=nrm(ks[9], (Fo,)),
    )


def prepare_kernel_params(p, in_chans, out_chans):
    c2, Fo, Cc = in_chans // 2, out_chans, in_chans
    bf = jnp.bfloat16

    WT = _convT_s2d(np.asarray(p["wt"]))                          # (4, c2, 4*c2)
    WB0 = _conv3_s2d(np.asarray(p["w0"]))                         # (9, 4*Cc, 4*Fo)
    # Split the concat input [skip | up] into two weight blocks, rows [phase*c2 + c].
    WB0 = WB0.reshape(9, 4, Cc, 4 * Fo)
    W0s = WB0[:, :, :c2, :].reshape(9, 4 * c2, 4 * Fo)
    W0u = WB0[:, :, c2:, :].reshape(9, 4 * c2, 4 * Fo)
    WR1 = _conv3_s2d(np.asarray(p["wr1"]))                        # (9, 4*Fo, 4*Fo)
    WR2 = _conv3_s2d(np.asarray(p["wr2"]))
    W1 = np.kron(np.eye(4, dtype=np.float32),
                 np.asarray(p["w1"]).reshape(Fo, Fo).T)           # block-diag (4Fo, 4Fo)
    b1_4 = np.tile(np.asarray(p["b1"]), 4).reshape(1, 4 * Fo).astype(np.float32)
    alphas = np.array([float(p["alpha_up"]), float(p["alpha0"]),
                       float(p["ar1"]), float(p["ar2"])], np.float32)
    # bt / b0 / br1 / br2 are not passed to the kernel: a per-channel conv bias is removed
    # exactly by the InstanceNorm (affine=False) that follows it.
    return dict(Fo=Fo,
                wt=jnp.asarray(WT, bf), w0s=jnp.asarray(W0s, bf), w0u=jnp.asarray(W0u, bf),
                wr1=jnp.asarray(WR1, bf), wr2=jnp.asarray(WR2, bf), w1=jnp.asarray(W1, bf),
                b1=jnp.asarray(b1_4), alphas=jnp.asarray(alphas))


# ---------------------------------------------------------------------------
# ConvUpBlock forward (public wrapper: NCHW in / NCHW out)
# ---------------------------------------------------------------------------
def conv_up_block(kp, input_nchw, skip_nchw, eps=1e-5):
    x = jnp.transpose(input_nchw, (0, 2, 3, 1)).astype(jnp.float32)    # (B, Hl, Wl, c2)
    skip = jnp.transpose(skip_nchw, (0, 2, 3, 1)).astype(jnp.float32)  # (B, 2Hl, 2Wl, c2)
    B, Hl, Wl, c2 = x.shape
    _, Hs, Ws, _ = skip.shape
    # TODO(synk): fused S2D path assumes output_size == 2x input (output_padding == 1,
    #             the standard stride-2 U-Net skip geometry).
    assert Hs == 2 * Hl and Ws == 2 * Wl, (Hs, Ws, Hl, Wl)
    Fo = kp["Fo"]
    HW = Hl * Wl

    # Layout plumbing in XLA: flatten spatial, space-to-depth the skip tensor.
    x_flat = x.reshape(B, HW, c2)
    skip_s2d = (skip.reshape(B, Hl, 2, Wl, 2, c2)
                .transpose(0, 1, 3, 2, 4, 5).reshape(B, HW, 4 * c2))

    # Host-precomputed border masks for the rolled taps (column t = tap (dy, dx),
    # t = (dy+1)*3 + (dx+1)).
    yy, xx = np.meshgrid(np.arange(Hl), np.arange(Wl), indexing="ij")
    yy, xx = yy.reshape(-1), xx.reshape(-1)
    cols = []
    for dy in (-1, 0, 1):
        for dx in (-1, 0, 1):
            ok = np.ones(HW, np.float32)
            if dy:
                ok = ok * ((yy + dy >= 0) & (yy + dy < Hl)).astype(np.float32)
            if dx:
                ok = ok * ((xx + dx >= 0) & (xx + dx < Wl)).astype(np.float32)
            cols.append(ok)
    tap_masks = jnp.asarray(np.stack(cols, axis=1))                    # (HW, 9) f32

    # Explicit VMEM budget from the resident set (double-buffered I/O + weights + temps).
    io_bytes = 2 * 4 * HW * (c2 + 4 * c2 + 9 + 4 * Fo)
    w_bytes = 2 * (4 * c2 * 4 * c2 + 2 * 9 * 4 * c2 * 4 * Fo
                   + 2 * 9 * (4 * Fo) ** 2 + (4 * Fo) ** 2 + 4 * Fo)
    live_bytes = 16 * 4 * HW * 4 * Fo
    vmem_limit = int(min(64 * 2 ** 20,
                         2 * (io_bytes + w_bytes + live_bytes) + 16 * 2 ** 20))

    kernel = _make_fused_kernel(Hl, Wl, c2, Fo, float(eps))
    # TODO(synk): for production H*W, add a spatial row-tile grid axis (1 low-res halo row)
    #             so the resident set fits v7x's 64 MiB VMEM and B==1 still gives >=2
    #             parallel grid steps; when B is large and H*W is small, block the batch
    #             dim instead and stack images along the matmul M dimension.
    out_s2d = pl.pallas_call(
        kernel,
        out_shape=jax.ShapeDtypeStruct((B, HW, 4 * Fo), jnp.float32),
        grid=(B,),
        in_specs=[
            pl.BlockSpec((None, HW, c2), lambda i: (i, 0, 0)),
            pl.BlockSpec((None, HW, 4 * c2), lambda i: (i, 0, 0)),
            pl.BlockSpec((HW, 9), lambda i: (0, 0)),
            pl.BlockSpec(kp["wt"].shape, lambda i: (0, 0, 0)),
            pl.BlockSpec(kp["w0s"].shape, lambda i: (0, 0, 0)),
            pl.BlockSpec(kp["w0u"].shape, lambda i: (0, 0, 0)),
            pl.BlockSpec(kp["wr1"].shape, lambda i: (0, 0, 0)),
            pl.BlockSpec(kp["wr2"].shape, lambda i: (0, 0, 0)),
            pl.BlockSpec(kp["w1"].shape, lambda i: (0, 0)),
            pl.BlockSpec(kp["b1"].shape, lambda i: (0, 0)),
            pl.BlockSpec(memory_space=pltpu.MemorySpace.SMEM),
        ],
        out_specs=pl.BlockSpec((None, HW, 4 * Fo), lambda i: (i, 0, 0)),
        compiler_params=pltpu.CompilerParams(
            dimension_semantics=("parallel",), vmem_limit_bytes=vmem_limit),
    )(x_flat, skip_s2d, tap_masks, kp["wt"], kp["w0s"], kp["w0u"],
      kp["wr1"], kp["wr2"], kp["w1"], kp["b1"], kp["alphas"])

    # depth-to-space back to full resolution, then NHWC -> NCHW.
    out = (out_s2d.reshape(B, Hl, Wl, 2, 2, Fo)
           .transpose(0, 1, 3, 2, 4, 5).reshape(B, Hs, Ws, Fo))
    return jnp.transpose(out, (0, 3, 1, 2))


# ---------------------------------------------------------------------------
# Pure-XLA reference of the PyTorch module (for the self-check)
# ---------------------------------------------------------------------------
def conv_up_block_reference(p, input_nchw, skip_nchw, eps=1e-5):
    hp = lax.Precision.HIGHEST
    x = jnp.transpose(input_nchw, (0, 2, 3, 1)).astype(jnp.float32)
    skip = jnp.transpose(skip_nchw, (0, 2, 3, 1)).astype(jnp.float32)

    def conv(x, w_oihw, b, pad):
        w = jnp.transpose(w_oihw, (2, 3, 1, 0))
        y = lax.conv_general_dilated(x, w, (1, 1), [(pad, pad), (pad, pad)],
                                     dimension_numbers=("NHWC", "HWIO", "NHWC"),
                                     precision=hp)
        return y + b

    def conv_t(x, w_iohw, b):  # ConvTranspose2d(k=3, s=2, p=1, output_padding=1)
        wf = jnp.transpose(w_iohw[:, :, ::-1, ::-1], (2, 3, 0, 1))
        y = lax.conv_general_dilated(x, wf, (1, 1), [(1, 2), (1, 2)],
                                     lhs_dilation=(2, 2),
                                     dimension_numbers=("NHWC", "HWIO", "NHWC"),
                                     precision=hp)
        return y + b

    def inorm(x):
        m = jnp.mean(x, axis=(1, 2), keepdims=True)
        v = jnp.mean(jnp.square(x - m), axis=(1, 2), keepdims=True)
        return (x - m) * lax.rsqrt(v + eps)

    prelu = lambda x, a: jnp.where(x >= 0, x, a * x)

    up = prelu(inorm(conv_t(x, p["wt"], p["bt"])), p["alpha_up"])
    cat = jnp.concatenate([skip, up], axis=-1)
    h = prelu(inorm(conv(cat, p["w0"], p["b0"], 1)), p["alpha0"])
    r = prelu(inorm(conv(h, p["wr1"], p["br1"], 1)), p["ar1"])
    r = prelu(inorm(conv(r, p["wr2"], p["br2"], 1)), p["ar2"])
    out = conv(h, p["w1"], p["b1"], 0) + r
    return jnp.transpose(out, (0, 3, 1, 2))


if __name__ == "__main__":
    key = jax.random.PRNGKey(0)
    in_chans, out_chans = 16, 32       # out_chans=32 -> 4*Fo = 128 lanes (dense stores)
    B, Hi, Wi = 2, 8, 8                # `input` : (B, in_chans//2, 8, 8)
    Hs, Ws = 16, 16                    # `skip`  : (B, in_chans//2, 16, 16)

    k_in, k_skip, k_par = jax.random.split(key, 3)
    inp = jax.random.normal(k_in, (B, in_chans // 2, Hi, Wi), jnp.float32)
    skip = jax.random.normal(k_skip, (B, in_chans // 2, Hs, Ws), jnp.float32)
    params = init_params(k_par, in_chans, out_chans)
    kparams = prepare_kernel_params(params, in_chans, out_chans)

    fused = jax.jit(lambda a, b: conv_up_block(kparams, a, b))
    out = jax.block_until_ready(fused(inp, skip))
    assert out.shape == (B, out_chans, Hs, Ws), out.shape
    assert bool(jnp.all(jnp.isfinite(out)))

    ref = jax.block_until_ready(
        jax.jit(lambda a, b: conv_up_block_reference(params, a, b))(inp, skip))
    scale = float(jnp.max(jnp.abs(ref)))
    err = float(jnp.max(jnp.abs(out - ref)))
    # Error budget dominated by bf16 MXU operands through 4 chained convs (each followed by
    # a re-normalizing InstanceNorm); a real wiring bug would produce O(1) errors.
    assert err <= 5e-2 * scale + 5e-3, f"mismatch vs reference: max|diff|={err:.4g} (ref max {scale:.3g})"
    print("KERNEL_OK")
</pallas_src>

<mosaic_0001>
module attributes {stable_mosaic.version = 11 : i64} {
  func.func @kernel(%arg0: i32, %arg1: memref<1x64x8xf32, #tpu.memory_space<vmem>>, %arg2: memref<1x64x32xf32, #tpu.memory_space<vmem>>, %arg3: memref<64x9xf32, #tpu.memory_space<vmem>>, %arg4: memref<4x8x32xbf16, #tpu.memory_space<vmem>>, %arg5: memref<9x32x128xbf16, #tpu.memory_space<vmem>>, %arg6: memref<9x32x128xbf16, #tpu.memory_space<vmem>>, %arg7: memref<9x128x128xbf16, #tpu.memory_space<vmem>>, %arg8: memref<9x128x128xbf16, #tpu.memory_space<vmem>>, %arg9: memref<128x128xbf16, #tpu.memory_space<vmem>>, %arg10: memref<1x128xf32, #tpu.memory_space<vmem>>, %arg11: memref<4xf32, #tpu.memory_space<smem>>, %arg12: memref<1x64x128xf32, #tpu.memory_space<vmem>>) attributes {dimension_semantics = [#tpu.dimension_semantics<parallel>], iteration_bounds = array<i64: 2>, scalar_prefetch = 0 : i64, scratch_operands = 0 : i64, tpu.core_type = #tpu.core_type<tc>, window_params = [{transform_indices = @transform_0, window_bounds = array<i64: 1, 64, 8>}, {transform_indices = @transform_1, window_bounds = array<i64: 1, 64, 32>}, {pipeline_mode = #tpu.pipeline_mode<synchronous>, transform_indices = @transform_2, window_bounds = array<i64: 64, 9>}, {pipeline_mode = #tpu.pipeline_mode<synchronous>, transform_indices = @transform_3, window_bounds = array<i64: 4, 8, 32>}, {pipeline_mode = #tpu.pipeline_mode<synchronous>, transform_indices = @transform_4, window_bounds = array<i64: 9, 32, 128>}, {pipeline_mode = #tpu.pipeline_mode<synchronous>, transform_indices = @transform_5, window_bounds = array<i64: 9, 32, 128>}, {pipeline_mode = #tpu.pipeline_mode<synchronous>, transform_indices = @transform_6, window_bounds = array<i64: 9, 128, 128>}, {pipeline_mode = #tpu.pipeline_mode<synchronous>, transform_indices = @transform_7, window_bounds = array<i64: 9, 128, 128>}, {pipeline_mode = #tpu.pipeline_mode<synchronous>, transform_indices = @transform_8, window_bounds = array<i64: 128, 128>}, {pipeline_mode = #tpu.pipeline_mode<synchronous>, transform_indices = @transform_9, window_bounds = array<i64: 1, 128>}, {transform_indices = @transform_10, window_bounds = array<i64: 4>}, {transform_indices = @transform_11, window_bounds = array<i64: 1, 64, 128>}]} {
    %c0 = arith.constant 0 : index
    %c0_0 = arith.constant 0 : index
    %0 = vector.load %arg3[%c0, %c0_0] : memref<64x9xf32, #tpu.memory_space<vmem>>, vector<64x9xf32>
    %1 = vector.extract_strided_slice %0 {offsets = [0, 0], sizes = [64, 1], strides = [1, 1]} : vector<64x9xf32> to vector<64x1xf32>
    %2 = vector.extract_strided_slice %0 {offsets = [0, 1], sizes = [64, 1], strides = [1, 1]} : vector<64x9xf32> to vector<64x1xf32>
    %3 = vector.extract_strided_slice %0 {offsets = [0, 2], sizes = [64, 1], strides = [1, 1]} : vector<64x9xf32> to vector<64x1xf32>
    %4 = vector.extract_strided_slice %0 {offsets = [0, 3], sizes = [64, 1], strides = [1, 1]} : vector<64x9xf32> to vector<64x1xf32>
    %5 = vector.extract_strided_slice %0 {offsets = [0, 5], sizes = [64, 1], strides = [1, 1]} : vector<64x9xf32> to vector<64x1xf32>
    %6 = vector.extract_strided_slice %0 {offsets = [0, 6], sizes = [64, 1], strides = [1, 1]} : vector<64x9xf32> to vector<64x1xf32>
    %7 = vector.extract_strided_slice %0 {offsets = [0, 7], sizes = [64, 1], strides = [1, 1]} : vector<64x9xf32> to vector<64x1xf32>
    %8 = vector.extract_strided_slice %0 {offsets = [0, 8], sizes = [64, 1], strides = [1, 1]} : vector<64x9xf32> to vector<64x1xf32>
    %c0_1 = arith.constant 0 : index
    %c0_2 = arith.constant 0 : index
    %c0_3 = arith.constant 0 : index
    %9 = vector.load %arg1[%c0_1, %c0_2, %c0_3] : memref<1x64x8xf32, #tpu.memory_space<vmem>>, vector<1x64x8xf32>
    %10 = vector.shape_cast %9 : vector<1x64x8xf32> to vector<64x8xf32>
    %11 = arith.truncf %10 : vector<64x8xf32> to vector<64x8xbf16>
    %c0_4 = arith.constant 0 : index
    %c0_5 = arith.constant 0 : index
    %c0_6 = arith.constant 0 : index
    %12 = vector.load %arg4[%c0_4, %c0_5, %c0_6] : memref<4x8x32xbf16, #tpu.memory_space<vmem>>, vector<1x8x32xbf16>
    %13 = vector.shape_cast %12 : vector<1x8x32xbf16> to vector<8x32xbf16>
    %cst = arith.constant dense<0.000000e+00> : vector<64x32xf32>
    %14 = tpu.matmul %11, %13, %cst {dimension_numbers = #tpu.dot_dimension_numbers<[1], [0], [0], [1], [0, 0, 1, 1], [], []>} : vector<64x8xbf16>, vector<8x32xbf16>, vector<64x32xf32> -> vector<64x32xf32>
    %c63_i32 = arith.constant 63 : i32
    %15 = tpu.dynamic_rotate %10 by %c63_i32 dim 0 : vector<64x8xf32>, i32 -> vector<64x8xf32>
    %16 = vector.broadcast %5 : vector<64x1xf32> to vector<64x8xf32>
    %17 = arith.mulf %15, %16 : vector<64x8xf32>
    %18 = arith.truncf %17 : vector<64x8xf32> to vector<64x8xbf16>
    %c1 = arith.constant 1 : index
    %c0_7 = arith.constant 0 : index
    %c0_8 = arith.constant 0 : index
    %19 = vector.load %arg4[%c1, %c0_7, %c0_8] : memref<4x8x32xbf16, #tpu.memory_space<vmem>>, vector<1x8x32xbf16>
    %20 = vector.shape_cast %19 : vector<1x8x32xbf16> to vector<8x32xbf16>
    %cst_9 = arith.constant dense<0.000000e+00> : vector<64x32xf32>
    %21 = tpu.matmul %18, %20, %cst_9 {dimension_numbers = #tpu.dot_dimension_numbers<[1], [0], [0], [1], [0, 0, 1, 1], [], []>} : vector<64x8xbf16>, vector<8x32xbf16>, vector<64x32xf32> -> vector<64x32xf32>
    %22 = arith.addf %14, %21 : vector<64x32xf32>
    %c56_i32 = arith.constant 56 : i32
    %23 = tpu.dynamic_rotate %10 by %c56_i32 dim 0 : vector<64x8xf32>, i32 -> vector<64x8xf32>
    %24 = vector.broadcast %7 : vector<64x1xf32> to vector<64x8xf32>
    %25 = arith.mulf %23, %24 : vector<64x8xf32>
    %26 = arith.truncf %25 : vector<64x8xf32> to vector<64x8xbf16>
    %c2 = arith.constant 2 : index
    %c0_10 = arith.constant 0 : index
    %c0_11 = arith.constant 0 : index
    %27 = vector.load %arg4[%c2, %c0_10, %c0_11] : memref<4x8x32xbf16, #tpu.memory_space<vmem>>, vector<1x8x32xbf16>
    %28 = vector.shape_cast %27 : vector<1x8x32xbf16> to vector<8x32xbf16>
    %cst_12 = arith.constant dense<0.000000e+00> : vector<64x32xf32>
    %29 = tpu.matmul %26, %28, %cst_12 {dimension_numbers = #tpu.dot_dimension_numbers<[1], [0], [0], [1], [0, 0, 1, 1], [], []>} : vector<64x8xbf16>, vector<8x32xbf16>, vector<64x32xf32> -> vector<64x32xf32>
    %30 = arith.addf %22, %29 : vector<64x32xf32>
    %c55_i32 = arith.constant 55 : i32
    %31 = tpu.dynamic_rotate %10 by %c55_i32 dim 0 : vector<64x8xf32>, i32 -> vector<64x8xf32>
    %32 = vector.broadcast %8 : vector<64x1xf32> to vector<64x8xf32>
    %33 = arith.mulf %31, %32 : vector<64x8xf32>
    %34 = arith.truncf %33 : vector<64x8xf32> to vector<64x8xbf16>
    %c3 = arith.constant 3 : index
    %c0_13 = arith.constant 0 : index
    %c0_14 = arith.constant 0 : index
    %35 = vector.load %arg4[%c3, %c0_13, %c0_14] : memref<4x8x32xbf16, #tpu.memory_space<vmem>>, vector<1x8x32xbf16>
    %36 = vector.shape_cast %35 : vector<1x8x32xbf16> to vector<8x32xbf16>
    %cst_15 = arith.constant dense<0.000000e+00> : vector<64x32xf32>
    %37 = tpu.matmul %34, %36, %cst_15 {dimension_numbers = #tpu.dot_dimension_numbers<[1], [0], [0], [1], [0, 0, 1, 1], [], []>} : vector<64x8xbf16>, vector<8x32xbf16>, vector<64x32xf32> -> vector<64x32xf32>
    %38 = arith.addf %30, %37 : vector<64x32xf32>
    %c0_16 = arith.constant 0 : index
    %39 = memref.load %arg11[%c0_16] : memref<4xf32, #tpu.memory_space<smem>>
    %cst_17 = arith.constant dense<0.000000e+00> : vector<32xf32>
    %40 = vector.multi_reduction <add>, %38, %cst_17 [0] : vector<64x32xf32> to vector<32xf32>
    %41 = vector.shape_cast %40 : vector<32xf32> to vector<1x32xf32>
    %42 = vector.extract_strided_slice %41 {offsets = [0, 0], sizes = [1, 8], strides = [1, 1]} : vector<1x32xf32> to vector<1x8xf32>
    %43 = vector.extract_strided_slice %41 {offsets = [0, 8], sizes = [1, 8], strides = [1, 1]} : vector<1x32xf32> to vector<1x8xf32>
    %44 = arith.addf %42, %43 : vector<1x8xf32>
    %45 = vector.extract_strided_slice %41 {offsets = [0, 16], sizes = [1, 8], strides = [1, 1]} : vector<1x32xf32> to vector<1x8xf32>
    %46 = arith.addf %44, %45 : vector<1x8xf32>
    %47 = vector.extract_strided_slice %41 {offsets = [0, 24], sizes = [1, 8], strides = [1, 1]} : vector<1x32xf32> to vector<1x8xf32>
    %48 = arith.addf %46, %47 : vector<1x8xf32>
    %cst_18 = arith.constant 3.906250e-03 : f32
    %49 = vector.broadcast %cst_18 : f32 to vector<1x8xf32>
    %50 = arith.mulf %48, %49 : vector<1x8xf32>
    %51 = tpu.concatenate %50, %50, %50, %50 in 1 : vector<1x8xf32>, vector<1x8xf32>, vector<1x8xf32>, vector<1x8xf32> -> vector<1x32xf32>
    %52 = vector.broadcast %51 : vector<1x32xf32> to vector<64x32xf32>
    %53 = arith.subf %38, %52 : vector<64x32xf32>
    %54 = arith.mulf %53, %53 : vector<64x32xf32>
    %cst_19 = arith.constant dense<0.000000e+00> : vector<32xf32>
    %55 = vector.multi_reduction <add>, %54, %cst_19 [0] : vector<64x32xf32> to vector<32xf32>
    %56 = vector.shape_cast %55 : vector<32xf32> to vector<1x32xf32>
    %57 = vector.extract_strided_slice %56 {offsets = [0, 0], sizes = [1, 8], strides = [1, 1]} : vector<1x32xf32> to vector<1x8xf32>
    %58 = vector.extract_strided_slice %56 {offsets = [0, 8], sizes = [1, 8], strides = [1, 1]} : vector<1x32xf32> to vector<1x8xf32>
    %59 = arith.addf %57, %58 : vector<1x8xf32>
    %60 = vector.extract_strided_slice %56 {offsets = [0, 16], sizes = [1, 8], strides = [1, 1]} : vector<1x32xf32> to vector<1x8xf32>
    %61 = arith.addf %59, %60 : vector<1x8xf32>
    %62 = vector.extract_strided_slice %56 {offsets = [0, 24], sizes = [1, 8], strides = [1, 1]} : vector<1x32xf32> to vector<1x8xf32>
    %63 = arith.addf %61, %62 : vector<1x8xf32>
    %cst_20 = arith.constant 3.906250e-03 : f32
    %64 = vector.broadcast %cst_20 : f32 to vector<1x8xf32>
    %65 = arith.mulf %63, %64 : vector<1x8xf32>
    %cst_21 = arith.constant 9.99999974E-6 : f32
    %66 = vector.broadcast %cst_21 : f32 to vector<1x8xf32>
    %67 = arith.addf %65, %66 : vector<1x8xf32>
    %68 = math.rsqrt %67 : vector<1x8xf32>
    %69 = tpu.concatenate %68, %68, %68, %68 in 1 : vector<1x8xf32>, vector<1x8xf32>, vector<1x8xf32>, vector<1x8xf32> -> vector<1x32xf32>
    %70 = vector.broadcast %69 : vector<1x32xf32> to vector<64x32xf32>
    %71 = arith.mulf %53, %70 : vector<64x32xf32>
    %cst_22 = arith.constant 0.000000e+00 : f32
    %72 = vector.broadcast %cst_22 : f32 to vector<64x32xf32>
    %73 = arith.cmpf oge, %71, %72 : vector<64x32xf32>
    %74 = vector.broadcast %39 : f32 to vector<64x32xf32>
    %75 = arith.mulf %74, %71 : vector<64x32xf32>
    %76 = arith.select %73, %71, %75 : vector<64x32xi1>, vector<64x32xf32>
    %c0_23 = arith.constant 0 : index
    %c0_24 = arith.constant 0 : index
    %c0_25 = arith.constant 0 : index
    %77 = vector.load %arg2[%c0_23, %c0_24, %c0_25] : memref<1x64x32xf32, #tpu.memory_space<vmem>>, vector<1x64x32xf32>
    %78 = vector.shape_cast %77 : vector<1x64x32xf32> to vector<64x32xf32>
    %c9_i32 = arith.constant 9 : i32
    %79 = tpu.dynamic_rotate %78 by %c9_i32 dim 0 : vector<64x32xf32>, i32 -> vector<64x32xf32>
    %80 = vector.broadcast %1 : vector<64x1xf32> to vector<64x32xf32>
    %81 = arith.mulf %79, %80 : vector<64x32xf32>
    %82 = arith.truncf %81 : vector<64x32xf32> to vector<64x32xbf16>
    %c0_26 = arith.constant 0 : index
    %c0_27 = arith.constant 0 : index
    %c0_28 = arith.constant 0 : index
    %83 = vector.load %arg5[%c0_26, %c0_27, %c0_28] : memref<9x32x128xbf16, #tpu.memory_space<vmem>>, vector<1x32x128xbf16>
    %84 = vector.shape_cast %83 : vector<1x32x128xbf16> to vector<32x128xbf16>
    %cst_29 = arith.constant dense<0.000000e+00> : vector<64x128xf32>
    %85 = tpu.matmul %82, %84, %cst_29 {dimension_numbers = #tpu.dot_dimension_numbers<[1], [0], [0], [1], [0, 0, 1, 1], [], []>} : vector<64x32xbf16>, vector<32x128xbf16>, vector<64x128xf32> -> vector<64x128xf32>
    %c8_i32 = arith.constant 8 : i32
    %86 = tpu.dynamic_rotate %78 by %c8_i32 dim 0 : vector<64x32xf32>, i32 -> vector<64x32xf32>
    %87 = vector.broadcast %2 : vector<64x1xf32> to vector<64x32xf32>
    %88 = arith.mulf %86, %87 : vector<64x32xf32>
    %89 = arith.truncf %88 : vector<64x32xf32> to vector<64x32xbf16>
    %c1_30 = arith.constant 1 : index
    %c0_31 = arith.constant 0 : index
    %c0_32 = arith.constant 0 : index
    %90 = vector.load %arg5[%c1_30, %c0_31, %c0_32] : memref<9x32x128xbf16, #tpu.memory_space<vmem>>, vector<1x32x128xbf16>
    %91 = vector.shape_cast %90 : vector<1x32x128xbf16> to vector<32x128xbf16>
    %cst_33 = arith.constant dense<0.000000e+00> : vector<64x128xf32>
    %92 = tpu.matmul %89, %91, %cst_33 {dimension_numbers = #tpu.dot_dimension_numbers<[1], [0], [0], [1], [0, 0, 1, 1], [], []>} : vector<64x32xbf16>, vector<32x128xbf16>, vector<64x128xf32> -> vector<64x128xf32>
    %93 = arith.addf %85, %92 : vector<64x128xf32>
    %c7_i32 = arith.constant 7 : i32
    %94 = tpu.dynamic_rotate %78 by %c7_i32 dim 0 : vector<64x32xf32>, i32 -> vector<64x32xf32>
    %95 = vector.broadcast %3 : vector<64x1xf32> to vector<64x32xf32>
    %96 = arith.mulf %94, %95 : vector<64x32xf32>
    %97 = arith.truncf %96 : vector<64x32xf32> to vector<64x32xbf16>
    %c2_34 = arith.constant 2 : index
    %c0_35 = arith.constant 0 : index
    %c0_36 = arith.constant 0 : index
    %98 = vector.load %arg5[%c2_34, %c0_35, %c0_36] : memref<9x32x128xbf16, #tpu.memory_space<vmem>>, vector<1x32x128xbf16>
    %99 = vector.shape_cast %98 : vector<1x32x128xbf16> to vector<32x128xbf16>
    %cst_37 = arith.constant dense<0.000000e+00> : vector<64x128xf32>
    %100 = tpu.matmul %97, %99, %cst_37 {dimension_numbers = #tpu.dot_dimension_numbers<[1], [0], [0], [1], [0, 0, 1, 1], [], []>} : vector<64x32xbf16>, vector<32x128xbf16>, vector<64x128xf32> -> vector<64x128xf32>
    %101 = arith.addf %93, %100 : vector<64x128xf32>
    %c1_i32 = arith.constant 1 : i32
    %102 = tpu.dynamic_rotate %78 by %c1_i32 dim 0 : vector<64x32xf32>, i32 -> vector<64x32xf32>
    %103 = vector.broadcast %4 : vector<64x1xf32> to vector<64x32xf32>
    %104 = arith.mulf %102, %103 : vector<64x32xf32>
    %105 = arith.truncf %104 : vector<64x32xf32> to vector<64x32xbf16>
    %c3_38 = arith.constant 3 : index
    %c0_39 = arith.constant 0 : index
    %c0_40 = arith.constant 0 : index
    %106 = vector.load %arg5[%c3_38, %c0_39, %c0_40] : memref<9x32x128xbf16, #tpu.memory_space<vmem>>, vector<1x32x128xbf16>
    %107 = vector.shape_cast %106 : vector<1x32x128xbf16> to vector<32x128xbf16>
    %cst_41 = arith.constant dense<0.000000e+00> : vector<64x128xf32>
    %108 = tpu.matmul %105, %107, %cst_41 {dimension_numbers = #tpu.dot_dimension_numbers<[1], [0], [0], [1], [0, 0, 1, 1], [], []>} : vector<64x32xbf16>, vector<32x128xbf16>, vector<64x128xf32> -> vector<64x128xf32>
    %109 = arith.addf %101, %108 : vector<64x128xf32>
    %110 = arith.truncf %78 : vector<64x32xf32> to vector<64x32xbf16>
    %c4 = arith.constant 4 : index
    %c0_42 = arith.constant 0 : index
    %c0_43 = arith.constant 0 : index
    %111 = vector.load %arg5[%c4, %c0_42, %c0_43] : memref<9x32x128xbf16, #tpu.memory_space<vmem>>, vector<1x32x128xbf16>
    %112 = vector.shape_cast %111 : vector<1x32x128xbf16> to vector<32x128xbf16>
    %cst_44 = arith.constant dense<0.000000e+00> : vector<64x128xf32>
    %113 = tpu.matmul %110, %112, %cst_44 {dimension_numbers = #tpu.dot_dimension_numbers<[1], [0], [0], [1], [0, 0, 1, 1], [], []>} : vector<64x32xbf16>, vector<32x128xbf16>, vector<64x128xf32> -> vector<64x128xf32>
    %114 = arith.addf %109, %113 : vector<64x128xf32>
    %c63_i32_45 = arith.constant 63 : i32
    %115 = tpu.dynamic_rotate %78 by %c63_i32_45 dim 0 : vector<64x32xf32>, i32 -> vector<64x32xf32>
    %116 = vector.broadcast %5 : vector<64x1xf32> to vector<64x32xf32>
    %117 = arith.mulf %115, %116 : vector<64x32xf32>
    %118 = arith.truncf %117 : vector<64x32xf32> to vector<64x32xbf16>
    %c5 = arith.constant 5 : index
    %c0_46 = arith.constant 0 : index
    %c0_47 = arith.constant 0 : index
    %119 = vector.load %arg5[%c5, %c0_46, %c0_47] : memref<9x32x128xbf16, #tpu.memory_space<vmem>>, vector<1x32x128xbf16>
    %120 = vector.shape_cast %119 : vector<1x32x128xbf16> to vector<32x128xbf16>
    %cst_48 = arith.constant dense<0.000000e+00> : vector<64x128xf32>
    %121 = tpu.matmul %118, %120, %cst_48 {dimension_numbers = #tpu.dot_dimension_numbers<[1], [0], [0], [1], [0, 0, 1, 1], [], []>} : vector<64x32xbf16>, vector<32x128xbf16>, vector<64x128xf32> -> vector<64x128xf32>
    %122 = arith.addf %114, %121 : vector<64x128xf32>
    %c57_i32 = arith.constant 57 : i32
    %123 = tpu.dynamic_rotate %78 by %c57_i32 dim 0 : vector<64x32xf32>, i32 -> vector<64x32xf32>
    %124 = vector.broadcast %6 : vector<64x1xf32> to vector<64x32xf32>
    %125 = arith.mulf %123, %124 : vector<64x32xf32>
    %126 = arith.truncf %125 : vector<64x32xf32> to vector<64x32xbf16>
    %c6 = arith.constant 6 : index
    %c0_49 = arith.constant 0 : index
    %c0_50 = arith.constant 0 : index
    %127 = vector.load %arg5[%c6, %c0_49, %c0_50] : memref<9x32x128xbf16, #tpu.memory_space<vmem>>, vector<1x32x128xbf16>
    %128 = vector.shape_cast %127 : vector<1x32x128xbf16> to vector<32x128xbf16>
    %cst_51 = arith.constant dense<0.000000e+00> : vector<64x128xf32>
    %129 = tpu.matmul %126, %128, %cst_51 {dimension_numbers = #tpu.dot_dimension_numbers<[1], [0], [0], [1], [0, 0, 1, 1], [], []>} : vector<64x32xbf16>, vector<32x128xbf16>, vector<64x128xf32> -> vector<64x128xf32>
    %130 = arith.addf %122, %129 : vector<64x128xf32>
    %c56_i32_52 = arith.constant 56 : i32
    %131 = tpu.dynamic_rotate %78 by %c56_i32_52 dim 0 : vector<64x32xf32>, i32 -> vector<64x32xf32>
    %132 = vector.broadcast %7 : vector<64x1xf32> to vector<64x32xf32>
    %133 = arith.mulf %131, %132 : vector<64x32xf32>
    %134 = arith.truncf %133 : vector<64x32xf32> to vector<64x32xbf16>
    %c7 = arith.constant 7 : index
    %c0_53 = arith.constant 0 : index
    %c0_54 = arith.constant 0 : index
    %135 = vector.load %arg5[%c7, %c0_53, %c0_54] : memref<9x32x128xbf16, #tpu.memory_space<vmem>>, vector<1x32x128xbf16>
    %136 = vector.shape_cast %135 : vector<1x32x128xbf16> to vector<32x128xbf16>
    %cst_55 = arith.constant dense<0.000000e+00> : vector<64x128xf32>
    %137 = tpu.matmul %134, %136, %cst_55 {dimension_numbers = #tpu.dot_dimension_numbers<[1], [0], [0], [1], [0, 0, 1, 1], [], []>} : vector<64x32xbf16>, vector<32x128xbf16>, vector<64x128xf32> -> vector<64x128xf32>
    %138 = arith.addf %130, %137 : vector<64x128xf32>
    %c55_i32_56 = arith.constant 55 : i32
    %139 = tpu.dynamic_rotate %78 by %c55_i32_56 dim 0 : vector<64x32xf32>, i32 -> vector<64x32xf32>
    %140 = vector.broadcast %8 : vector<64x1xf32> to vector<64x32xf32>
    %141 = arith.mulf %139, %140 : vector<64x32xf32>
    %142 = arith.truncf %141 : vector<64x32xf32> to vector<64x32xbf16>
    %c8 = arith.constant 8 : index
    %c0_57 = arith.constant 0 : index
    %c0_58 = arith.constant 0 : index
    %143 = vector.load %arg5[%c8, %c0_57, %c0_58] : memref<9x32x128xbf16, #tpu.memory_space<vmem>>, vector<1x32x128xbf16>
    %144 = vector.shape_cast %143 : vector<1x32x128xbf16> to vector<32x128xbf16>
    %cst_59 = arith.constant dense<0.000000e+00> : vector<64x128xf32>
    %145 = tpu.matmul %142, %144, %cst_59 {dimension_numbers = #tpu.dot_dimension_numbers<[1], [0], [0], [1], [0, 0, 1, 1], [], []>} : vector<64x32xbf16>, vector<32x128xbf16>, vector<64x128xf32> -> vector<64x128xf32>
    %146 = arith.addf %138, %145 : vector<64x128xf32>
    %c9_i32_60 = arith.constant 9 : i32
    %147 = tpu.dynamic_rotate %76 by %c9_i32_60 dim 0 : vector<64x32xf32>, i32 -> vector<64x32xf32>
    %148 = vector.broadcast %1 : vector<64x1xf32> to vector<64x32xf32>
    %149 = arith.mulf %147, %148 : vector<64x32xf32>
    %150 = arith.truncf %149 : vector<64x32xf32> to vector<64x32xbf16>
    %c0_61 = arith.constant 0 : index
    %c0_62 = arith.constant 0 : index
    %c0_63 = arith.constant 0 : index
    %151 = vector.load %arg6[%c0_61, %c0_62, %c0_63] : memref<9x32x128xbf16, #tpu.memory_space<vmem>>, vector<1x32x128xbf16>
    %152 = vector.shape_cast %151 : vector<1x32x128xbf16> to vector<32x128xbf16>
    %cst_64 = arith.constant dense<0.000000e+00> : vector<64x128xf32>
    %153 = tpu.matmul %150, %152, %cst_64 {dimension_numbers = #tpu.dot_dimension_numbers<[1], [0], [0], [1], [0, 0, 1, 1], [], []>} : vector<64x32xbf16>, vector<32x128xbf16>, vector<64x128xf32> -> vector<64x128xf32>
    %154 = arith.addf %146, %153 : vector<64x128xf32>
    %c8_i32_65 = arith.constant 8 : i32
    %155 = tpu.dynamic_rotate %76 by %c8_i32_65 dim 0 : vector<64x32xf32>, i32 -> vector<64x32xf32>
    %156 = vector.broadcast %2 : vector<64x1xf32> to vector<64x32xf32>
    %157 = arith.mulf %155, %156 : vector<64x32xf32>
    %158 = arith.truncf %157 : vector<64x32xf32> to vector<64x32xbf16>
    %c1_66 = arith.constant 1 : index
    %c0_67 = arith.constant 0 : index
    %c0_68 = arith.constant 0 : index
    %159 = vector.load %arg6[%c1_66, %c0_67, %c0_68] : memref<9x32x128xbf16, #tpu.memory_space<vmem>>, vector<1x32x128xbf16>
    %160 = vector.shape_cast %159 : vector<1x32x128xbf16> to vector<32x128xbf16>
    %cst_69 = arith.constant dense<0.000000e+00> : vector<64x128xf32>
    %161 = tpu.matmul %158, %160, %cst_69 {dimension_numbers = #tpu.dot_dimension_numbers<[1], [0], [0], [1], [0, 0, 1, 1], [], []>} : vector<64x32xbf16>, vector<32x128xbf16>, vector<64x128xf32> -> vector<64x128xf32>
    %162 = arith.addf %154, %161 : vector<64x128xf32>
    %c7_i32_70 = arith.constant 7 : i32
    %163 = tpu.dynamic_rotate %76 by %c7_i32_70 dim 0 : vector<64x32xf32>, i32 -> vector<64x32xf32>
    %164 = vector.broadcast %3 : vector<64x1xf32> to vector<64x32xf32>
    %165 = arith.mulf %163, %164 : vector<64x32xf32>
    %166 = arith.truncf %165 : vector<64x32xf32> to vector<64x32xbf16>
    %c2_71 = arith.constant 2 : index
    %c0_72 = arith.constant 0 : index
    %c0_73 = arith.constant 0 : index
    %167 = vector.load %arg6[%c2_71, %c0_72, %c0_73] : memref<9x32x128xbf16, #tpu.memory_space<vmem>>, vector<1x32x128xbf16>
    %168 = vector.shape_cast %167 : vector<1x32x128xbf16> to vector<32x128xbf16>
    %cst_74 = arith.constant dense<0.000000e+00> : vector<64x128xf32>
    %169 = tpu.matmul %166, %168, %cst_74 {dimension_numbers = #tpu.dot_dimension_numbers<[1], [0], [0], [1], [0, 0, 1, 1], [], []>} : vector<64x32xbf16>, vector<32x128xbf16>, vector<64x128xf32> -> vector<64x128xf32>
    %170 = arith.addf %162, %169 : vector<64x128xf32>
    %c1_i32_75 = arith.constant 1 : i32
    %171 = tpu.dynamic_rotate %76 by %c1_i32_75 dim 0 : vector<64x32xf32>, i32 -> vector<64x32xf32>
    %172 = vector.broadcast %4 : vector<64x1xf32> to vector<64x32xf32>
    %173 = arith.mulf %171, %172 : vector<64x32xf32>
    %174 = arith.truncf %173 : vector<64x32xf32> to vector<64x32xbf16>
    %c3_76 = arith.constant 3 : index
    %c0_77 = arith.constant 0 : index
    %c0_78 = arith.constant 0 : index
    %175 = vector.load %arg6[%c3_76, %c0_77, %c0_78] : memref<9x32x128xbf16, #tpu.memory_space<vmem>>, vector<1x32x128xbf16>
    %176 = vector.shape_cast %175 : vector<1x32x128xbf16> to vector<32x128xbf16>
    %cst_79 = arith.constant dense<0.000000e+00> : vector<64x128xf32>
    %177 = tpu.matmul %174, %176, %cst_79 {dimension_numbers = #tpu.dot_dimension_numbers<[1], [0], [0], [1], [0, 0, 1, 1], [], []>} : vector<64x32xbf16>, vector<32x128xbf16>, vector<64x128xf32> -> vector<64x128xf32>
    %178 = arith.addf %170, %177 : vector<64x128xf32>
    %179 = arith.truncf %76 : vector<64x32xf32> to vector<64x32xbf16>
    %c4_80 = arith.constant 4 : index
    %c0_81 = arith.constant 0 : index
    %c0_82 = arith.constant 0 : index
    %180 = vector.load %arg6[%c4_80, %c0_81, %c0_82] : memref<9x32x128xbf16, #tpu.memory_space<vmem>>, vector<1x32x128xbf16>
    %181 = vector.shape_cast %180 : vector<1x32x128xbf16> to vector<32x128xbf16>
    %cst_83 = arith.constant dense<0.000000e+00> : vector<64x128xf32>
    %182 = tpu.matmul %179, %181, %cst_83 {dimension_numbers = #tpu.dot_dimension_numbers<[1], [0], [0], [1], [0, 0, 1, 1], [], []>} : vector<64x32xbf16>, vector<32x128xbf16>, vector<64x128xf32> -> vector<64x128xf32>
    %183 = arith.addf %178, %182 : vector<64x128xf32>
    %c63_i32_84 = arith.constant 63 : i32
    %184 = tpu.dynamic_rotate %76 by %c63_i32_84 dim 0 : vector<64x32xf32>, i32 -> vector<64x32xf32>
    %185 = vector.broadcast %5 : vector<64x1xf32> to vector<64x32xf32>
    %186 = arith.mulf %184, %185 : vector<64x32xf32>
    %187 = arith.truncf %186 : vector<64x32xf32> to vector<64x32xbf16>
    %c5_85 = arith.constant 5 : index
    %c0_86 = arith.constant 0 : index
    %c0_87 = arith.constant 0 : index
    %188 = vector.load %arg6[%c5_85, %c0_86, %c0_87] : memref<9x32x128xbf16, #tpu.memory_space<vmem>>, vector<1x32x128xbf16>
    %189 = vector.shape_cast %188 : vector<1x32x128xbf16> to vector<32x128xbf16>
    %cst_88 = arith.constant dense<0.000000e+00> : vector<64x128xf32>
    %190 = tpu.matmul %187, %189, %cst_88 {dimension_numbers = #tpu.dot_dimension_numbers<[1], [0], [0], [1], [0, 0, 1, 1], [], []>} : vector<64x32xbf16>, vector<32x128xbf16>, vector<64x128xf32> -> vector<64x128xf32>
    %191 = arith.addf %183, %190 : vector<64x128xf32>
    %c57_i32_89 = arith.constant 57 : i32
    %192 = tpu.dynamic_rotate %76 by %c57_i32_89 dim 0 : vector<64x32xf32>, i32 -> vector<64x32xf32>
    %193 = vector.broadcast %6 : vector<64x1xf32> to vector<64x32xf32>
    %194 = arith.mulf %192, %193 : vector<64x32xf32>
    %195 = arith.truncf %194 : vector<64x32xf32> to vector<64x32xbf16>
    %c6_90 = arith.constant 6 : index
    %c0_91 = arith.constant 0 : index
    %c0_92 = arith.constant 0 : index
    %196 = vector.load %arg6[%c6_90, %c0_91, %c0_92] : memref<9x32x128xbf16, #tpu.memory_space<vmem>>, vector<1x32x128xbf16>
    %197 = vector.shape_cast %196 : vector<1x32x128xbf16> to vector<32x128xbf16>
    %cst_93 = arith.constant dense<0.000000e+00> : vector<64x128xf32>
    %198 = tpu.matmul %195, %197, %cst_93 {dimension_numbers = #tpu.dot_dimension_numbers<[1], [0], [0], [1], [0, 0, 1, 1], [], []>} : vector<64x32xbf16>, vector<32x128xbf16>, vector<64x128xf32> -> vector<64x128xf32>
    %199 = arith.addf %191, %198 : vector<64x128xf32>
    %c56_i32_94 = arith.constant 56 : i32
    %200 = tpu.dynamic_rotate %76 by %c56_i32_94 dim 0 : vector<64x32xf32>, i32 -> vector<64x32xf32>
    %201 = vector.broadcast %7 : vector<64x1xf32> to vector<64x32xf32>
    %202 = arith.mulf %200, %201 : vector<64x32xf32>
    %203 = arith.truncf %202 : vector<64x32xf32> to vector<64x32xbf16>
    %c7_95 = arith.constant 7 : index
    %c0_96 = arith.constant 0 : index
    %c0_97 = arith.constant 0 : index
    %204 = vector.load %arg6[%c7_95, %c0_96, %c0_97] : memref<9x32x128xbf16, #tpu.memory_space<vmem>>, vector<1x32x128xbf16>
    %205 = vector.shape_cast %204 : vector<1x32x128xbf16> to vector<32x128xbf16>
    %cst_98 = arith.constant dense<0.000000e+00> : vector<64x128xf32>
    %206 = tpu.matmul %203, %205, %cst_98 {dimension_numbers = #tpu.dot_dimension_numbers<[1], [0], [0], [1], [0, 0, 1, 1], [], []>} : vector<64x32xbf16>, vector<32x128xbf16>, vector<64x128xf32> -> vector<64x128xf32>
    %207 = arith.addf %199, %206 : vector<64x128xf32>
    %c55_i32_99 = arith.constant 55 : i32
    %208 = tpu.dynamic_rotate %76 by %c55_i32_99 dim 0 : vector<64x32xf32>, i32 -> vector<64x32xf32>
    %209 = vector.broadcast %8 : vector<64x1xf32> to vector<64x32xf32>
    %210 = arith.mulf %208, %209 : vector<64x32xf32>
    %211 = arith.truncf %210 : vector<64x32xf32> to vector<64x32xbf16>
    %c8_100 = arith.constant 8 : index
    %c0_101 = arith.constant 0 : index
    %c0_102 = arith.constant 0 : index
    %212 = vector.load %arg6[%c8_100, %c0_101, %c0_102] : memref<9x32x128xbf16, #tpu.memory_space<vmem>>, vector<1x32x128xbf16>
    %213 = vector.shape_cast %212 : vector<1x32x128xbf16> to vector<32x128xbf16>
    %cst_103 = arith.constant dense<0.000000e+00> : vector<64x128xf32>
    %214 = tpu.matmul %211, %213, %cst_103 {dimension_numbers = #tpu.dot_dimension_numbers<[1], [0], [0], [1], [0, 0, 1, 1], [], []>} : vector<64x32xbf16>, vector<32x128xbf16>, vector<64x128xf32> -> vector<64x128xf32>
    %215 = arith.addf %207, %214 : vector<64x128xf32>
    %c1_104 = arith.constant 1 : index
    %216 = memref.load %arg11[%c1_104] : memref<4xf32, #tpu.memory_space<smem>>
    %cst_105 = arith.constant dense<0.000000e+00> : vector<128xf32>
    %217 = vector.multi_reduction <add>, %215, %cst_105 [0] : vector<64x128xf32> to vector<128xf32>
    %218 = vector.shape_cast %217 : vector<128xf32> to vector<1x128xf32>
    %219 = vector.extract_strided_slice %218 {offsets = [0, 0], sizes = [1, 32], strides = [1, 1]} : vector<1x128xf32> to vector<1x32xf32>
    %220 = vector.extract_strided_slice %218 {offsets = [0, 32], sizes = [1, 32], strides = [1, 1]} : vector<1x128xf32> to vector<1x32xf32>
    %221 = arith.addf %219, %220 : vector<1x32xf32>
    %222 = vector.extract_strided_slice %218 {offsets = [0, 64], sizes = [1, 32], strides = [1, 1]} : vector<1x128xf32> to vector<1x32xf32>
    %223 = arith.addf %221, %222 : vector<1x32xf32>
    %224 = vector.extract_strided_slice %218 {offsets = [0, 96], sizes = [1, 32], strides = [1, 1]} : vector<1x128xf32> to vector<1x32xf32>
    %225 = arith.addf %223, %224 : vector<1x32xf32>
    %cst_106 = arith.constant 3.906250e-03 : f32
    %226 = vector.broadcast %cst_106 : f32 to vector<1x32xf32>
    %227 = arith.mulf %225, %226 : vector<1x32xf32>
    %228 = tpu.concatenate %227, %227, %227, %227 in 1 : vector<1x32xf32>, vector<1x32xf32>, vector<1x32xf32>, vector<1x32xf32> -> vector<1x128xf32>
    %229 = vector.broadcast %228 : vector<1x128xf32> to vector<64x128xf32>
    %230 = arith.subf %215, %229 : vector<64x128xf32>
    %231 = arith.mulf %230, %230 : vector<64x128xf32>
    %cst_107 = arith.constant dense<0.000000e+00> : vector<128xf32>
    %232 = vector.multi_reduction <add>, %231, %cst_107 [0] : vector<64x128xf32> to vector<128xf32>
    %233 = vector.shape_cast %232 : vector<128xf32> to vector<1x128xf32>
    %234 = vector.extract_strided_slice %233 {offsets = [0, 0], sizes = [1, 32], strides = [1, 1]} : vector<1x128xf32> to vector<1x32xf32>
    %235 = vector.extract_strided_slice %233 {offsets = [0, 32], sizes = [1, 32], strides = [1, 1]} : vector<1x128xf32> to vector<1x32xf32>
    %236 = arith.addf %234, %235 : vector<1x32xf32>
    %237 = vector.extract_strided_slice %233 {offsets = [0, 64], sizes = [1, 32], strides = [1, 1]} : vector<1x128xf32> to vector<1x32xf32>
    %238 = arith.addf %236, %237 : vector<1x32xf32>
    %239 = vector.extract_strided_slice %233 {offsets = [0, 96], sizes = [1, 32], strides = [1, 1]} : vector<1x128xf32> to vector<1x32xf32>
    %240 = arith.addf %238, %239 : vector<1x32xf32>
    %cst_108 = arith.constant 3.906250e-03 : f32
    %241 = vector.broadcast %cst_108 : f32 to vector<1x32xf32>
    %242 = arith.mulf %240, %241 : vector<1x32xf32>
    %cst_109 = arith.constant 9.99999974E-6 : f32
    %243 = vector.broadcast %cst_109 : f32 to vector<1x32xf32>
    %244 = arith.addf %242, %243 : vector<1x32xf32>
    %245 = math.rsqrt %244 : vector<1x32xf32>
    %246 = tpu.concatenate %245, %245, %245, %245 in 1 : vector<1x32xf32>, vector<1x32xf32>, vector<1x32xf32>, vector<1x32xf32> -> vector<1x128xf32>
    %247 = vector.broadcast %246 : vector<1x128xf32> to vector<64x128xf32>
    %248 = arith.mulf %230, %247 : vector<64x128xf32>
    %cst_110 = arith.constant 0.000000e+00 : f32
    %249 = vector.broadcast %cst_110 : f32 to vector<64x128xf32>
    %250 = arith.cmpf oge, %248, %249 : vector<64x128xf32>
    %251 = vector.broadcast %216 : f32 to vector<64x128xf32>
    %252 = arith.mulf %251, %248 : vector<64x128xf32>
    %253 = arith.select %250, %248, %252 : vector<64x128xi1>, vector<64x128xf32>
    %c9_i32_111 = arith.constant 9 : i32
    %254 = tpu.dynamic_rotate %253 by %c9_i32_111 dim 0 : vector<64x128xf32>, i32 -> vector<64x128xf32>
    %255 = vector.broadcast %1 : vector<64x1xf32> to vector<64x128xf32>
    %256 = arith.mulf %254, %255 : vector<64x128xf32>
    %257 = arith.truncf %256 : vector<64x128xf32> to vector<64x128xbf16>
    %c0_112 = arith.constant 0 : index
    %c0_113 = arith.constant 0 : index
    %c0_114 = arith.constant 0 : index
    %258 = vector.load %arg7[%c0_112, %c0_113, %c0_114] : memref<9x128x128xbf16, #tpu.memory_space<vmem>>, vector<1x128x128xbf16>
    %259 = vector.shape_cast %258 : vector<1x128x128xbf16> to vector<128x128xbf16>
    %cst_115 = arith.constant dense<0.000000e+00> : vector<64x128xf32>
    %260 = tpu.matmul %257, %259, %cst_115 {dimension_numbers = #tpu.dot_dimension_numbers<[1], [0], [0], [1], [0, 0, 1, 1], [], []>} : vector<64x128xbf16>, vector<128x128xbf16>, vector<64x128xf32> -> vector<64x128xf32>
    %c8_i32_116 = arith.constant 8 : i32
    %261 = tpu.dynamic_rotate %253 by %c8_i32_116 dim 0 : vector<64x128xf32>, i32 -> vector<64x128xf32>
    %262 = vector.broadcast %2 : vector<64x1xf32> to vector<64x128xf32>
    %263 = arith.mulf %261, %262 : vector<64x128xf32>
    %264 = arith.truncf %263 : vector<64x128xf32> to vector<64x128xbf16>
    %c1_117 = arith.constant 1 : index
    %c0_118 = arith.constant 0 : index
    %c0_119 = arith.constant 0 : index
    %265 = vector.load %arg7[%c1_117, %c0_118, %c0_119] : memref<9x128x128xbf16, #tpu.memory_space<vmem>>, vector<1x128x128xbf16>
    %266 = vector.shape_cast %265 : vector<1x128x128xbf16> to vector<128x128xbf16>
    %cst_120 = arith.constant dense<0.000000e+00> : vector<64x128xf32>
    %267 = tpu.matmul %264, %266, %cst_120 {dimension_numbers = #tpu.dot_dimension_numbers<[1], [0], [0], [1], [0, 0, 1, 1], [], []>} : vector<64x128xbf16>, vector<128x128xbf16>, vector<64x128xf32> -> vector<64x128xf32>
    %268 = arith.addf %260, %267 : vector<64x128xf32>
    %c7_i32_121 = arith.constant 7 : i32
    %269 = tpu.dynamic_rotate %253 by %c7_i32_121 dim 0 : vector<64x128xf32>, i32 -> vector<64x128xf32>
    %270 = vector.broadcast %3 : vector<64x1xf32> to vector<64x128xf32>
    %271 = arith.mulf %269, %270 : vector<64x128xf32>
    %272 = arith.truncf %271 : vector<64x128xf32> to vector<64x128xbf16>
    %c2_122 = arith.constant 2 : index
    %c0_123 = arith.constant 0 : index
    %c0_124 = arith.constant 0 : index
    %273 = vector.load %arg7[%c2_122, %c0_123, %c0_124] : memref<9x128x128xbf16, #tpu.memory_space<vmem>>, vector<1x128x128xbf16>
    %274 = vector.shape_cast %273 : vector<1x128x128xbf16> to vector<128x128xbf16>
    %cst_125 = arith.constant dense<0.000000e+00> : vector<64x128xf32>
    %275 = tpu.matmul %272, %274, %cst_125 {dimension_numbers = #tpu.dot_dimension_numbers<[1], [0], [0], [1], [0, 0, 1, 1], [], []>} : vector<64x128xbf16>, vector<128x128xbf16>, vector<64x128xf32> -> vector<64x128xf32>
    %276 = arith.addf %268, %275 : vector<64x128xf32>
    %c1_i32_126 = arith.constant 1 : i32
    %277 = tpu.dynamic_rotate %253 by %c1_i32_126 dim 0 : vector<64x128xf32>, i32 -> vector<64x128xf32>
    %278 = vector.broadcast %4 : vector<64x1xf32> to vector<64x128xf32>
    %279 = arith.mulf %277, %278 : vector<64x128xf32>
    %280 = arith.truncf %279 : vector<64x128xf32> to vector<64x128xbf16>
    %c3_127 = arith.constant 3 : index
    %c0_128 = arith.constant 0 : index
    %c0_129 = arith.constant 0 : index
    %281 = vector.load %arg7[%c3_127, %c0_128, %c0_129] : memref<9x128x128xbf16, #tpu.memory_space<vmem>>, vector<1x128x128xbf16>
    %282 = vector.shape_cast %281 : vector<1x128x128xbf16> to vector<128x128xbf16>
    %cst_130 = arith.constant dense<0.000000e+00> : vector<64x128xf32>
    %283 = tpu.matmul %280, %282, %cst_130 {dimension_numbers = #tpu.dot_dimension_numbers<[1], [0], [0], [1], [0, 0, 1, 1], [], []>} : vector<64x128xbf16>, vector<128x128xbf16>, vector<64x128xf32> -> vector<64x128xf32>
    %284 = arith.addf %276, %283 : vector<64x128xf32>
    %285 = arith.truncf %253 : vector<64x128xf32> to vector<64x128xbf16>
    %c4_131 = arith.constant 4 : index
    %c0_132 = arith.constant 0 : index
    %c0_133 = arith.constant 0 : index
    %286 = vector.load %arg7[%c4_131, %c0_132, %c0_133] : memref<9x128x128xbf16, #tpu.memory_space<vmem>>, vector<1x128x128xbf16>
    %287 = vector.shape_cast %286 : vector<1x128x128xbf16> to vector<128x128xbf16>
    %cst_134 = arith.constant dense<0.000000e+00> : vector<64x128xf32>
    %288 = tpu.matmul %285, %287, %cst_134 {dimension_numbers = #tpu.dot_dimension_numbers<[1], [0], [0], [1], [0, 0, 1, 1], [], []>} : vector<64x128xbf16>, vector<128x128xbf16>, vector<64x128xf32> -> vector<64x128xf32>
    %289 = arith.addf %284, %288 : vector<64x128xf32>
    %c63_i32_135 = arith.constant 63 : i32
    %290 = tpu.dynamic_rotate %253 by %c63_i32_135 dim 0 : vector<64x128xf32>, i32 -> vector<64x128xf32>
    %291 = vector.broadcast %5 : vector<64x1xf32> to vector<64x128xf32>
    %292 = arith.mulf %290, %291 : vector<64x128xf32>
    %293 = arith.truncf %292 : vector<64x128xf32> to vector<64x128xbf16>
    %c5_136 = arith.constant 5 : index
    %c0_137 = arith.constant 0 : index
    %c0_138 = arith.constant 0 : index
    %294 = vector.load %arg7[%c5_136, %c0_137, %c0_138] : memref<9x128x128xbf16, #tpu.memory_space<vmem>>, vector<1x128x128xbf16>
    %295 = vector.shape_cast %294 : vector<1x128x128xbf16> to vector<128x128xbf16>
    %cst_139 = arith.constant dense<0.000000e+00> : vector<64x128xf32>
    %296 = tpu.matmul %293, %295, %cst_139 {dimension_numbers = #tpu.dot_dimension_numbers<[1], [0], [0], [1], [0, 0, 1, 1], [], []>} : vector<64x128xbf16>, vector<128x128xbf16>, vector<64x128xf32> -> vector<64x128xf32>
    %297 = arith.addf %289, %296 : vector<64x128xf32>
    %c57_i32_140 = arith.constant 57 : i32
    %298 = tpu.dynamic_rotate %253 by %c57_i32_140 dim 0 : vector<64x128xf32>, i32 -> vector<64x128xf32>
    %299 = vector.broadcast %6 : vector<64x1xf32> to vector<64x128xf32>
    %300 = arith.mulf %298, %299 : vector<64x128xf32>
    %301 = arith.truncf %300 : vector<64x128xf32> to vector<64x128xbf16>
    %c6_141 = arith.constant 6 : index
    %c0_142 = arith.constant 0 : index
    %c0_143 = arith.constant 0 : index
    %302 = vector.load %arg7[%c6_141, %c0_142, %c0_143] : memref<9x128x128xbf16, #tpu.memory_space<vmem>>, vector<1x128x128xbf16>
    %303 = vector.shape_cast %302 : vector<1x128x128xbf16> to vector<128x128xbf16>
    %cst_144 = arith.constant dense<0.000000e+00> : vector<64x128xf32>
    %304 = tpu.matmul %301, %303, %cst_144 {dimension_numbers = #tpu.dot_dimension_numbers<[1], [0], [0], [1], [0, 0, 1, 1], [], []>} : vector<64x128xbf16>, vector<128x128xbf16>, vector<64x128xf32> -> vector<64x128xf32>
    %305 = arith.addf %297, %304 : vector<64x128xf32>
    %c56_i32_145 = arith.constant 56 : i32
    %306 = tpu.dynamic_rotate %253 by %c56_i32_145 dim 0 : vector<64x128xf32>, i32 -> vector<64x128xf32>
    %307 = vector.broadcast %7 : vector<64x1xf32> to vector<64x128xf32>
    %308 = arith.mulf %306, %307 : vector<64x128xf32>
    %309 = arith.truncf %308 : vector<64x128xf32> to vector<64x128xbf16>
    %c7_146 = arith.constant 7 : index
    %c0_147 = arith.constant 0 : index
    %c0_148 = arith.constant 0 : index
    %310 = vector.load %arg7[%c7_146, %c0_147, %c0_148] : memref<9x128x128xbf16, #tpu.memory_space<vmem>>, vector<1x128x128xbf16>
    %311 = vector.shape_cast %310 : vector<1x128x128xbf16> to vector<128x128xbf16>
    %cst_149 = arith.constant dense<0.000000e+00> : vector<64x128xf32>
    %312 = tpu.matmul %309, %311, %cst_149 {dimension_numbers = #tpu.dot_dimension_numbers<[1], [0], [0], [1], [0, 0, 1, 1], [], []>} : vector<64x128xbf16>, vector<128x128xbf16>, vector<64x128xf32> -> vector<64x128xf32>
    %313 = arith.addf %305, %312 : vector<64x128xf32>
    %c55_i32_150 = arith.constant 55 : i32
    %314 = tpu.dynamic_rotate %253 by %c55_i32_150 dim 0 : vector<64x128xf32>, i32 -> vector<64x128xf32>
    %315 = vector.broadcast %8 : vector<64x1xf32> to vector<64x128xf32>
    %316 = arith.mulf %314, %315 : vector<64x128xf32>
    %317 = arith.truncf %316 : vector<64x128xf32> to vector<64x128xbf16>
    %c8_151 = arith.constant 8 : index
    %c0_152 = arith.constant 0 : index
    %c0_153 = arith.constant 0 : index
    %318 = vector.load %arg7[%c8_151, %c0_152, %c0_153] : memref<9x128x128xbf16, #tpu.memory_space<vmem>>, vector<1x128x128xbf16>
    %319 = vector.shape_cast %318 : vector<1x128x128xbf16> to vector<128x128xbf16>
    %cst_154 = arith.constant dense<0.000000e+00> : vector<64x128xf32>
    %320 = tpu.matmul %317, %319, %cst_154 {dimension_numbers = #tpu.dot_dimension_numbers<[1], [0], [0], [1], [0, 0, 1, 1], [], []>} : vector<64x128xbf16>, vector<128x128xbf16>, vector<64x128xf32> -> vector<64x128xf32>
    %321 = arith.addf %313, %320 : vector<64x128xf32>
    %c2_155 = arith.constant 2 : index
    %322 = memref.load %arg11[%c2_155] : memref<4xf32, #tpu.memory_space<smem>>
    %cst_156 = arith.constant dense<0.000000e+00> : vector<128xf32>
    %323 = vector.multi_reduction <add>, %321, %cst_156 [0] : vector<64x128xf32> to vector<128xf32>
    %324 = vector.shape_cast %323 : vector<128xf32> to vector<1x128xf32>
    %325 = vector.extract_strided_slice %324 {offsets = [0, 0], sizes = [1, 32], strides = [1, 1]} : vector<1x128xf32> to vector<1x32xf32>
    %326 = vector.extract_strided_slice %324 {offsets = [0, 32], sizes = [1, 32], strides = [1, 1]} : vector<1x128xf32> to vector<1x32xf32>
    %327 = arith.addf %325, %326 : vector<1x32xf32>
    %328 = vector.extract_strided_slice %324 {offsets = [0, 64], sizes = [1, 32], strides = [1, 1]} : vector<1x128xf32> to vector<1x32xf32>
    %329 = arith.addf %327, %328 : vector<1x32xf32>
    %330 = vector.extract_strided_slice %324 {offsets = [0, 96], sizes = [1, 32], strides = [1, 1]} : vector<1x128xf32> to vector<1x32xf32>
    %331 = arith.addf %329, %330 : vector<1x32xf32>
    %cst_157 = arith.constant 3.906250e-03 : f32
    %332 = vector.broadcast %cst_157 : f32 to vector<1x32xf32>
    %333 = arith.mulf %331, %332 : vector<1x32xf32>
    %334 = tpu.concatenate %333, %333, %333, %333 in 1 : vector<1x32xf32>, vector<1x32xf32>, vector<1x32xf32>, vector<1x32xf32> -> vector<1x128xf32>
    %335 = vector.broadcast %334 : vector<1x128xf32> to vector<64x128xf32>
    %336 = arith.subf %321, %335 : vector<64x128xf32>
    %337 = arith.mulf %336, %336 : vector<64x128xf32>
    %cst_158 = arith.constant dense<0.000000e+00> : vector<128xf32>
    %338 = vector.multi_reduction <add>, %337, %cst_158 [0] : vector<64x128xf32> to vector<128xf32>
    %339 = vector.shape_cast %338 : vector<128xf32> to vector<1x128xf32>
    %340 = vector.extract_strided_slice %339 {offsets = [0, 0], sizes = [1, 32], strides = [1, 1]} : vector<1x128xf32> to vector<1x32xf32>
    %341 = vector.extract_strided_slice %339 {offsets = [0, 32], sizes = [1, 32], strides = [1, 1]} : vector<1x128xf32> to vector<1x32xf32>
    %342 = arith.addf %340, %341 : vector<1x32xf32>
    %343 = vector.extract_strided_slice %339 {offsets = [0, 64], sizes = [1, 32], strides = [1, 1]} : vector<1x128xf32> to vector<1x32xf32>
    %344 = arith.addf %342, %343 : vector<1x32xf32>
    %345 = vector.extract_strided_slice %339 {offsets = [0, 96], sizes = [1, 32], strides = [1, 1]} : vector<1x128xf32> to vector<1x32xf32>
    %346 = arith.addf %344, %345 : vector<1x32xf32>
    %cst_159 = arith.constant 3.906250e-03 : f32
    %347 = vector.broadcast %cst_159 : f32 to vector<1x32xf32>
    %348 = arith.mulf %346, %347 : vector<1x32xf32>
    %cst_160 = arith.constant 9.99999974E-6 : f32
    %349 = vector.broadcast %cst_160 : f32 to vector<1x32xf32>
    %350 = arith.addf %348, %349 : vector<1x32xf32>
    %351 = math.rsqrt %350 : vector<1x32xf32>
    %352 = tpu.concatenate %351, %351, %351, %351 in 1 : vector<1x32xf32>, vector<1x32xf32>, vector<1x32xf32>, vector<1x32xf32> -> vector<1x128xf32>
    %353 = vector.broadcast %352 : vector<1x128xf32> to vector<64x128xf32>
    %354 = arith.mulf %336, %353 : vector<64x128xf32>
    %cst_161 = arith.constant 0.000000e+00 : f32
    %355 = vector.broadcast %cst_161 : f32 to vector<64x128xf32>
    %356 = arith.cmpf oge, %354, %355 : vector<64x128xf32>
    %357 = vector.broadcast %322 : f32 to vector<64x128xf32>
    %358 = arith.mulf %357, %354 : vector<64x128xf32>
    %359 = arith.select %356, %354, %358 : vector<64x128xi1>, vector<64x128xf32>
    %c9_i32_162 = arith.constant 9 : i32
    %360 = tpu.dynamic_rotate %359 by %c9_i32_162 dim 0 : vector<64x128xf32>, i32 -> vector<64x128xf32>
    %361 = vector.broadcast %1 : vector<64x1xf32> to vector<64x128xf32>
    %362 = arith.mulf %360, %361 : vector<64x128xf32>
    %363 = arith.truncf %362 : vector<64x128xf32> to vector<64x128xbf16>
    %c0_163 = arith.constant 0 : index
    %c0_164 = arith.constant 0 : index
    %c0_165 = arith.constant 0 : index
    %364 = vector.load %arg8[%c0_163, %c0_164, %c0_165] : memref<9x128x128xbf16, #tpu.memory_space<vmem>>, vector<1x128x128xbf16>
    %365 = vector.shape_cast %364 : vector<1x128x128xbf16> to vector<128x128xbf16>
    %cst_166 = arith.constant dense<0.000000e+00> : vector<64x128xf32>
    %366 = tpu.matmul %363, %365, %cst_166 {dimension_numbers = #tpu.dot_dimension_numbers<[1], [0], [0], [1], [0, 0, 1, 1], [], []>} : vector<64x128xbf16>, vector<128x128xbf16>, vector<64x128xf32> -> vector<64x128xf32>
    %c8_i32_167 = arith.constant 8 : i32
    %367 = tpu.dynamic_rotate %359 by %c8_i32_167 dim 0 : vector<64x128xf32>, i32 -> vector<64x128xf32>
    %368 = vector.broadcast %2 : vector<64x1xf32> to vector<64x128xf32>
    %369 = arith.mulf %367, %368 : vector<64x128xf32>
    %370 = arith.truncf %369 : vector<64x128xf32> to vector<64x128xbf16>
    %c1_168 = arith.constant 1 : index
    %c0_169 = arith.constant 0 : index
    %c0_170 = arith.constant 0 : index
    %371 = vector.load %arg8[%c1_168, %c0_169, %c0_170] : memref<9x128x128xbf16, #tpu.memory_space<vmem>>, vector<1x128x128xbf16>
    %372 = vector.shape_cast %371 : vector<1x128x128xbf16> to vector<128x128xbf16>
    %cst_171 = arith.constant dense<0.000000e+00> : vector<64x128xf32>
    %373 = tpu.matmul %370, %372, %cst_171 {dimension_numbers = #tpu.dot_dimension_numbers<[1], [0], [0], [1], [0, 0, 1, 1], [], []>} : vector<64x128xbf16>, vector<128x128xbf16>, vector<64x128xf32> -> vector<64x128xf32>
    %374 = arith.addf %366, %373 : vector<64x128xf32>
    %c7_i32_172 = arith.constant 7 : i32
    %375 = tpu.dynamic_rotate %359 by %c7_i32_172 dim 0 : vector<64x128xf32>, i32 -> vector<64x128xf32>
    %376 = vector.broadcast %3 : vector<64x1xf32> to vector<64x128xf32>
    %377 = arith.mulf %375, %376 : vector<64x128xf32>
    %378 = arith.truncf %377 : vector<64x128xf32> to vector<64x128xbf16>
    %c2_173 = arith.constant 2 : index
    %c0_174 = arith.constant 0 : index
    %c0_175 = arith.constant 0 : index
    %379 = vector.load %arg8[%c2_173, %c0_174, %c0_175] : memref<9x128x128xbf16, #tpu.memory_space<vmem>>, vector<1x128x128xbf16>
    %380 = vector.shape_cast %379 : vector<1x128x128xbf16> to vector<128x128xbf16>
    %cst_176 = arith.constant dense<0.000000e+00> : vector<64x128xf32>
    %381 = tpu.matmul %378, %380, %cst_176 {dimension_numbers = #tpu.dot_dimension_numbers<[1], [0], [0], [1], [0, 0, 1, 1], [], []>} : vector<64x128xbf16>, vector<128x128xbf16>, vector<64x128xf32> -> vector<64x128xf32>
    %382 = arith.addf %374, %381 : vector<64x128xf32>
    %c1_i32_177 = arith.constant 1 : i32
    %383 = tpu.dynamic_rotate %359 by %c1_i32_177 dim 0 : vector<64x128xf32>, i32 -> vector<64x128xf32>
    %384 = vector.broadcast %4 : vector<64x1xf32> to vector<64x128xf32>
    %385 = arith.mulf %383, %384 : vector<64x128xf32>
    %386 = arith.truncf %385 : vector<64x128xf32> to vector<64x128xbf16>
    %c3_178 = arith.constant 3 : index
    %c0_179 = arith.constant 0 : index
    %c0_180 = arith.constant 0 : index
    %387 = vector.load %arg8[%c3_178, %c0_179, %c0_180] : memref<9x128x128xbf16, #tpu.memory_space<vmem>>, vector<1x128x128xbf16>
    %388 = vector.shape_cast %387 : vector<1x128x128xbf16> to vector<128x128xbf16>
    %cst_181 = arith.constant dense<0.000000e+00> : vector<64x128xf32>
    %389 = tpu.matmul %386, %388, %cst_181 {dimension_numbers = #tpu.dot_dimension_numbers<[1], [0], [0], [1], [0, 0, 1, 1], [], []>} : vector<64x128xbf16>, vector<128x128xbf16>, vector<64x128xf32> -> vector<64x128xf32>
    %390 = arith.addf %382, %389 : vector<64x128xf32>
    %391 = arith.truncf %359 : vector<64x128xf32> to vector<64x128xbf16>
    %c4_182 = arith.constant 4 : index
    %c0_183 = arith.constant 0 : index
    %c0_184 = arith.constant 0 : index
    %392 = vector.load %arg8[%c4_182, %c0_183, %c0_184] : memref<9x128x128xbf16, #tpu.memory_space<vmem>>, vector<1x128x128xbf16>
    %393 = vector.shape_cast %392 : vector<1x128x128xbf16> to vector<128x128xbf16>
    %cst_185 = arith.constant dense<0.000000e+00> : vector<64x128xf32>
    %394 = tpu.matmul %391, %393, %cst_185 {dimension_numbers = #tpu.dot_dimension_numbers<[1], [0], [0], [1], [0, 0, 1, 1], [], []>} : vector<64x128xbf16>, vector<128x128xbf16>, vector<64x128xf32> -> vector<64x128xf32>
    %395 = arith.addf %390, %394 : vector<64x128xf32>
    %c63_i32_186 = arith.constant 63 : i32
    %396 = tpu.dynamic_rotate %359 by %c63_i32_186 dim 0 : vector<64x128xf32>, i32 -> vector<64x128xf32>
    %397 = vector.broadcast %5 : vector<64x1xf32> to vector<64x128xf32>
    %398 = arith.mulf %396, %397 : vector<64x128xf32>
    %399 = arith.truncf %398 : vector<64x128xf32> to vector<64x128xbf16>
    %c5_187 = arith.constant 5 : index
    %c0_188 = arith.constant 0 : index
    %c0_189 = arith.constant 0 : index
    %400 = vector.load %arg8[%c5_187, %c0_188, %c0_189] : memref<9x128x128xbf16, #tpu.memory_space<vmem>>, vector<1x128x128xbf16>
    %401 = vector.shape_cast %400 : vector<1x128x128xbf16> to vector<128x128xbf16>
    %cst_190 = arith.constant dense<0.000000e+00> : vector<64x128xf32>
    %402 = tpu.matmul %399, %401, %cst_190 {dimension_numbers = #tpu.dot_dimension_numbers<[1], [0], [0], [1], [0, 0, 1, 1], [], []>} : vector<64x128xbf16>, vector<128x128xbf16>, vector<64x128xf32> -> vector<64x128xf32>
    %403 = arith.addf %395, %402 : vector<64x128xf32>
    %c57_i32_191 = arith.constant 57 : i32
    %404 = tpu.dynamic_rotate %359 by %c57_i32_191 dim 0 : vector<64x128xf32>, i32 -> vector<64x128xf32>
    %405 = vector.broadcast %6 : vector<64x1xf32> to vector<64x128xf32>
    %406 = arith.mulf %404, %405 : vector<64x128xf32>
    %407 = arith.truncf %406 : vector<64x128xf32> to vector<64x128xbf16>
    %c6_192 = arith.constant 6 : index
    %c0_193 = arith.constant 0 : index
    %c0_194 = arith.constant 0 : index
    %408 = vector.load %arg8[%c6_192, %c0_193, %c0_194] : memref<9x128x128xbf16, #tpu.memory_space<vmem>>, vector<1x128x128xbf16>
    %409 = vector.shape_cast %408 : vector<1x128x128xbf16> to vector<128x128xbf16>
    %cst_195 = arith.constant dense<0.000000e+00> : vector<64x128xf32>
    %410 = tpu.matmul %407, %409, %cst_195 {dimension_numbers = #tpu.dot_dimension_numbers<[1], [0], [0], [1], [0, 0, 1, 1], [], []>} : vector<64x128xbf16>, vector<128x128xbf16>, vector<64x128xf32> -> vector<64x128xf32>
    %411 = arith.addf %403, %410 : vector<64x128xf32>
    %c56_i32_196 = arith.constant 56 : i32
    %412 = tpu.dynamic_rotate %359 by %c56_i32_196 dim 0 : vector<64x128xf32>, i32 -> vector<64x128xf32>
    %413 = vector.broadcast %7 : vector<64x1xf32> to vector<64x128xf32>
    %414 = arith.mulf %412, %413 : vector<64x128xf32>
    %415 = arith.truncf %414 : vector<64x128xf32> to vector<64x128xbf16>
    %c7_197 = arith.constant 7 : index
    %c0_198 = arith.constant 0 : index
    %c0_199 = arith.constant 0 : index
    %416 = vector.load %arg8[%c7_197, %c0_198, %c0_199] : memref<9x128x128xbf16, #tpu.memory_space<vmem>>, vector<1x128x128xbf16>
    %417 = vector.shape_cast %416 : vector<1x128x128xbf16> to vector<128x128xbf16>
    %cst_200 = arith.constant dense<0.000000e+00> : vector<64x128xf32>
    %418 = tpu.matmul %415, %417, %cst_200 {dimension_numbers = #tpu.dot_dimension_numbers<[1], [0], [0], [1], [0, 0, 1, 1], [], []>} : vector<64x128xbf16>, vector<128x128xbf16>, vector<64x128xf32> -> vector<64x128xf32>
    %419 = arith.addf %411, %418 : vector<64x128xf32>
    %c55_i32_201 = arith.constant 55 : i32
    %420 = tpu.dynamic_rotate %359 by %c55_i32_201 dim 0 : vector<64x128xf32>, i32 -> vector<64x128xf32>
    %421 = vector.broadcast %8 : vector<64x1xf32> to vector<64x128xf32>
    %422 = arith.mulf %420, %421 : vector<64x128xf32>
    %423 = arith.truncf %422 : vector<64x128xf32> to vector<64x128xbf16>
    %c8_202 = arith.constant 8 : index
    %c0_203 = arith.constant 0 : index
    %c0_204 = arith.constant 0 : index
    %424 = vector.load %arg8[%c8_202, %c0_203, %c0_204] : memref<9x128x128xbf16, #tpu.memory_space<vmem>>, vector<1x128x128xbf16>
    %425 = vector.shape_cast %424 : vector<1x128x128xbf16> to vector<128x128xbf16>
    %cst_205 = arith.constant dense<0.000000e+00> : vector<64x128xf32>
    %426 = tpu.matmul %423, %425, %cst_205 {dimension_numbers = #tpu.dot_dimension_numbers<[1], [0], [0], [1], [0, 0, 1, 1], [], []>} : vector<64x128xbf16>, vector<128x128xbf16>, vector<64x128xf32> -> vector<64x128xf32>
    %427 = arith.addf %419, %426 : vector<64x128xf32>
    %c3_206 = arith.constant 3 : index
    %428 = memref.load %arg11[%c3_206] : memref<4xf32, #tpu.memory_space<smem>>
    %cst_207 = arith.constant dense<0.000000e+00> : vector<128xf32>
    %429 = vector.multi_reduction <add>, %427, %cst_207 [0] : vector<64x128xf32> to vector<128xf32>
    %430 = vector.shape_cast %429 : vector<128xf32> to vector<1x128xf32>
    %431 = vector.extract_strided_slice %430 {offsets = [0, 0], sizes = [1, 32], strides = [1, 1]} : vector<1x128xf32> to vector<1x32xf32>
    %432 = vector.extract_strided_slice %430 {offsets = [0, 32], sizes = [1, 32], strides = [1, 1]} : vector<1x128xf32> to vector<1x32xf32>
    %433 = arith.addf %431, %432 : vector<1x32xf32>
    %434 = vector.extract_strided_slice %430 {offsets = [0, 64], sizes = [1, 32], strides = [1, 1]} : vector<1x128xf32> to vector<1x32xf32>
    %435 = arith.addf %433, %434 : vector<1x32xf32>
    %436 = vector.extract_strided_slice %430 {offsets = [0, 96], sizes = [1, 32], strides = [1, 1]} : vector<1x128xf32> to vector<1x32xf32>
    %437 = arith.addf %435, %436 : vector<1x32xf32>
    %cst_208 = arith.constant 3.906250e-03 : f32
    %438 = vector.broadcast %cst_208 : f32 to vector<1x32xf32>
    %439 = arith.mulf %437, %438 : vector<1x32xf32>
    %440 = tpu.concatenate %439, %439, %439, %439 in 1 : vector<1x32xf32>, vector<1x32xf32>, vector<1x32xf32>, vector<1x32xf32> -> vector<1x128xf32>
    %441 = vector.broadcast %440 : vector<1x128xf32> to vector<64x128xf32>
    %442 = arith.subf %427, %441 : vector<64x128xf32>
    %443 = arith.mulf %442, %442 : vector<64x128xf32>
    %cst_209 = arith.constant dense<0.000000e+00> : vector<128xf32>
    %444 = vector.multi_reduction <add>, %443, %cst_209 [0] : vector<64x128xf32> to vector<128xf32>
    %445 = vector.shape_cast %444 : vector<128xf32> to vector<1x128xf32>
    %446 = vector.extract_strided_slice %445 {offsets = [0, 0], sizes = [1, 32], strides = [1, 1]} : vector<1x128xf32> to vector<1x32xf32>
    %447 = vector.extract_strided_slice %445 {offsets = [0, 32], sizes = [1, 32], strides = [1, 1]} : vector<1x128xf32> to vector<1x32xf32>
    %448 = arith.addf %446, %447 : vector<1x32xf32>
    %449 = vector.extract_strided_slice %445 {offsets = [0, 64], sizes = [1, 32], strides = [1, 1]} : vector<1x128xf32> to vector<1x32xf32>
    %450 = arith.addf %448, %449 : vector<1x32xf32>
    %451 = vector.extract_strided_slice %445 {offsets = [0, 96], sizes = [1, 32], strides = [1, 1]} : vector<1x128xf32> to vector<1x32xf32>
    %452 = arith.addf %450, %451 : vector<1x32xf32>
    %cst_210 = arith.constant 3.906250e-03 : f32
    %453 = vector.broadcast %cst_210 : f32 to vector<1x32xf32>
    %454 = arith.mulf %452, %453 : vector<1x32xf32>
    %cst_211 = arith.constant 9.99999974E-6 : f32
    %455 = vector.broadcast %cst_211 : f32 to vector<1x32xf32>
    %456 = arith.addf %454, %455 : vector<1x32xf32>
    %457 = math.rsqrt %456 : vector<1x32xf32>
    %458 = tpu.concatenate %457, %457, %457, %457 in 1 : vector<1x32xf32>, vector<1x32xf32>, vector<1x32xf32>, vector<1x32xf32> -> vector<1x128xf32>
    %459 = vector.broadcast %458 : vector<1x128xf32> to vector<64x128xf32>
    %460 = arith.mulf %442, %459 : vector<64x128xf32>
    %cst_212 = arith.constant 0.000000e+00 : f32
    %461 = vector.broadcast %cst_212 : f32 to vector<64x128xf32>
    %462 = arith.cmpf oge, %460, %461 : vector<64x128xf32>
    %463 = vector.broadcast %428 : f32 to vector<64x128xf32>
    %464 = arith.mulf %463, %460 : vector<64x128xf32>
    %465 = arith.select %462, %460, %464 : vector<64x128xi1>, vector<64x128xf32>
    %466 = arith.truncf %253 : vector<64x128xf32> to vector<64x128xbf16>
    %c0_213 = arith.constant 0 : index
    %c0_214 = arith.constant 0 : index
    %467 = vector.load %arg9[%c0_213, %c0_214] : memref<128x128xbf16, #tpu.memory_space<vmem>>, vector<128x128xbf16>
    %cst_215 = arith.constant dense<0.000000e+00> : vector<64x128xf32>
    %468 = tpu.matmul %466, %467, %cst_215 {dimension_numbers = #tpu.dot_dimension_numbers<[1], [0], [0], [1], [0, 0, 1, 1], [], []>} : vector<64x128xbf16>, vector<128x128xbf16>, vector<64x128xf32> -> vector<64x128xf32>
    %c0_216 = arith.constant 0 : index
    %c0_217 = arith.constant 0 : index
    %469 = vector.load %arg10[%c0_216, %c0_217] : memref<1x128xf32, #tpu.memory_space<vmem>>, vector<1x128xf32>
    %470 = vector.broadcast %469 : vector<1x128xf32> to vector<64x128xf32>
    %471 = arith.addf %468, %470 : vector<64x128xf32>
    %472 = arith.addf %471, %465 : vector<64x128xf32>
    %c0_218 = arith.constant 0 : index
    %c0_219 = arith.constant 0 : index
    %c0_220 = arith.constant 0 : index
    %473 = vector.load %arg12[%c0_218, %c0_219, %c0_220] : memref<1x64x128xf32, #tpu.memory_space<vmem>>, vector<1x64x128xf32>
    %474 = vector.shape_cast %473 : vector<1x64x128xf32> to vector<64x128xf32>
    %475 = vector.shape_cast %472 : vector<64x128xf32> to vector<1x64x128xf32>
    tpu.vector_store %arg12[%c0_218, %c0_219, %c0_220], %475 {strides = array<i32>} : memref<1x64x128xf32, #tpu.memory_space<vmem>>, vector<1x64x128xf32>,
    return
  }
  func.func @transform_0(%arg0: i32) -> (i32, i32, i32) {
    %c0_i32 = arith.constant 0 : i32
    %c0_i32_0 = arith.constant 0 : i32
    %c0_i32_1 = arith.constant 0 : i32
    return %arg0, %c0_i32, %c0_i32_0 : i32, i32, i32
  }
  func.func @transform_1(%arg0: i32) -> (i32, i32, i32) {
    %c0_i32 = arith.constant 0 : i32
    %c0_i32_0 = arith.constant 0 : i32
    %c0_i32_1 = arith.constant 0 : i32
    return %arg0, %c0_i32, %c0_i32_0 : i32, i32, i32
  }
  func.func @transform_2(%arg0: i32) -> (i32, i32) {
    %c0_i32 = arith.constant 0 : i32
    %c0_i32_0 = arith.constant 0 : i32
    %c0_i32_1 = arith.constant 0 : i32
    return %c0_i32, %c0_i32_0 : i32, i32
  }
  func.func @transform_3(%arg0: i32) -> (i32, i32, i32) {
    %c0_i32 = arith.constant 0 : i32
    %c0_i32_0 = arith.constant 0 : i32
    %c0_i32_1 = arith.constant 0 : i32
    %c0_i32_2 = arith.constant 0 : i32
    return %c0_i32, %c0_i32_0, %c0_i32_1 : i32, i32, i32
  }
  func.func @transform_4(%arg0: i32) -> (i32, i32, i32) {
    %c0_i32 = arith.constant 0 : i32
    %c0_i32_0 = arith.constant 0 : i32
    %c0_i32_1 = arith.constant 0 : i32
    %c0_i32_2 = arith.constant 0 : i32
    return %c0_i32, %c0_i32_0, %c0_i32_1 : i32, i32, i32
  }
  func.func @transform_5(%arg0: i32) -> (i32, i32, i32) {
    %c0_i32 = arith.constant 0 : i32
    %c0_i32_0 = arith.constant 0 : i32
    %c0_i32_1 = arith.constant 0 : i32
    %c0_i32_2 = arith.constant 0 : i32
    return %c0_i32, %c0_i32_0, %c0_i32_1 : i32, i32, i32
  }
  func.func @transform_6(%arg0: i32) -> (i32, i32, i32) {
    %c0_i32 = arith.constant 0 : i32
    %c0_i32_0 = arith.constant 0 : i32
    %c0_i32_1 = arith.constant 0 : i32
    %c0_i32_2 = arith.constant 0 : i32
    return %c0_i32, %c0_i32_0, %c0_i32_1 : i32, i32, i32
  }
  func.func @transform_7(%arg0: i32) -> (i32, i32, i32) {
    %c0_i32 = arith.constant 0 : i32
    %c0_i32_0 = arith.constant 0 : i32
    %c0_i32_1 = arith.constant 0 : i32
    %c0_i32_2 = arith.constant 0 : i32
    return %c0_i32, %c0_i32_0, %c0_i32_1 : i32, i32, i32
  }
  func.func @transform_8(%arg0: i32) -> (i32, i32) {
    %c0_i32 = arith.constant 0 : i32
    %c0_i32_0 = arith.constant 0 : i32
    %c0_i32_1 = arith.constant 0 : i32
    return %c0_i32, %c0_i32_0 : i32, i32
  }
  func.func @transform_9(%arg0: i32) -> (i32, i32) {
    %c0_i32 = arith.constant 0 : i32
    %c0_i32_0 = arith.constant 0 : i32
    %c0_i32_1 = arith.constant 0 : i32
    return %c0_i32, %c0_i32_0 : i32, i32
  }
  func.func @transform_10(%arg0: i32) -> i32 {
    %c0_i32 = arith.constant 0 : i32
    %c0_i32_0 = arith.constant 0 : i32
    return %c0_i32 : i32
  }
  func.func @transform_11(%arg0: i32) -> (i32, i32, i32) {
    %c0_i32 = arith.constant 0 : i32
    %c0_i32_0 = arith.constant 0 : i32
    %c0_i32_1 = arith.constant 0 : i32
    return %arg0, %c0_i32, %c0_i32_0 : i32, i32, i32
  }
}

</mosaic_0001>

<llo_original>
// kernel: _lambda_.1
$region0: #{_lambda_.1}
  #allocation0 [shape = 'u32[]', space=smem, size = 0x4, offset = 0x4, fixed_abs, tag = 'smem constant byte address 0x4 - core index']
  #allocation1 [shape = 'u32[72,128]{1,0:T(1,128)}', space=vmem, size = 0x9000, scoped, tag = 'internal scratch']
  %s0 = inlined_call_operand.vmem [shape: f32[2,64,8], index: 0, kind: input, shape index: {}]
  %s1 = inlined_call_operand.vmem [shape: f32[2,64,32], index: 1, kind: input, shape index: {}]
  %s2 = inlined_call_operand.vmem [shape: f32[64,9], index: 2, kind: input, shape index: {}]
  %s3 = inlined_call_operand.vmem [shape: bf16[4,8,32], index: 3, kind: input, shape index: {}]
  %s4 = inlined_call_operand.vmem [shape: bf16[9,32,128], index: 4, kind: input, shape index: {}]
  %s5 = inlined_call_operand.vmem [shape: bf16[9,32,128], index: 5, kind: input, shape index: {}]
  %s6 = inlined_call_operand.vmem [shape: bf16[9,128,128], index: 6, kind: input, shape index: {}]
  %s7 = inlined_call_operand.vmem [shape: bf16[9,128,128], index: 7, kind: input, shape index: {}]
  %s8 = inlined_call_operand.vmem [shape: bf16[128,128], index: 8, kind: input, shape index: {}]
  %s9 = inlined_call_operand.vmem [shape: f32[1,128], index: 9, kind: input, shape index: {}]
  %s10 = inlined_call_operand.vmem [shape: f32[4], index: 10, kind: input, shape index: {}]
  %s11 = inlined_call_operand.vmem [shape: f32[2,64,128], index: 11, kind: output, shape index: {}]
  %s12 = sld [smem:[#allocation0]]
  $region81: #{_lambda_.1} parent=0
    _
  %s14 = ssub.s32 1, %s12
  %s15 = scalar_select 0, %s14, %s12
  $region1: #{_lambda_.1} parent=0
    #allocation2 [shape = 'u8[512]{0}', space=smem, size = 0x200, scoped, tag = 'input window, operand 10, single buffered']
    #allocation3 [shape = 's32[2]{0}', space=sflag, size = 0x8, scoped, tag = 'scoped memory for _lambda_.1']
    %16 = vsyncpa [#allocation3], 0
    loop: start=0, step=1, limit=4
    $region2: #{_lambda_.1} parent=1 // loop_pre_header
      _
    $region3: #{_lambda_.1} parent=1 // loop_header
      %s18 = sphi 0, %s22
      %p19 = scmp.ge.s32.totalorder %s18, 4
      %s28 = sphi 0, %s30
      %s31 = sphi 0, %s28
      %s32 = sphi 0, %s31
      %s48 = sphi 0, %s32
      %s54 = sphi 0, %s56
      %s57 = sphi 0, %s54
      %s58 = sphi 0, %s57
      %s74 = sphi 0, %s58
      %s78 = sphi 0, %s78
      %s80 = sphi 0, %s78
      %s81 = sphi 0, %s80
      %s95 = sphi 0, %s81
      %s99 = sphi 0, %s99
      %s101 = sphi 0, %s99
      %s102 = sphi 0, %s101
      %s116 = sphi 0, %s102
      %s120 = sphi 0, %s120
      %s122 = sphi 0, %s120
      %s123 = sphi 0, %s122
      %s137 = sphi 0, %s123
      %s141 = sphi 0, %s141
      %s143 = sphi 0, %s141
      %s144 = sphi 0, %s143
      %s158 = sphi 0, %s144
      %s162 = sphi 0, %s162
      %s164 = sphi 0, %s162
      %s165 = sphi 0, %s164
      %s179 = sphi 0, %s165
      %s183 = sphi 0, %s183
      %s185 = sphi 0, %s183
      %s186 = sphi 0, %s185
      %s200 = sphi 0, %s186
      %s204 = sphi 0, %s204
      %s206 = sphi 0, %s204
      %s207 = sphi 0, %s206
      %s221 = sphi 0, %s207
      %s225 = sphi 0, %s225
      %s227 = sphi 0, %s225
      %s228 = sphi 0, %s227
      %s242 = sphi 0, %s228
      %s246 = sphi 0, %s246
      %s248 = sphi 0, %s246
      %s249 = sphi 0, %s248
      %s263 = sphi 0, %s249
      %s269 = sphi 0, %s271
      %s272 = sphi 0, %s269
      %s273 = sphi 0, %s272
      %s289 = sphi 0, %s273
    $region4: #{_lambda_.1} parent=1 // loop_header_branch
      %21 = sbr.rel (%p19) target = $region8
    $region5: #{_lambda_.1} parent=1 // loop_body
      %s23 = ssub.s32 %s18, 1
      %s24 = ssub.s32 %s18, 2
      %s25 = sadd.s32 %s18, 1
      %s26 = ssub.s32 %s18, %s25
      %p27 = scmp.eq.s32.totalorder %s26, 0
      %s29 = sadd.s32 %s28, 1
      %s30 = scalar_select %p27, %s28, %s29
      %p33 = pneg %p27
      %p34 = scmp.eq.s32.totalorder %s18, 1
      %p35 = por %p33, %p34
      %p36 = scmp.ne.s32.totalorder %s28, %s31
      %p37 = scmp.eq.s32.totalorder %s18, 0
      %p38 = por %p36, %p37
      %p39 = scmp.ne.s32.totalorder %s28, %s31
      %p40 = scmp.eq.s32.totalorder %s23, 1
      %p41 = por %p39, %p40
      %p42 = scmp.ne.s32.totalorder %s31, %s32
      %p43 = scmp.eq.s32.totalorder %s23, 0
      %p44 = por %p42, %p43
      %p45 = scmp.ne.s32.totalorder %s31, %s32
      %p46 = scmp.eq.s32.totalorder %s24, 1
      %p47 = por %p45, %p46
      %p49 = scmp.ne.s32.totalorder %s32, %s48
      %p50 = scmp.eq.s32.totalorder %s24, 0
      %p51 = por %p49, %p50
      %s52 = ssub.s32 %s18, %s25
      %p53 = scmp.eq.s32.totalorder %s52, 0
      %s55 = sadd.s32 %s54, 1
      %s56 = scalar_select %p53, %s54, %s55
      %p59 = pneg %p53
      %p60 = scmp.eq.s32.totalorder %s18, 1
      %p61 = por %p59, %p60
      %p62 = scmp.ne.s32.totalorder %s54, %s57
      %p63 = scmp.eq.s32.totalorder %s18, 0
      %p64 = por %p62, %p63
      %p65 = scmp.ne.s32.totalorder %s54, %s57
      %p66 = scmp.eq.s32.totalorder %s23, 1
      %p67 = por %p65, %p66
      %p68 = scmp.ne.s32.totalorder %s57, %s58
      %p69 = scmp.eq.s32.totalorder %s23, 0
      %p70 = por %p68, %p69
      %p71 = scmp.ne.s32.totalorder %s57, %s58
      %p72 = scmp.eq.s32.totalorder %s24, 1
      %p73 = por %p71, %p72
      %p75 = scmp.ne.s32.totalorder %s58, %s74
      %p76 = scmp.eq.s32.totalorder %s24, 0
      %p77 = por %p75, %p76
      %s79 = sadd.s32 %s78, 1
      %p82 = scmp.eq.s32.totalorder %s18, 1
      %p83 = scmp.ne.s32.totalorder %s78, %s80
      %p84 = scmp.eq.s32.totalorder %s18, 0
      %p85 = por %p83, %p84
      %p86 = scmp.ne.s32.totalorder %s78, %s80
      %p87 = scmp.eq.s32.totalorder %s23, 1
      %p88 = por %p86, %p87
      %p89 = scmp.ne.s32.totalorder %s80, %s81
      %p90 = scmp.eq.s32.totalorder %s23, 0
      %p91 = por %p89, %p90
      %p92 = scmp.ne.s32.totalorder %s80, %s81
      %p93 = scmp.eq.s32.totalorder %s24, 1
      %p94 = por %p92, %p93
      %p96 = scmp.ne.s32.totalorder %s81, %s95
      %p97 = scmp.eq.s32.totalorder %s24, 0
      %p98 = por %p96, %p97
      %s100 = sadd.s32 %s99, 1
      %p103 = scmp.eq.s32.totalorder %s18, 1
      %p104 = scmp.ne.s32.totalorder %s99, %s101
      %p105 = scmp.eq.s32.totalorder %s18, 0
      %p106 = por %p104, %p105
      %p107 = scmp.ne.s32.totalorder %s99, %s101
      %p108 = scmp.eq.s32.totalorder %s23, 1
      %p109 = por %p107, %p108
      %p110 = scmp.ne.s32.totalorder %s101, %s102
      %p111 = scmp.eq.s32.totalorder %s23, 0
      %p112 = por %p110, %p111
      %p113 = scmp.ne.s32.totalorder %s101, %s102
      %p114 = scmp.eq.s32.totalorder %s24, 1
      %p115 = por %p113, %p114
      %p117 = scmp.ne.s32.totalorder %s102, %s116
      %p118 = scmp.eq.s32.totalorder %s24, 0
      %p119 = por %p117, %p118
      %s121 = sadd.s32 %s120, 1
      %p124 = scmp.eq.s32.totalorder %s18, 1
      %p125 = scmp.ne.s32.totalorder %s120, %s122
      %p126 = scmp.eq.s32.totalorder %s18, 0
      %p127 = por %p125, %p126
      %p128 = scmp.ne.s32.totalorder %s120, %s122
      %p129 = scmp.eq.s32.totalorder %s23, 1
      %p130 = por %p128, %p129
      %p131 = scmp.ne.s32.totalorder %s122, %s123
      %p132 = scmp.eq.s32.totalorder %s23, 0
      %p133 = por %p131, %p132
      %p134 = scmp.ne.s32.totalorder %s122, %s123
      %p135 = scmp.eq.s32.totalorder %s24, 1
      %p136 = por %p134, %p135
      %p138 = scmp.ne.s32.totalorder %s123, %s137
      %p139 = scmp.eq.s32.totalorder %s24, 0
      %p140 = por %p138, %p139
      %s142 = sadd.s32 %s141, 1
      %p145 = scmp.eq.s32.totalorder %s18, 1
      %p146 = scmp.ne.s32.totalorder %s141, %s143
      %p147 = scmp.eq.s32.totalorder %s18, 0
      %p148 = por %p146, %p147
      %p149 = scmp.ne.s32.totalorder %s141, %s143
      %p150 = scmp.eq.s32.totalorder %s23, 1
      %p151 = por %p149, %p150
      %p152 = scmp.ne.s32.totalorder %s143, %s144
      %p153 = scmp.eq.s32.totalorder %s23, 0
      %p154 = por %p152, %p153
      %p155 = scmp.ne.s32.totalorder %s143, %s144
      %p156 = scmp.eq.s32.totalorder %s24, 1
      %p157 = por %p155, %p156
      %p159 = scmp.ne.s32.totalorder %s144, %s158
      %p160 = scmp.eq.s32.totalorder %s24, 0
      %p161 = por %p159, %p160
      %s163 = sadd.s32 %s162, 1
      %p166 = scmp.eq.s32.totalorder %s18, 1
      %p167 = scmp.ne.s32.totalorder %s162, %s164
      %p168 = scmp.eq.s32.totalorder %s18, 0
      %p169 = por %p167, %p168
      %p170 = scmp.ne.s32.totalorder %s162, %s164
      %p171 = scmp.eq.s32.totalorder %s23, 1
      %p172 = por %p170, %p171
      %p173 = scmp.ne.s32.totalorder %s164, %s165
      %p174 = scmp.eq.s32.totalorder %s23, 0
      %p175 = por %p173, %p174
      %p176 = scmp.ne.s32.totalorder %s164, %s165
      %p177 = scmp.eq.s32.totalorder %s24, 1
      %p178 = por %p176, %p177
      %p180 = scmp.ne.s32.totalorder %s165, %s179
      %p181 = scmp.eq.s32.totalorder %s24, 0
      %p182 = por %p180, %p181
      %s184 = sadd.s32 %s183, 1
      %p187 = scmp.eq.s32.totalorder %s18, 1
      %p188 = scmp.ne.s32.totalorder %s183, %s185
      %p189 = scmp.eq.s32.totalorder %s18, 0
      %p190 = por %p188, %p189
      %p191 = scmp.ne.s32.totalorder %s183, %s185
      %p192 = scmp.eq.s32.totalorder %s23, 1
      %p193 = por %p191, %p192
      %p194 = scmp.ne.s32.totalorder %s185, %s186
      %p195 = scmp.eq.s32.totalorder %s23, 0
      %p196 = por %p194, %p195
      %p197 = scmp.ne.s32.totalorder %s185, %s186
      %p198 = scmp.eq.s32.totalorder %s24, 1
      %p199 = por %p197, %p198
      %p201 = scmp.ne.s32.totalorder %s186, %s200
      %p202 = scmp.eq.s32.totalorder %s24, 0
      %p203 = por %p201, %p202
      %s205 = sadd.s32 %s204, 1
      %p208 = scmp.eq.s32.totalorder %s18, 1
      %p209 = scmp.ne.s32.totalorder %s204, %s206
      %p210 = scmp.eq.s32.totalorder %s18, 0
      %p211 = por %p209, %p210
      %p212 = scmp.ne.s32.totalorder %s204, %s206
      %p213 = scmp.eq.s32.totalorder %s23, 1
      %p214 = por %p212, %p213
      %p215 = scmp.ne.s32.totalorder %s206, %s207
      %p216 = scmp.eq.s32.totalorder %s23, 0
      %p217 = por %p215, %p216
      %p218 = scmp.ne.s32.totalorder %s206, %s207
      %p219 = scmp.eq.s32.totalorder %s24, 1
      %p220 = por %p218, %p219
      %p222 = scmp.ne.s32.totalorder %s207, %s221
      %p223 = scmp.eq.s32.totalorder %s24, 0
      %p224 = por %p222, %p223
      %s226 = sadd.s32 %s225, 1
      %p229 = scmp.eq.s32.totalorder %s18, 1
      %p230 = scmp.ne.s32.totalorder %s225, %s227
      %p231 = scmp.eq.s32.totalorder %s18, 0
      %p232 = por %p230, %p231
      %p233 = scmp.ne.s32.totalorder %s225, %s227
      %p234 = scmp.eq.s32.totalorder %s23, 1
      %p235 = por %p233, %p234
      %p236 = scmp.ne.s32.totalorder %s227, %s228
      %p237 = scmp.eq.s32.totalorder %s23, 0
      %p238 = por %p236, %p237
      %p239 = scmp.ne.s32.totalorder %s227, %s228
      %p240 = scmp.eq.s32.totalorder %s24, 1
      %p241 = por %p239, %p240
      %p243 = scmp.ne.s32.totalorder %s228, %s242
      %p244 = scmp.eq.s32.totalorder %s24, 0
      %p245 = por %p243, %p244
      %s247 = sadd.s32 %s246, 1
      %p250 = scmp.eq.s32.totalorder %s18, 1
      %p251 = scmp.ne.s32.totalorder %s246, %s248
      %p252 = scmp.eq.s32.totalorder %s18, 0
      %p253 = por %p251, %p252
      %p254 = scmp.ne.s32.totalorder %s246, %s248
      %p255 = scmp.eq.s32.totalorder %s23, 1
      %p256 = por %p254, %p255
      %p257 = scmp.ne.s32.totalorder %s248, %s249
      %p258 = scmp.eq.s32.totalorder %s23, 0
      %p259 = por %p257, %p258
      %p260 = scmp.ne.s32.totalorder %s248, %s249
      %p261 = scmp.eq.s32.totalorder %s24, 1
      %p262 = por %p260, %p261
      %p264 = scmp.ne.s32.totalorder %s249, %s263
      %p265 = scmp.eq.s32.totalorder %s24, 0
      %p266 = por %p264, %p265
      %s267 = ssub.s32 %s18, %s25
      %p268 = scmp.eq.s32.totalorder %s267, 0
      %s270 = sadd.s32 %s269, 1
      %s271 = scalar_select %p268, %s269, %s270
      %p274 = pneg %p268
      %p275 = scmp.eq.s32.totalorder %s18, 1
      %p276 = por %p274, %p275
      %p277 = scmp.ne.s32.totalorder %s269, %s272
      %p278 = scmp.eq.s32.totalorder %s18, 0
      %p279 = por %p277, %p278
      %p280 = scmp.ne.s32.totalorder %s269, %s272
      %p281 = scmp.eq.s32.totalorder %s23, 1
      %p282 = por %p280, %p281
      %p283 = scmp.ne.s32.totalorder %s272, %s273
      %p284 = scmp.eq.s32.totalorder %s23, 0
      %p285 = por %p283, %p284
      %p286 = scmp.ne.s32.totalorder %s272, %s273
      %p287 = scmp.eq.s32.totalorder %s24, 1
      %p288 = por %p286, %p287
      %p290 = scmp.ne.s32.totalorder %s273, %s289
      %p291 = scmp.eq.s32.totalorder %s24, 0
      %p292 = por %p290, %p291
      %p293 = scmp.le.s32.totalorder 1, %s18
      %p294 = scmp.lt.s32.totalorder %s18, 3
      %p295 = pnand %p293, %p294
      %p296 = pneg %p295
      // Predicated region
      $region9: #{_lambda_.1} parent=5 // pred_check
        _
      $region10: #{_lambda_.1} parent=5 // pred_check_branch
        %298 = sbr.rel (%p295) target = $region12
      $region11: #{_lambda_.1} parent=5 // pred_region
        %s299 = ssub.s32 %s18, 1
        // Predicated region
        $region13: #{_lambda_.1} parent=11 // pred_check
          %p300 = pneg %p91
        $region14: #{_lambda_.1} parent=11 // pred_check_branch
          %302 = sbr.rel (%p300) target = $region16
        $region15: #{_lambda_.1} parent=11 // pred_region
          _
        $region16: #{_lambda_.1} parent=11 // pred_fallthru
          _
        // Predicated region
        $region17: #{_lambda_.1} parent=11 // pred_check
          %p303 = pneg %p112
        $region18: #{_lambda_.1} parent=11 // pred_check_branch
          %305 = sbr.rel (%p303) target = $region20
        $region19: #{_lambda_.1} parent=11 // pred_region
          _
        $region20: #{_lambda_.1} parent=11 // pred_fallthru
          _
        // Predicated region
        $region21: #{_lambda_.1} parent=11 // pred_check
          %p306 = pneg %p133
        $region22: #{_lambda_.1} parent=11 // pred_check_branch
          %308 = sbr.rel (%p306) target = $region24
        $region23: #{_lambda_.1} parent=11 // pred_region
          _
        $region24: #{_lambda_.1} parent=11 // pred_fallthru
          _
        // Predicated region
        $region25: #{_lambda_.1} parent=11 // pred_check
          %p309 = pneg %p154
        $region26: #{_lambda_.1} parent=11 // pred_check_branch
          %311 = sbr.rel (%p309) target = $region28
        $region27: #{_lambda_.1} parent=11 // pred_region
          _
        $region28: #{_lambda_.1} parent=11 // pred_fallthru
          _
        // Predicated region
        $region29: #{_lambda_.1} parent=11 // pred_check
          %p312 = pneg %p175
        $region30: #{_lambda_.1} parent=11 // pred_check_branch
          %314 = sbr.rel (%p312) target = $region32
        $region31: #{_lambda_.1} parent=11 // pred_region
          _
        $region32: #{_lambda_.1} parent=11 // pred_fallthru
          _
        // Predicated region
        $region33: #{_lambda_.1} parent=11 // pred_check
          %p315 = pneg %p196
        $region34: #{_lambda_.1} parent=11 // pred_check_branch
          %317 = sbr.rel (%p315) target = $region36
        $region35: #{_lambda_.1} parent=11 // pred_region
          _
        $region36: #{_lambda_.1} parent=11 // pred_fallthru
          _
        // Predicated region
        $region37: #{_lambda_.1} parent=11 // pred_check
          %p318 = pneg %p217
        $region38: #{_lambda_.1} parent=11 // pred_check_branch
          %320 = sbr.rel (%p318) target = $region40
        $region39: #{_lambda_.1} parent=11 // pred_region
          _
        $region40: #{_lambda_.1} parent=11 // pred_fallthru
          _
        // Predicated region
        $region41: #{_lambda_.1} parent=11 // pred_check
          %p321 = pneg %p238
        $region42: #{_lambda_.1} parent=11 // pred_check_branch
          %323 = sbr.rel (%p321) target = $region44
        $region43: #{_lambda_.1} parent=11 // pred_region
          _
        $region44: #{_lambda_.1} parent=11 // pred_fallthru
          _
        // Predicated region
        $region45: #{_lambda_.1} parent=11 // pred_check
          %p324 = pneg %p259
        $region46: #{_lambda_.1} parent=11 // pred_check_branch
          %326 = sbr.rel (%p324) target = $region48
        $region47: #{_lambda_.1} parent=11 // pred_region
          %328 = vsyncadd [#allocation3], 0
          %s330 = sshll.u32 %s10, 4
          %s331 = int_to_ptr.vmem [resolvable:$true] %s330
          %333 = dma.vmem_to_smem %s331, 16, [#allocation2], [#allocation3]
        $region48: #{_lambda_.1} parent=11 // pred_fallthru
          _
      $region12: #{_lambda_.1} parent=5 // pred_fallthru
        _
      %p334 = scmp.lt.s32.totalorder %s18, 2
      // Predicated region
      $region49: #{_lambda_.1} parent=5 // pred_check
        %p335 = pneg %p334
      $region50: #{_lambda_.1} parent=5 // pred_check_branch
        %337 = sbr.rel (%p335) target = $region52
      $region51: #{_lambda_.1} parent=5 // pred_region
        // Predicated region
        $region53: #{_lambda_.1} parent=51 // pred_check
          %p338 = pneg %p38
        $region54: #{_lambda_.1} parent=51 // pred_check_branch
          %340 = sbr.rel (%p338) target = $region56
        $region55: #{_lambda_.1} parent=51 // pred_region
          %p341 = scmp.lt.s32.totalorder %s18, 1
          %s342 = scalar_select %p341, %s18, 1
          %s343 = smul.addr %s342, 8
          %s344 = smul.addr %s343, 8
          %s345 = scalar_lea.vmem %s0, %s344
        $region56: #{_lambda_.1} parent=51 // pred_fallthru
          _
        // Predicated region
        $region57: #{_lambda_.1} parent=51 // pred_check
          %p346 = pneg %p64
        $region58: #{_lambda_.1} parent=51 // pred_check_branch
          %348 = sbr.rel (%p346) target = $region60
        $region59: #{_lambda_.1} parent=51 // pred_region
          %p349 = scmp.lt.s32.totalorder %s18, 1
          %s350 = scalar_select %p349, %s18, 1
          %s351 = smul.addr %s350, 8
          %s352 = smul.addr %s351, 8
          %s353 = scalar_lea.vmem %s1, %s352
        $region60: #{_lambda_.1} parent=51 // pred_fallthru
          _
      $region52: #{_lambda_.1} parent=5 // pred_fallthru
        _
      %p354 = scmp.le.s32.totalorder 1, %s18
      %p355 = scmp.lt.s32.totalorder %s18, 3
      %p356 = pnand %p354, %p355
      %p357 = pneg %p356
      // Predicated region
      $region61: #{_lambda_.1} parent=5 // pred_check
        _
      $region62: #{_lambda_.1} parent=5 // pred_check_branch
        %359 = sbr.rel (%p356) target = $region64
      $region63: #{_lambda_.1} parent=5 // pred_region
        %s360 = ssub.s32 %s18, 1
        // Predicated region
        $region65: #{_lambda_.1} parent=63 // pred_check
          %p361 = pneg %p259
        $region66: #{_lambda_.1} parent=63 // pred_check_branch
          %363 = sbr.rel (%p361) target = $region68
        $region67: #{_lambda_.1} parent=63 // pred_region
          %365 = dma.done [#allocation3], 16
        $region68: #{_lambda_.1} parent=63 // pred_fallthru
          _
        %366 = sfence
        %p367 = scmp.lt.s32.totalorder %s23, 1
        %s368 = scalar_select %p367, %s23, 1
        %s369 = smul.addr %s368, 8
        %s370 = smul.addr %s369, 8
        %s371 = scalar_lea.vmem %s0, %s370
        %p372 = pneg %p44
        %p373 = pneg %p41
        %p374 = scmp.lt.s32.totalorder %s23, 1
        %s375 = scalar_select %p374, %s23, 1
        %s376 = smul.addr %s375, 8
        %s377 = smul.addr %s376, 8
        %s378 = scalar_lea.vmem %s1, %s377
        %p379 = pneg %p70
        %p380 = pneg %p67
        %p381 = pneg %p91
        %p382 = pneg %p88
        %p383 = pneg %p112
        %p384 = pneg %p109
        %p385 = pneg %p133
        %p386 = pneg %p130
        %p387 = pneg %p154
        %p388 = pneg %p151
        %p389 = pneg %p175
        %p390 = pneg %p172
        %p391 = pneg %p196
        %p392 = pneg %p193
        %p393 = pneg %p217
        %p394 = pneg %p214
        %p395 = pneg %p238
        %p396 = pneg %p235
        %p397 = pneg %p259
        %p398 = pneg %p256
        %p399 = pneg %p285
        %p400 = pneg %p282
        %p401 = scmp.lt.s32.totalorder %s23, 1
        %s402 = scalar_select %p401, %s23, 1
        %s403 = smul.addr %s402, 8
        %s404 = smul.addr %s403, 8
        %s405 = scalar_lea.vmem %s11, %s404
        %p406 = scmp.lt.s32.totalorder %s23, 1
        %s407 = scalar_select %p406, %s23, 1
        %s408 = smul.addr %s407, 8
        %s409 = smul.addr %s408, 8
        %s410 = scalar_lea.vmem %s0, %s409
        %p411 = scmp.lt.s32.totalorder %s23, 1
        %s412 = scalar_select %p411, %s23, 1
        %s413 = smul.addr %s412, 8
        %s414 = smul.addr %s413, 8
        %s415 = scalar_lea.vmem %s1, %s414
        %p416 = scmp.lt.s32.totalorder %s23, 1
        %s417 = scalar_select %p416, %s23, 1
        %s418 = smul.addr %s417, 8
        %s419 = smul.addr %s418, 8
        %s420 = scalar_lea.vmem %s11, %s419
        %v422 = vld [vmem:[%s2] sm:$0xff]
        %v423 = vld [vmem:[%s2 + $0x8] sm:$0xff]
        %v424 = vld [vmem:[%s2 + $0x10] sm:$0xff]
        %v425 = vld [vmem:[%s2 + $0x18] sm:$0xff]
        %v426 = vld [vmem:[%s2 + $0x20] sm:$0xff]
        %v427 = vld [vmem:[%s2 + $0x28] sm:$0xff]
        %v428 = vld [vmem:[%s2 + $0x30] sm:$0xff]
        %v429 = vld [vmem:[%s2 + $0x38] sm:$0xff]
        %v430 = vld [vmem:[%s410] sm:$0xff]
        %v431 = vld [vmem:[%s410 + $0x8] sm:$0xff]
        %v432 = vld [vmem:[%s410 + $0x10] sm:$0xff]
        %v433 = vld [vmem:[%s410 + $0x18] sm:$0xff]
        %v434 = vld [vmem:[%s410 + $0x20] sm:$0xff]
        %v435 = vld [vmem:[%s410 + $0x28] sm:$0xff]
        %v436 = vld [vmem:[%s410 + $0x30] sm:$0xff]
        %v437 = vld [vmem:[%s410 + $0x38] sm:$0xff]
        %v438 = vpack.c.bf16 %v431, %v430
        %v439 = vpack.c.bf16 %v433, %v432
        %v440 = vpack.c.bf16 %v435, %v434
        %v441 = vpack.c.bf16 %v437, %v436
        %v442 = vld [vmem:[%s3] sm:$0xf]
        %v443 = vrot.slane %v430, 1
        %v444 = vrot.slane %v431, 1
        %v445 = vrot.slane %v432, 1
        %v446 = vrot.slane %v433, 1
        %v447 = vrot.slane %v434, 1
        %v448 = vrot.slane %v435, 1
        %v449 = vrot.slane %v436, 1
        %v450 = vrot.slane %v437, 1
        %v451 = vlaneseq
        %v452 = vshrl.u32 %v451, 7
        %vm453 = vcmp.lt.s32.totalorder %v452, 7
        %v454 = vsel %vm453, %v449, %v450
        %v455 = vsel %vm453, %v448, %v449
        %v456 = vsel %vm453, %v447, %v448
        %v457 = vsel %vm453, %v446, %v447
        %v458 = vsel %vm453, %v445, %v446
        %v459 = vsel %vm453, %v444, %v445
        %v460 = vsel %vm453, %v443, %v444
        %v461 = vsel %vm453, %v450, %v443
        %463 = vset.pattern.permute.xlu0 5
        %464 = vperm.xlu0 %463, %v422
        %v465 = vpop.permute.xlu0 %464
        %468 = vset.pattern.permute.xlu0 5
        %469 = vperm.xlu0 %468, %v423
        %v470 = vpop.permute.xlu0 %469
        %473 = vset.pattern.permute.xlu0 5
        %474 = vperm.xlu0 %473, %v424
        %v475 = vpop.permute.xlu0 %474
        %478 = vset.pattern.permute.xlu0 5
        %479 = vperm.xlu0 %478, %v425
        %v480 = vpop.permute.xlu0 %479
        %483 = vset.pattern.permute.xlu0 5
        %484 = vperm.xlu0 %483, %v426
        %v485 = vpop.permute.xlu0 %484
        %488 = vset.pattern.permute.xlu0 5
        %489 = vperm.xlu0 %488, %v427
        %v490 = vpop.permute.xlu0 %489
        %493 = vset.pattern.permute.xlu0 5
        %494 = vperm.xlu0 %493, %v428
        %v495 = vpop.permute.xlu0 %494
        %498 = vset.pattern.permute.xlu0 5
        %499 = vperm.xlu0 %498, %v429
        %v500 = vpop.permute.xlu0 %499
        %v502 = vmul.f32 %v460, %v465
        %v503 = vmul.f32 %v459, %v470
        %v504 = vmul.f32 %v458, %v475
        %v505 = vmul.f32 %v457, %v480
        %v506 = vmul.f32 %v456, %v485
        %v507 = vmul.f32 %v455, %v490
        %v508 = vmul.f32 %v454, %v495
        %v509 = vmul.f32 %v461, %v500
        %v510 = vpack.c.bf16 %v503, %v502
        %v511 = vpack.c.bf16 %v505, %v504
        %v512 = vpack.c.bf16 %v507, %v506
        %v513 = vpack.c.bf16 %v509, %v508
        %s514 = scalar_lea.vmem %s3, 4
        %v515 = vld [vmem:[%s514] sm:$0xf]
        %vm516 = vcmask 64512
        %v518 = vsel %vm516, %v510, 0
        %v521 = vsel %vm516, %v511, 0
        %v524 = vsel %vm516, %v512, 0
        %v527 = vsel %vm516, %v513, 0
        %vm529 = vcmask 1043456
        %v531 = vsel %vm529, %v515, 0
        %533 = vmatpush.bf16.msra.mxu0 0
        %534 = vmatpush.bf16.msra.mxu0 0
        %535 = vmatpush.bf16.msra.mxu0 0
        %536 = vmatpush.bf16.msra.mxu0 0
        %537 = vmatpush.bf16.msra.mxu0 0
        %538 = vmatpush.bf16.msra.mxu0 0
        %539 = vmatpush.bf16.msra.mxu0 0
        %540 = vmatpush.bf16.msra.mxu0 %v531
        %541 = vmatmul.bf16.gmra.mxu0 %v518
        %v542 = vpop.f32.mrf.mxu0
        %v543 = vadd.f32 0.0, %v542
        %v544 = vpop.f32.mrf.mxu0
        %v545 = vadd.f32 0.0, %v544
        %546 = vmatmul.bf16.gmra.mxu0 %v521
        %v547 = vpop.f32.mrf.mxu0
        %v548 = vadd.f32 0.0, %v547
        %v549 = vpop.f32.mrf.mxu0
        %v550 = vadd.f32 0.0, %v549
        %551 = vmatmul.bf16.gmra.mxu0 %v524
        %v552 = vpop.f32.mrf.mxu0
        %v553 = vadd.f32 0.0, %v552
        %v554 = vpop.f32.mrf.mxu0
        %v555 = vadd.f32 0.0, %v554
        %556 = vmatmul.bf16.gmra.mxu0 %v527
        %v557 = vpop.f32.mrf.mxu0
        %v558 = vadd.f32 0.0, %v557
        %v559 = vpop.f32.mrf.mxu0
        %v560 = vadd.f32 0.0, %v559
        %561 = vdwg.mxu0
        %v563 = vsel %vm516, %v438, 0
        %v566 = vsel %vm516, %v439, 0
        %v569 = vsel %vm516, %v440, 0
        %v572 = vsel %vm516, %v441, 0
        %v575 = vsel %vm529, %v442, 0
        %577 = vmatpush.bf16.msra.mxu0 0
        %578 = vmatpush.bf16.msra.mxu0 0
        %579 = vmatpush.bf16.msra.mxu0 0
        %580 = vmatpush.bf16.msra.mxu0 0
        %581 = vmatpush.bf16.msra.mxu0 0
        %582 = vmatpush.bf16.msra.mxu0 0
        %583 = vmatpush.bf16.msra.mxu0 0
        %584 = vmatpush.bf16.msra.mxu0 %v575
        %585 = vmatmul.bf16.gmra.mxu0 %v563
        %v586 = vpop.f32.mrf.mxu0
        %v587 = vadd.f32 %v543, %v586
        %v588 = vpop.f32.mrf.mxu0
        %v589 = vadd.f32 %v545, %v588
        %590 = vmatmul.bf16.gmra.mxu0 %v566
        %v591 = vpop.f32.mrf.mxu0
        %v592 = vadd.f32 %v548, %v591
        %v593 = vpop.f32.mrf.mxu0
        %v594 = vadd.f32 %v550, %v593
        %595 = vmatmul.bf16.gmra.mxu0 %v569
        %v596 = vpop.f32.mrf.mxu0
        %v597 = vadd.f32 %v553, %v596
        %v598 = vpop.f32.mrf.mxu0
        %v599 = vadd.f32 %v555, %v598
        %600 = vmatmul.bf16.gmra.mxu0 %v572
        %v601 = vpop.f32.mrf.mxu0
        %v602 = vadd.f32 %v558, %v601
        %v603 = vpop.f32.mrf.mxu0
        %v604 = vadd.f32 %v560, %v603
        %605 = vdwg.mxu0
        %606 = vset.pattern.permute.xlu0 7
        %607 = vperm.xlu0 %606, %v422
        %v608 = vpop.permute.xlu0 %607
        %610 = vset.pattern.permute.xlu0 7
        %611 = vperm.xlu0 %610, %v423
        %v612 = vpop.permute.xlu0 %611
        %614 = vset.pattern.permute.xlu0 7
        %615 = vperm.xlu0 %614, %v424
        %v616 = vpop.permute.xlu0 %615
        %618 = vset.pattern.permute.xlu0 7
        %619 = vperm.xlu0 %618, %v425
        %v620 = vpop.permute.xlu0 %619
        %622 = vset.pattern.permute.xlu0 7
        %623 = vperm.xlu0 %622, %v426
        %v624 = vpop.permute.xlu0 %623
        %626 = vset.pattern.permute.xlu0 7
        %627 = vperm.xlu0 %626, %v427
        %v628 = vpop.permute.xlu0 %627
        %630 = vset.pattern.permute.xlu0 7
        %631 = vperm.xlu0 %630, %v428
        %v632 = vpop.permute.xlu0 %631
        %634 = vset.pattern.permute.xlu0 7
        %635 = vperm.xlu0 %634, %v429
        %v636 = vpop.permute.xlu0 %635
        %v638 = vmul.f32 %v431, %v608
        %v639 = vmul.f32 %v432, %v612
        %v640 = vmul.f32 %v433, %v616
        %v641 = vmul.f32 %v434, %v620
        %v642 = vmul.f32 %v435, %v624
        %v643 = vmul.f32 %v436, %v628
        %v644 = vmul.f32 %v437, %v632
        %v645 = vmul.f32 %v430, %v636
        %v646 = vpack.c.bf16 %v639, %v638
        %v647 = vpack.c.bf16 %v641, %v640
        %v648 = vpack.c.bf16 %v643, %v642
        %v649 = vpack.c.bf16 %v645, %v644
        %s650 = scalar_lea.vmem %s3, 8
        %v651 = vld [vmem:[%s650] sm:$0xf]
        %v653 = vsel %vm516, %v646, 0
        %v656 = vsel %vm516, %v647, 0
        %v659 = vsel %vm516, %v648, 0
        %v662 = vsel %vm516, %v649, 0
        %v665 = vsel %vm529, %v651, 0
        %667 = vmatpush.bf16.msra.mxu0 0
        %668 = vmatpush.bf16.msra.mxu0 0
        %669 = vmatpush.bf16.msra.mxu0 0
        %670 = vmatpush.bf16.msra.mxu0 0
        %671 = vmatpush.bf16.msra.mxu0 0
        %672 = vmatpush.bf16.msra.mxu0 0
        %673 = vmatpush.bf16.msra.mxu0 0
        %674 = vmatpush.bf16.msra.mxu0 %v665
        %675 = vmatmul.bf16.gmra.mxu0 %v653
        %v676 = vpop.f32.mrf.mxu0
        %v677 = vadd.f32 0.0, %v676
        %v678 = vpop.f32.mrf.mxu0
        %v679 = vadd.f32 0.0, %v678
        %680 = vmatmul.bf16.gmra.mxu0 %v656
        %v681 = vpop.f32.mrf.mxu0
        %v682 = vadd.f32 0.0, %v681
        %v683 = vpop.f32.mrf.mxu0
        %v684 = vadd.f32 0.0, %v683
        %685 = vmatmul.bf16.gmra.mxu0 %v659
        %v686 = vpop.f32.mrf.mxu0
        %v687 = vadd.f32 0.0, %v686
        %v688 = vpop.f32.mrf.mxu0
        %v689 = vadd.f32 0.0, %v688
        %690 = vmatmul.bf16.gmra.mxu0 %v662
        %v691 = vpop.f32.mrf.mxu0
        %v692 = vadd.f32 0.0, %v691
        %v693 = vpop.f32.mrf.mxu0
        %v694 = vadd.f32 0.0, %v693
        %695 = vdwg.mxu0
        %v696 = vadd.f32 %v587, %v677
        %v697 = vadd.f32 %v589, %v679
        %v698 = vadd.f32 %v592, %v682
        %v699 = vadd.f32 %v594, %v684
        %v700 = vadd.f32 %v597, %v687
        %v701 = vadd.f32 %v599, %v689
        %v702 = vadd.f32 %v602, %v692
        %v703 = vadd.f32 %v604, %v694
        %704 = vset.pattern.permute.xlu0 8
        %705 = vperm.xlu0 %704, %v422
        %v706 = vpop.permute.xlu0 %705
        %708 = vset.pattern.permute.xlu0 8
        %709 = vperm.xlu0 %708, %v423
        %v710 = vpop.permute.xlu0 %709
        %712 = vset.pattern.permute.xlu0 8
        %713 = vperm.xlu0 %712, %v424
        %v714 = vpop.permute.xlu0 %713
        %716 = vset.pattern.permute.xlu0 8
        %717 = vperm.xlu0 %716, %v425
        %v718 = vpop.permute.xlu0 %717
        %720 = vset.pattern.permute.xlu0 8
        %721 = vperm.xlu0 %720, %v426
        %v722 = vpop.permute.xlu0 %721
        %724 = vset.pattern.permute.xlu0 8
        %725 = vperm.xlu0 %724, %v427
        %v726 = vpop.permute.xlu0 %725
        %728 = vset.pattern.permute.xlu0 8
        %729 = vperm.xlu0 %728, %v428
        %v730 = vpop.permute.xlu0 %729
        %732 = vset.pattern.permute.xlu0 8
        %733 = vperm.xlu0 %732, %v429
        %v734 = vpop.permute.xlu0 %733
        %v736 = vmul.f32 %v459, %v706
        %v737 = vmul.f32 %v458, %v710
        %v738 = vmul.f32 %v457, %v714
        %v739 = vmul.f32 %v456, %v718
        %v740 = vmul.f32 %v455, %v722
        %v741 = vmul.f32 %v454, %v726
        %v742 = vmul.f32 %v461, %v730
        %v743 = vmul.f32 %v460, %v734
        %v744 = vpack.c.bf16 %v737, %v736
        %v745 = vpack.c.bf16 %v739, %v738
        %v746 = vpack.c.bf16 %v741, %v740
        %v747 = vpack.c.bf16 %v743, %v742
        %s748 = scalar_lea.vmem %s3, 12
        %v749 = vld [vmem:[%s748] sm:$0xf]
        %v751 = vsel %vm516, %v744, 0
        %v754 = vsel %vm516, %v745, 0
        %v757 = vsel %vm516, %v746, 0
        %v760 = vsel %vm516, %v747, 0
        %v763 = vsel %vm529, %v749, 0
        %765 = vmatpush.bf16.msra.mxu0 0
        %766 = vmatpush.bf16.msra.mxu0 0
        %767 = vmatpush.bf16.msra.mxu0 0
        %768 = vmatpush.bf16.msra.mxu0 0
        %769 = vmatpush.bf16.msra.mxu0 0
        %770 = vmatpush.bf16.msra.mxu0 0
        %771 = vmatpush.bf16.msra.mxu0 0
        %772 = vmatpush.bf16.msra.mxu0 %v763
        %773 = vmatmul.bf16.gmra.mxu0 %v751
        %v774 = vpop.f32.mrf.mxu0
        %v775 = vadd.f32 0.0, %v774
        %v776 = vpop.f32.mrf.mxu0
        %v777 = vadd.f32 0.0, %v776
        %778 = vmatmul.bf16.gmra.mxu0 %v754
        %v779 = vpop.f32.mrf.mxu0
        %v780 = vadd.f32 0.0, %v779
        %v781 = vpop.f32.mrf.mxu0
        %v782 = vadd.f32 0.0, %v781
        %783 = vmatmul.bf16.gmra.mxu0 %v757
        %v784 = vpop.f32.mrf.mxu0
        %v785 = vadd.f32 0.0, %v784
        %v786 = vpop.f32.mrf.mxu0
        %v787 = vadd.f32 0.0, %v786
        %788 = vmatmul.bf16.gmra.mxu0 %v760
        %v789 = vpop.f32.mrf.mxu0
        %v790 = vadd.f32 0.0, %v789
        %v791 = vpop.f32.mrf.mxu0
        %v792 = vadd.f32 0.0, %v791
        %793 = vdwg.mxu0
        %v794 = vadd.f32 %v696, %v775
        %v795 = vadd.f32 %v697, %v777
        %v796 = vadd.f32 %v698, %v780
        %v797 = vadd.f32 %v699, %v782
        %v798 = vadd.f32 %v700, %v785
        %v799 = vadd.f32 %v701, %v787
        %v800 = vadd.f32 %v702, %v790
        %v801 = vadd.f32 %v703, %v792
        %s802 = sld [smem:[#allocation2]]
        %vm803 = vcmask 261120
        %v804 = vsel %vm803, %v794, 0.0
        %v805 = vsel %vm803, %v795, 0.0
        %v806 = vadd.f32 %v804, %v805
        %v807 = vsel %vm803, %v796, 0.0
        %v808 = vadd.f32 %v806, %v807
        %v809 = vsel %vm803, %v797, 0.0
        %v810 = vadd.f32 %v808, %v809
        %v811 = vsel %vm803, %v798, 0.0
        %v812 = vadd.f32 %v810, %v811
        %v813 = vsel %vm803, %v799, 0.0
        %v814 = vadd.f32 %v812, %v813
        %v815 = vsel %vm803, %v800, 0.0
        %v816 = vadd.f32 %v814, %v815
        %v817 = vsel %vm803, %v801, 0.0
        %v818 = vadd.f32 %v816, %v817
        %v819 = vrot.slane %v818, 4
        %v820 = vadd.f32 %v818, %v819
        %v821 = vrot.slane %v820, 2
        %v822 = vadd.f32 %v820, %v821
        %v823 = vrot.slane %v822, 1
        %v824 = vadd.f32 %v822, %v823
        %826 = vrot.lane.b32.xlu0 %v824, 120
        %v827 = vpop.permute.xlu0 %826
        %v829 = vadd.f32 %v824, %v827
        %830 = vrot.lane.b32.xlu0 %v824, 112
        %v831 = vpop.permute.xlu0 %830
        %v833 = vadd.f32 %v829, %v831
        %834 = vrot.lane.b32.xlu0 %v824, 104
        %v835 = vpop.permute.xlu0 %834
        %v837 = vadd.f32 %v833, %v835
        %v838 = vmul.f32 %v837, 0.00390625
        %840 = vrot.lane.b32.xlu0 %v838, 8
        %v841 = vpop.permute.xlu0 %840
        %843 = vrot.lane.b32.xlu0 %v838, 16
        %v844 = vpop.permute.xlu0 %843
        %846 = vrot.lane.b32.xlu0 %v838, 24
        %v847 = vpop.permute.xlu0 %846
        %v849 = vsel %vm516, %v838, %v841
        %vm850 = vcmask 130048
        %v851 = vsel %vm850, %v849, %v844
        %vm852 = vcmask 195584
        %v853 = vsel %vm852, %v851, %v847
        %v854 = vperm.slane %v853, 0
        %v855 = vsub.f32 %v794, %v854
        %v856 = vsub.f32 %v795, %v854
        %v857 = vsub.f32 %v796, %v854
        %v858 = vsub.f32 %v797, %v854
        %v859 = vsub.f32 %v798, %v854
        %v860 = vsub.f32 %v799, %v854
        %v861 = vsub.f32 %v800, %v854
        %v862 = vsub.f32 %v801, %v854
        %v863 = vmul.f32 %v855, %v855
        %v864 = vmul.f32 %v856, %v856
        %v865 = vmul.f32 %v857, %v857
        %v866 = vmul.f32 %v858, %v858
        %v867 = vmul.f32 %v859, %v859
        %v868 = vmul.f32 %v860, %v860
        %v869 = vmul.f32 %v861, %v861
        %v870 = vmul.f32 %v862, %v862
        %v871 = vsel %vm803, %v863, 0.0
        %v872 = vsel %vm803, %v864, 0.0
        %v873 = vadd.f32 %v871, %v872
        %v874 = vsel %vm803, %v865, 0.0
        %v875 = vadd.f32 %v873, %v874
        %v876 = vsel %vm803, %v866, 0.0
        %v877 = vadd.f32 %v875, %v876
        %v878 = vsel %vm803, %v867, 0.0
        %v879 = vadd.f32 %v877, %v878
        %v880 = vsel %vm803, %v868, 0.0
        %v881 = vadd.f32 %v879, %v880
        %v882 = vsel %vm803, %v869, 0.0
        %v883 = vadd.f32 %v881, %v882
        %v884 = vsel %vm803, %v870, 0.0
        %v885 = vadd.f32 %v883, %v884
        %v886 = vrot.slane %v885, 4
        %v887 = vadd.f32 %v885, %v886
        %v888 = vrot.slane %v887, 2
        %v889 = vadd.f32 %v887, %v888
        %v890 = vrot.slane %v889, 1
        %v891 = vadd.f32 %v889, %v890
        %893 = vrot.lane.b32.xlu0 %v891, 120
        %v894 = vpop.permute.xlu0 %893
        %v896 = vadd.f32 %v891, %v894
        %897 = vrot.lane.b32.xlu0 %v891, 112
        %v898 = vpop.permute.xlu0 %897
        %v900 = vadd.f32 %v896, %v898
        %901 = vrot.lane.b32.xlu0 %v891, 104
        %v902 = vpop.permute.xlu0 %901
        %v904 = vadd.f32 %v900, %v902
        %v905 = vmul.f32 %v904, 0.00390625
        %v906 = vadd.f32 %v905, 1e-05
        %v907 = vrsqrt.pop %v906
        %v908 = vmul.f32 %v907, %v906
        %v909 = vmul.f32 %v908, %v907
        %v910 = vmul.f32 0.5, %v909
        %v911 = vsub.f32 1.5, %v910
        %v912 = vmul.f32 %v907, %v911
        %vm913 = vweird.f32 %v906
        %vm914 = vweird.f32 %v907
        %vm915 = vmor %vm913, %vm914
        %v916 = vsel %vm915, %v907, %v912
        %918 = vrot.lane.b32.xlu0 %v916, 8
        %v919 = vpop.permute.xlu0 %918
        %921 = vrot.lane.b32.xlu0 %v916, 16
        %v922 = vpop.permute.xlu0 %921
        %924 = vrot.lane.b32.xlu0 %v916, 24
        %v925 = vpop.permute.xlu0 %924
        %v927 = vsel %vm516, %v916, %v919
        %v928 = vsel %vm850, %v927, %v922
        %v929 = vsel %vm852, %v928, %v925
        %v930 = vperm.slane %v929, 0
        %v931 = vmul.f32 %v855, %v930
        %v932 = vmul.f32 %v856, %v930
        %v933 = vmul.f32 %v857, %v930
        %v934 = vmul.f32 %v858, %v930
        %v935 = vmul.f32 %v859, %v930
        %v936 = vmul.f32 %v860, %v930
        %v937 = vmul.f32 %v861, %v930
        %v938 = vmul.f32 %v862, %v930
        %vm939 = vcmp.ge.f32.partialorder %v931, 0.0
        %vm940 = vcmp.ge.f32.partialorder %v932, 0.0
        %vm941 = vcmp.ge.f32.partialorder %v933, 0.0
        %vm942 = vcmp.ge.f32.partialorder %v934, 0.0
        %vm943 = vcmp.ge.f32.partialorder %v935, 0.0
        %vm944 = vcmp.ge.f32.partialorder %v936, 0.0
        %vm945 = vcmp.ge.f32.partialorder %v937, 0.0
        %vm946 = vcmp.ge.f32.partialorder %v938, 0.0
        %v947 = vstv %s802
        %v948 = vmul.f32 %v947, %v931
        %v949 = vmul.f32 %v947, %v932
        %v950 = vmul.f32 %v947, %v933
        %v951 = vmul.f32 %v947, %v934
        %v952 = vmul.f32 %v947, %v935
        %v953 = vmul.f32 %v947, %v936
        %v954 = vmul.f32 %v947, %v937
        %v955 = vmul.f32 %v947, %v938
        %v956 = vsel %vm939, %v931, %v948
        %v957 = vsel %vm940, %v932, %v949
        %v958 = vsel %vm941, %v933, %v950
        %v959 = vsel %vm942, %v934, %v951
        %v960 = vsel %vm943, %v935, %v952
        %v961 = vsel %vm944, %v936, %v953
        %v962 = vsel %vm945, %v937, %v954
        %v963 = vsel %vm946, %v938, %v955
        %v964 = vld [vmem:[%s415] sm:$0xff]
        %v965 = vld [vmem:[%s415 + $0x8] sm:$0xff]
        %v966 = vld [vmem:[%s415 + $0x10] sm:$0xff]
        %v967 = vld [vmem:[%s415 + $0x18] sm:$0xff]
        %v968 = vld [vmem:[%s415 + $0x20] sm:$0xff]
        %v969 = vld [vmem:[%s415 + $0x28] sm:$0xff]
        %v970 = vld [vmem:[%s415 + $0x30] sm:$0xff]
        %v971 = vld [vmem:[%s415 + $0x38] sm:$0xff]
        %v972 = vrot.slane %v964, 7
        %v973 = vrot.slane %v965, 7
        %v974 = vrot.slane %v966, 7
        %v975 = vrot.slane %v967, 7
        %v976 = vrot.slane %v968, 7
        %v977 = vrot.slane %v969, 7
        %v978 = vrot.slane %v970, 7
        %v979 = vrot.slane %v971, 7
        %vm980 = vcmp.lt.s32.totalorder %v452, 1
        %v981 = vsel %vm980, %v978, %v979
        %v982 = vsel %vm980, %v977, %v978
        %v983 = vsel %vm980, %v976, %v977
        %v984 = vsel %vm980, %v975, %v976
        %v985 = vsel %vm980, %v974, %v975
        %v986 = vsel %vm980, %v973, %v974
        %v987 = vsel %vm980, %v972, %v973
        %v988 = vsel %vm980, %v979, %v972
        %989 = vset.pattern.permute.xlu0 0
        %990 = vperm.xlu0 %989, %v422
        %v991 = vpop.permute.xlu0 %990
        %993 = vset.pattern.permute.xlu0 0
        %994 = vperm.xlu0 %993, %v423
        %v995 = vpop.permute.xlu0 %994
        %997 = vset.pattern.permute.xlu0 0
        %998 = vperm.xlu0 %997, %v424
        %v999 = vpop.permute.xlu0 %998
        %1001 = vset.pattern.permute.xlu0 0
        %1002 = vperm.xlu0 %1001, %v425
        %v1003 = vpop.permute.xlu0 %1002
        %1005 = vset.pattern.permute.xlu0 0
        %1006 = vperm.xlu0 %1005, %v426
        %v1007 = vpop.permute.xlu0 %1006
        %1009 = vset.pattern.permute.xlu0 0
        %1010 = vperm.xlu0 %1009, %v427
        %v1011 = vpop.permute.xlu0 %1010
        %1013 = vset.pattern.permute.xlu0 0
        %1014 = vperm.xlu0 %1013, %v428
        %v1015 = vpop.permute.xlu0 %1014
        %1017 = vset.pattern.permute.xlu0 0
        %1018 = vperm.xlu0 %1017, %v429
        %v1019 = vpop.permute.xlu0 %1018
        %v1021 = vmul.f32 %v981, %v991
        %v1022 = vmul.f32 %v988, %v995
        %v1023 = vmul.f32 %v987, %v999
        %v1024 = vmul.f32 %v986, %v1003
        %v1025 = vmul.f32 %v985, %v1007
        %v1026 = vmul.f32 %v984, %v1011
        %v1027 = vmul.f32 %v983, %v1015
        %v1028 = vmul.f32 %v982, %v1019
        %v1029 = vpack.c.bf16 %v1022, %v1021
        %v1030 = vpack.c.bf16 %v1024, %v1023
        %v1031 = vpack.c.bf16 %v1026, %v1025
        %v1032 = vpack.c.bf16 %v1028, %v1027
        %v1033 = vld [vmem:[%s4] sm:$0xf]
        %v1034 = vld [vmem:[%s4 + $0x4] sm:$0xf]
        %v1035 = vld [vmem:[%s4 + $0x8] sm:$0xf]
        %v1036 = vld [vmem:[%s4 + $0xc] sm:$0xf]
        %1037 = vset.pattern.permute.xlu0 1
        %1038 = vperm.xlu0 %1037, %v422
        %v1039 = vpop.permute.xlu0 %1038
        %1041 = vset.pattern.permute.xlu0 1
        %1042 = vperm.xlu0 %1041, %v423
        %v1043 = vpop.permute.xlu0 %1042
        %1045 = vset.pattern.permute.xlu0 1
        %1046 = vperm.xlu0 %1045, %v424
        %v1047 = vpop.permute.xlu0 %1046
        %1049 = vset.pattern.permute.xlu0 1
        %1050 = vperm.xlu0 %1049, %v425
        %v1051 = vpop.permute.xlu0 %1050
        %1053 = vset.pattern.permute.xlu0 1
        %1054 = vperm.xlu0 %1053, %v426
        %v1055 = vpop.permute.xlu0 %1054
        %1057 = vset.pattern.permute.xlu0 1
        %1058 = vperm.xlu0 %1057, %v427
        %v1059 = vpop.permute.xlu0 %1058
        %1061 = vset.pattern.permute.xlu0 1
        %1062 = vperm.xlu0 %1061, %v428
        %v1063 = vpop.permute.xlu0 %1062
        %1065 = vset.pattern.permute.xlu0 1
        %1066 = vperm.xlu0 %1065, %v429
        %v1067 = vpop.permute.xlu0 %1066
        %v1069 = vmul.f32 %v971, %v1039
        %v1070 = vmul.f32 %v964, %v1043
        %v1071 = vmul.f32 %v965, %v1047
        %v1072 = vmul.f32 %v966, %v1051
        %v1073 = vmul.f32 %v967, %v1055
        %v1074 = vmul.f32 %v968, %v1059
        %v1075 = vmul.f32 %v969, %v1063
        %v1076 = vmul.f32 %v970, %v1067
        %v1077 = vpack.c.bf16 %v1070, %v1069
        %v1078 = vpack.c.bf16 %v1072, %v1071
        %v1079 = vpack.c.bf16 %v1074, %v1073
        %v1080 = vpack.c.bf16 %v1076, %v1075
        %s1081 = scalar_lea.vmem %s4, 16
        %v1082 = vld [vmem:[%s1081] sm:$0xf]
        %v1083 = vld [vmem:[%s1081 + $0x4] sm:$0xf]
        %v1084 = vld [vmem:[%s1081 + $0x8] sm:$0xf]
        %v1085 = vld [vmem:[%s1081 + $0xc] sm:$0xf]
        %v1090 = vunpack.c.l.b16 %v1082
        %v1091 = vunpack.c.l.b16 %v1083
        %v1092 = vunpack.c.l.b16 %v1084
        %v1093 = vunpack.c.l.b16 %v1085
        %v1094 = vpack.c.b16 %v1091, %v1090
        %v1095 = vpack.c.b16 %v1093, %v1092
        %v1099 = vsel %vm803, %v1077, 0
        %v1102 = vsel %vm803, %v1078, 0
        %v1105 = vsel %vm803, %v1079, 0
        %v1108 = vsel %vm803, %v1080, 0
        %1110 = vmatpush.bf16.msra.mxu0 0
        %1111 = vmatpush.bf16.msra.mxu0 0
        %1112 = vmatpush.bf16.msra.mxu0 0
        %1113 = vmatpush.bf16.msra.mxu0 0
        %1114 = vmatpush.bf16.msra.mxu0 0
        %1115 = vmatpush.bf16.msra.mxu0 0
        %1116 = vmatpush.bf16.msra.mxu0 %v1095
        %1117 = vmatpush.bf16.msra.mxu0 %v1094
        %1118 = vmatmul.bf16.gmra.mxu0 %v1099
        %v1119 = vpop.f32.mrf.mxu0
        %v1120 = vadd.f32 0.0, %v1119
        %v1121 = vpop.f32.mrf.mxu0
        %v1122 = vadd.f32 0.0, %v1121
        %1123 = vmatmul.bf16.gmra.mxu0 %v1102
        %v1124 = vpop.f32.mrf.mxu0
        %v1125 = vadd.f32 0.0, %v1124
        %v1126 = vpop.f32.mrf.mxu0
        %v1127 = vadd.f32 0.0, %v1126
        %1128 = vmatmul.bf16.gmra.mxu0 %v1105
        %v1129 = vpop.f32.mrf.mxu0
        %v1130 = vadd.f32 0.0, %v1129
        %v1131 = vpop.f32.mrf.mxu0
        %v1132 = vadd.f32 0.0, %v1131
        %1133 = vmatmul.bf16.gmra.mxu0 %v1108
        %v1134 = vpop.f32.mrf.mxu0
        %v1135 = vadd.f32 0.0, %v1134
        %v1136 = vpop.f32.mrf.mxu0
        %v1137 = vadd.f32 0.0, %v1136
        %1138 = vdwg.mxu0
        %v1143 = vunpack.c.l.b16 %v1033
        %v1144 = vunpack.c.l.b16 %v1034
        %v1145 = vunpack.c.l.b16 %v1035
        %v1146 = vunpack.c.l.b16 %v1036
        %v1147 = vpack.c.b16 %v1144, %v1143
        %v1148 = vpack.c.b16 %v1146, %v1145
        %v1152 = vsel %vm803, %v1029, 0
        %v1155 = vsel %vm803, %v1030, 0
        %v1158 = vsel %vm803, %v1031, 0
        %v1161 = vsel %vm803, %v1032, 0
        %1163 = vmatpush.bf16.msra.mxu0 0
        %1164 = vmatpush.bf16.msra.mxu0 0
        %1165 = vmatpush.bf16.msra.mxu0 0
        %1166 = vmatpush.bf16.msra.mxu0 0
        %1167 = vmatpush.bf16.msra.mxu0 0
        %1168 = vmatpush.bf16.msra.mxu0 0
        %1169 = vmatpush.bf16.msra.mxu0 %v1148
        %1170 = vmatpush.bf16.msra.mxu0 %v1147
        %1171 = vmatmul.bf16.gmra.mxu0 %v1152
        %v1172 = vpop.f32.mrf.mxu0
        %v1173 = vadd.f32 %v1120, %v1172
        %v1174 = vpop.f32.mrf.mxu0
        %v1175 = vadd.f32 %v1122, %v1174
        %1176 = vmatmul.bf16.gmra.mxu0 %v1155
        %v1177 = vpop.f32.mrf.mxu0
        %v1178 = vadd.f32 %v1125, %v1177
        %v1179 = vpop.f32.mrf.mxu0
        %v1180 = vadd.f32 %v1127, %v1179
        %1181 = vmatmul.bf16.gmra.mxu0 %v1158
        %v1182 = vpop.f32.mrf.mxu0
        %v1183 = vadd.f32 %v1130, %v1182
        %v1184 = vpop.f32.mrf.mxu0
        %v1185 = vadd.f32 %v1132, %v1184
        %1186 = vmatmul.bf16.gmra.mxu0 %v1161
        %v1187 = vpop.f32.mrf.mxu0
        %v1188 = vadd.f32 %v1135, %v1187
        %v1189 = vpop.f32.mrf.mxu0
        %v1190 = vadd.f32 %v1137, %v1189
        %1191 = vdwg.mxu0
        %v1192 = vrot.slane %v964, 1
        %v1193 = vrot.slane %v965, 1
        %v1194 = vrot.slane %v966, 1
        %v1195 = vrot.slane %v967, 1
        %v1196 = vrot.slane %v968, 1
        %v1197 = vrot.slane %v969, 1
        %v1198 = vrot.slane %v970, 1
        %v1199 = vrot.slane %v971, 1
        %v1200 = vsel %vm453, %v1198, %v1199
        %v1201 = vsel %vm453, %v1197, %v1198
        %v1202 = vsel %vm453, %v1196, %v1197
        %v1203 = vsel %vm453, %v1195, %v1196
        %v1204 = vsel %vm453, %v1194, %v1195
        %v1205 = vsel %vm453, %v1193, %v1194
        %v1206 = vsel %vm453, %v1192, %v1193
        %v1207 = vsel %vm453, %v1199, %v1192
        %1208 = vset.pattern.permute.xlu0 2
        %1209 = vperm.xlu0 %1208, %v422
        %v1210 = vpop.permute.xlu0 %1209
        %1212 = vset.pattern.permute.xlu0 2
        %1213 = vperm.xlu0 %1212, %v423
        %v1214 = vpop.permute.xlu0 %1213
        %1216 = vset.pattern.permute.xlu0 2
        %1217 = vperm.xlu0 %1216, %v424
        %v1218 = vpop.permute.xlu0 %1217
        %1220 = vset.pattern.permute.xlu0 2
        %1221 = vperm.xlu0 %1220, %v425
        %v1222 = vpop.permute.xlu0 %1221
        %1224 = vset.pattern.permute.xlu0 2
        %1225 = vperm.xlu0 %1224, %v426
        %v1226 = vpop.permute.xlu0 %1225
        %1228 = vset.pattern.permute.xlu0 2
        %1229 = vperm.xlu0 %1228, %v427
        %v1230 = vpop.permute.xlu0 %1229
        %1232 = vset.pattern.permute.xlu0 2
        %1233 = vperm.xlu0 %1232, %v428
        %v1234 = vpop.permute.xlu0 %1233
        %1236 = vset.pattern.permute.xlu0 2
        %1237 = vperm.xlu0 %1236, %v429
        %v1238 = vpop.permute.xlu0 %1237
        %v1240 = vmul.f32 %v1207, %v1210
        %v1241 = vmul.f32 %v1206, %v1214
        %v1242 = vmul.f32 %v1205, %v1218
        %v1243 = vmul.f32 %v1204, %v1222
        %v1244 = vmul.f32 %v1203, %v1226
        %v1245 = vmul.f32 %v1202, %v1230
        %v1246 = vmul.f32 %v1201, %v1234
        %v1247 = vmul.f32 %v1200, %v1238
        %v1248 = vpack.c.bf16 %v1241, %v1240
        %v1249 = vpack.c.bf16 %v1243, %v1242
        %v1250 = vpack.c.bf16 %v1245, %v1244
        %v1251 = vpack.c.bf16 %v1247, %v1246
        %s1252 = scalar_lea.vmem %s4, 32
        %v1253 = vld [vmem:[%s1252] sm:$0xf]
        %v1254 = vld [vmem:[%s1252 + $0x4] sm:$0xf]
        %v1255 = vld [vmem:[%s1252 + $0x8] sm:$0xf]
        %v1256 = vld [vmem:[%s1252 + $0xc] sm:$0xf]
        %v1261 = vunpack.c.l.b16 %v1253
        %v1262 = vunpack.c.l.b16 %v1254
        %v1263 = vunpack.c.l.b16 %v1255
        %v1264 = vunpack.c.l.b16 %v1256
        %v1265 = vpack.c.b16 %v1262, %v1261
        %v1266 = vpack.c.b16 %v1264, %v1263
        %v1270 = vsel %vm803, %v1248, 0
        %v1273 = vsel %vm803, %v1249, 0
        %v1276 = vsel %vm803, %v1250, 0
        %v1279 = vsel %vm803, %v1251, 0
        %1281 = vmatpush.bf16.msra.mxu0 0
        %1282 = vmatpush.bf16.msra.mxu0 0
        %1283 = vmatpush.bf16.msra.mxu0 0
        %1284 = vmatpush.bf16.msra.mxu0 0
        %1285 = vmatpush.bf16.msra.mxu0 0
        %1286 = vmatpush.bf16.msra.mxu0 0
        %1287 = vmatpush.bf16.msra.mxu0 %v1266
        %1288 = vmatpush.bf16.msra.mxu0 %v1265
        %1289 = vmatmul.bf16.gmra.mxu0 %v1270
        %v1290 = vpop.f32.mrf.mxu0
        %v1291 = vadd.f32 0.0, %v1290
        %v1292 = vpop.f32.mrf.mxu0
        %v1293 = vadd.f32 0.0, %v1292
        %1294 = vmatmul.bf16.gmra.mxu0 %v1273
        %v1295 = vpop.f32.mrf.mxu0
        %v1296 = vadd.f32 0.0, %v1295
        %v1297 = vpop.f32.mrf.mxu0
        %v1298 = vadd.f32 0.0, %v1297
        %1299 = vmatmul.bf16.gmra.mxu0 %v1276
        %v1300 = vpop.f32.mrf.mxu0
        %v1301 = vadd.f32 0.0, %v1300
        %v1302 = vpop.f32.mrf.mxu0
        %v1303 = vadd.f32 0.0, %v1302
        %1304 = vmatmul.bf16.gmra.mxu0 %v1279
        %v1305 = vpop.f32.mrf.mxu0
        %v1306 = vadd.f32 0.0, %v1305
        %v1307 = vpop.f32.mrf.mxu0
        %v1308 = vadd.f32 0.0, %v1307
        %1309 = vdwg.mxu0
        %v1310 = vadd.f32 %v1173, %v1291
        %v1311 = vadd.f32 %v1175, %v1293
        %v1312 = vadd.f32 %v1178, %v1296
        %v1313 = vadd.f32 %v1180, %v1298
        %v1314 = vadd.f32 %v1183, %v1301
        %v1315 = vadd.f32 %v1185, %v1303
        %v1316 = vadd.f32 %v1188, %v1306
        %v1317 = vadd.f32 %v1190, %v1308
        %1318 = vset.pattern.permute.xlu0 3
        %1319 = vperm.xlu0 %1318, %v422
        %v1320 = vpop.permute.xlu0 %1319
        %1322 = vset.pattern.permute.xlu0 3
        %1323 = vperm.xlu0 %1322, %v423
        %v1324 = vpop.permute.xlu0 %1323
        %1326 = vset.pattern.permute.xlu0 3
        %1327 = vperm.xlu0 %1326, %v424
        %v1328 = vpop.permute.xlu0 %1327
        %1330 = vset.pattern.permute.xlu0 3
        %1331 = vperm.xlu0 %1330, %v425
        %v1332 = vpop.permute.xlu0 %1331
        %1334 = vset.pattern.permute.xlu0 3
        %1335 = vperm.xlu0 %1334, %v426
        %v1336 = vpop.permute.xlu0 %1335
        %1338 = vset.pattern.permute.xlu0 3
        %1339 = vperm.xlu0 %1338, %v427
        %v1340 = vpop.permute.xlu0 %1339
        %1342 = vset.pattern.permute.xlu0 3
        %1343 = vperm.xlu0 %1342, %v428
        %v1344 = vpop.permute.xlu0 %1343
        %1346 = vset.pattern.permute.xlu0 3
        %1347 = vperm.xlu0 %1346, %v429
        %v1348 = vpop.permute.xlu0 %1347
        %v1350 = vmul.f32 %v988, %v1320
        %v1351 = vmul.f32 %v987, %v1324
        %v1352 = vmul.f32 %v986, %v1328
        %v1353 = vmul.f32 %v985, %v1332
        %v1354 = vmul.f32 %v984, %v1336
        %v1355 = vmul.f32 %v983, %v1340
        %v1356 = vmul.f32 %v982, %v1344
        %v1357 = vmul.f32 %v981, %v1348
        %v1358 = vpack.c.bf16 %v1351, %v1350
        %v1359 = vpack.c.bf16 %v1353, %v1352
        %v1360 = vpack.c.bf16 %v1355, %v1354
        %v1361 = vpack.c.bf16 %v1357, %v1356
        %s1362 = scalar_lea.vmem %s4, 48
        %v1363 = vld [vmem:[%s1362] sm:$0xf]
        %v1364 = vld [vmem:[%s1362 + $0x4] sm:$0xf]
        %v1365 = vld [vmem:[%s1362 + $0x8] sm:$0xf]
        %v1366 = vld [vmem:[%s1362 + $0xc] sm:$0xf]
        %v1371 = vunpack.c.l.b16 %v1363
        %v1372 = vunpack.c.l.b16 %v1364
        %v1373 = vunpack.c.l.b16 %v1365
        %v1374 = vunpack.c.l.b16 %v1366
        %v1375 = vpack.c.b16 %v1372, %v1371
        %v1376 = vpack.c.b16 %v1374, %v1373
        %v1380 = vsel %vm803, %v1358, 0
        %v1383 = vsel %vm803, %v1359, 0
        %v1386 = vsel %vm803, %v1360, 0
        %v1389 = vsel %vm803, %v1361, 0
        %1391 = vmatpush.bf16.msra.mxu0 0
        %1392 = vmatpush.bf16.msra.mxu0 0
        %1393 = vmatpush.bf16.msra.mxu0 0
        %1394 = vmatpush.bf16.msra.mxu0 0
        %1395 = vmatpush.bf16.msra.mxu0 0
        %1396 = vmatpush.bf16.msra.mxu0 0
        %1397 = vmatpush.bf16.msra.mxu0 %v1376
        %1398 = vmatpush.bf16.msra.mxu0 %v1375
        %1399 = vmatmul.bf16.gmra.mxu0 %v1380
        %v1400 = vpop.f32.mrf.mxu0
        %v1401 = vadd.f32 0.0, %v1400
        %v1402 = vpop.f32.mrf.mxu0
        %v1403 = vadd.f32 0.0, %v1402
        %1404 = vmatmul.bf16.gmra.mxu0 %v1383
        %v1405 = vpop.f32.mrf.mxu0
        %v1406 = vadd.f32 0.0, %v1405
        %v1407 = vpop.f32.mrf.mxu0
        %v1408 = vadd.f32 0.0, %v1407
        %1409 = vmatmul.bf16.gmra.mxu0 %v1386
        %v1410 = vpop.f32.mrf.mxu0
        %v1411 = vadd.f32 0.0, %v1410
        %v1412 = vpop.f32.mrf.mxu0
        %v1413 = vadd.f32 0.0, %v1412
        %1414 = vmatmul.bf16.gmra.mxu0 %v1389
        %v1415 = vpop.f32.mrf.mxu0
        %v1416 = vadd.f32 0.0, %v1415
        %v1417 = vpop.f32.mrf.mxu0
        %v1418 = vadd.f32 0.0, %v1417
        %1419 = vdwg.mxu0
        %v1420 = vadd.f32 %v1310, %v1401
        %v1421 = vadd.f32 %v1311, %v1403
        %v1422 = vadd.f32 %v1312, %v1406
        %v1423 = vadd.f32 %v1313, %v1408
        %v1424 = vadd.f32 %v1314, %v1411
        %v1425 = vadd.f32 %v1315, %v1413
        %v1426 = vadd.f32 %v1316, %v1416
        %v1427 = vadd.f32 %v1317, %v1418
        %v1428 = vpack.c.bf16 %v965, %v964
        %v1429 = vpack.c.bf16 %v967, %v966
        %v1430 = vpack.c.bf16 %v969, %v968
        %v1431 = vpack.c.bf16 %v971, %v970
        %s1432 = scalar_lea.vmem %s4, 64
        %v1433 = vld [vmem:[%s1432] sm:$0xf]
        %v1434 = vld [vmem:[%s1432 + $0x4] sm:$0xf]
        %v1435 = vld [vmem:[%s1432 + $0x8] sm:$0xf]
        %v1436 = vld [vmem:[%s1432 + $0xc] sm:$0xf]
        %v1441 = vunpack.c.l.b16 %v1433
        %v1442 = vunpack.c.l.b16 %v1434
        %v1443 = vunpack.c.l.b16 %v1435
        %v1444 = vunpack.c.l.b16 %v1436
        %v1445 = vpack.c.b16 %v1442, %v1441
        %v1446 = vpack.c.b16 %v1444, %v1443
        %v1450 = vsel %vm803, %v1428, 0
        %v1453 = vsel %vm803, %v1429, 0
        %v1456 = vsel %vm803, %v1430, 0
        %v1459 = vsel %vm803, %v1431, 0
        %1461 = vmatpush.bf16.msra.mxu0 0
        %1462 = vmatpush.bf16.msra.mxu0 0
        %1463 = vmatpush.bf16.msra.mxu0 0
        %1464 = vmatpush.bf16.msra.mxu0 0
        %1465 = vmatpush.bf16.msra.mxu0 0
        %1466 = vmatpush.bf16.msra.mxu0 0
        %1467 = vmatpush.bf16.msra.mxu0 %v1446
        %1468 = vmatpush.bf16.msra.mxu0 %v1445
        %1469 = vmatmul.bf16.gmra.mxu0 %v1450
        %v1470 = vpop.f32.mrf.mxu0
        %v1471 = vadd.f32 0.0, %v1470
        %v1472 = vpop.f32.mrf.mxu0
        %v1473 = vadd.f32 0.0, %v1472
        %1474 = vmatmul.bf16.gmra.mxu0 %v1453
        %v1475 = vpop.f32.mrf.mxu0
        %v1476 = vadd.f32 0.0, %v1475
        %v1477 = vpop.f32.mrf.mxu0
        %v1478 = vadd.f32 0.0, %v1477
        %1479 = vmatmul.bf16.gmra.mxu0 %v1456
        %v1480 = vpop.f32.mrf.mxu0
        %v1481 = vadd.f32 0.0, %v1480
        %v1482 = vpop.f32.mrf.mxu0
        %v1483 = vadd.f32 0.0, %v1482
        %1484 = vmatmul.bf16.gmra.mxu0 %v1459
        %v1485 = vpop.f32.mrf.mxu0
        %v1486 = vadd.f32 0.0, %v1485
        %v1487 = vpop.f32.mrf.mxu0
        %v1488 = vadd.f32 0.0, %v1487
        %1489 = vdwg.mxu0
        %v1490 = vadd.f32 %v1420, %v1471
        %v1491 = vadd.f32 %v1421, %v1473
        %v1492 = vadd.f32 %v1422, %v1476
        %v1493 = vadd.f32 %v1423, %v1478
        %v1494 = vadd.f32 %v1424, %v1481
        %v1495 = vadd.f32 %v1425, %v1483
        %v1496 = vadd.f32 %v1426, %v1486
        %v1497 = vadd.f32 %v1427, %v1488
        %v1498 = vmul.f32 %v1206, %v465
        %v1499 = vmul.f32 %v1205, %v470
        %v1500 = vmul.f32 %v1204, %v475
        %v1501 = vmul.f32 %v1203, %v480
        %v1502 = vmul.f32 %v1202, %v485
        %v1503 = vmul.f32 %v1201, %v490
        %v1504 = vmul.f32 %v1200, %v495
        %v1505 = vmul.f32 %v1207, %v500
        %v1506 = vpack.c.bf16 %v1499, %v1498
        %v1507 = vpack.c.bf16 %v1501, %v1500
        %v1508 = vpack.c.bf16 %v1503, %v1502
        %v1509 = vpack.c.bf16 %v1505, %v1504
        %s1510 = scalar_lea.vmem %s4, 80
        %v1511 = vld [vmem:[%s1510] sm:$0xf]
        %v1512 = vld [vmem:[%s1510 + $0x4] sm:$0xf]
        %v1513 = vld [vmem:[%s1510 + $0x8] sm:$0xf]
        %v1514 = vld [vmem:[%s1510 + $0xc] sm:$0xf]
        %v1519 = vunpack.c.l.b16 %v1511
        %v1520 = vunpack.c.l.b16 %v1512
        %v1521 = vunpack.c.l.b16 %v1513
        %v1522 = vunpack.c.l.b16 %v1514
        %v1523 = vpack.c.b16 %v1520, %v1519
        %v1524 = vpack.c.b16 %v1522, %v1521
        %v1528 = vsel %vm803, %v1506, 0
        %v1531 = vsel %vm803, %v1507, 0
        %v1534 = vsel %vm803, %v1508, 0
        %v1537 = vsel %vm803, %v1509, 0
        %1539 = vmatpush.bf16.msra.mxu0 0
        %1540 = vmatpush.bf16.msra.mxu0 0
        %1541 = vmatpush.bf16.msra.mxu0 0
        %1542 = vmatpush.bf16.msra.mxu0 0
        %1543 = vmatpush.bf16.msra.mxu0 0
        %1544 = vmatpush.bf16.msra.mxu0 0
        %1545 = vmatpush.bf16.msra.mxu0 %v1524
        %1546 = vmatpush.bf16.msra.mxu0 %v1523
        %1547 = vmatmul.bf16.gmra.mxu0 %v1528
        %v1548 = vpop.f32.mrf.mxu0
        %v1549 = vadd.f32 0.0, %v1548
        %v1550 = vpop.f32.mrf.mxu0
        %v1551 = vadd.f32 0.0, %v1550
        %1552 = vmatmul.bf16.gmra.mxu0 %v1531
        %v1553 = vpop.f32.mrf.mxu0
        %v1554 = vadd.f32 0.0, %v1553
        %v1555 = vpop.f32.mrf.mxu0
        %v1556 = vadd.f32 0.0, %v1555
        %1557 = vmatmul.bf16.gmra.mxu0 %v1534
        %v1558 = vpop.f32.mrf.mxu0
        %v1559 = vadd.f32 0.0, %v1558
        %v1560 = vpop.f32.mrf.mxu0
        %v1561 = vadd.f32 0.0, %v1560
        %1562 = vmatmul.bf16.gmra.mxu0 %v1537
        %v1563 = vpop.f32.mrf.mxu0
        %v1564 = vadd.f32 0.0, %v1563
        %v1565 = vpop.f32.mrf.mxu0
        %v1566 = vadd.f32 0.0, %v1565
        %1567 = vdwg.mxu0
        %v1568 = vadd.f32 %v1490, %v1549
        %v1569 = vadd.f32 %v1491, %v1551
        %v1570 = vadd.f32 %v1492, %v1554
        %v1571 = vadd.f32 %v1493, %v1556
        %v1572 = vadd.f32 %v1494, %v1559
        %v1573 = vadd.f32 %v1495, %v1561
        %v1574 = vadd.f32 %v1496, %v1564
        %v1575 = vadd.f32 %v1497, %v1566
        %1576 = vset.pattern.permute.xlu0 6
        %1577 = vperm.xlu0 %1576, %v422
        %v1578 = vpop.permute.xlu0 %1577
        %1580 = vset.pattern.permute.xlu0 6
        %1581 = vperm.xlu0 %1580, %v423
        %v1582 = vpop.permute.xlu0 %1581
        %1584 = vset.pattern.permute.xlu0 6
        %1585 = vperm.xlu0 %1584, %v424
        %v1586 = vpop.permute.xlu0 %1585
        %1588 = vset.pattern.permute.xlu0 6
        %1589 = vperm.xlu0 %1588, %v425
        %v1590 = vpop.permute.xlu0 %1589
        %1592 = vset.pattern.permute.xlu0 6
        %1593 = vperm.xlu0 %1592, %v426
        %v1594 = vpop.permute.xlu0 %1593
        %1596 = vset.pattern.permute.xlu0 6
        %1597 = vperm.xlu0 %1596, %v427
        %v1598 = vpop.permute.xlu0 %1597
        %1600 = vset.pattern.permute.xlu0 6
        %1601 = vperm.xlu0 %1600, %v428
        %v1602 = vpop.permute.xlu0 %1601
        %1604 = vset.pattern.permute.xlu0 6
        %1605 = vperm.xlu0 %1604, %v429
        %v1606 = vpop.permute.xlu0 %1605
        %v1608 = vmul.f32 %v987, %v1578
        %v1609 = vmul.f32 %v986, %v1582
        %v1610 = vmul.f32 %v985, %v1586
        %v1611 = vmul.f32 %v984, %v1590
        %v1612 = vmul.f32 %v983, %v1594
        %v1613 = vmul.f32 %v982, %v1598
        %v1614 = vmul.f32 %v981, %v1602
        %v1615 = vmul.f32 %v988, %v1606
        %v1616 = vpack.c.bf16 %v1609, %v1608
        %v1617 = vpack.c.bf16 %v1611, %v1610
        %v1618 = vpack.c.bf16 %v1613, %v1612
        %v1619 = vpack.c.bf16 %v1615, %v1614
        %s1620 = scalar_lea.vmem %s4, 96
        %v1621 = vld [vmem:[%s1620] sm:$0xf]
        %v1622 = vld [vmem:[%s1620 + $0x4] sm:$0xf]
        %v1623 = vld [vmem:[%s1620 + $0x8] sm:$0xf]
        %v1624 = vld [vmem:[%s1620 + $0xc] sm:$0xf]
        %v1629 = vunpack.c.l.b16 %v1621
        %v1630 = vunpack.c.l.b16 %v1622
        %v1631 = vunpack.c.l.b16 %v1623
        %v1632 = vunpack.c.l.b16 %v1624
        %v1633 = vpack.c.b16 %v1630, %v1629
        %v1634 = vpack.c.b16 %v1632, %v1631
        %v1638 = vsel %vm803, %v1616, 0
        %v1641 = vsel %vm803, %v1617, 0
        %v1644 = vsel %vm803, %v1618, 0
        %v1647 = vsel %vm803, %v1619, 0
        %1649 = vmatpush.bf16.msra.mxu0 0
        %1650 = vmatpush.bf16.msra.mxu0 0
        %1651 = vmatpush.bf16.msra.mxu0 0
        %1652 = vmatpush.bf16.msra.mxu0 0
        %1653 = vmatpush.bf16.msra.mxu0 0
        %1654 = vmatpush.bf16.msra.mxu0 0
        %1655 = vmatpush.bf16.msra.mxu0 %v1634
        %1656 = vmatpush.bf16.msra.mxu0 %v1633
        %1657 = vmatmul.bf16.gmra.mxu0 %v1638
        %v1658 = vpop.f32.mrf.mxu0
        %v1659 = vadd.f32 0.0, %v1658
        %v1660 = vpop.f32.mrf.mxu0
        %v1661 = vadd.f32 0.0, %v1660
        %1662 = vmatmul.bf16.gmra.mxu0 %v1641
        %v1663 = vpop.f32.mrf.mxu0
        %v1664 = vadd.f32 0.0, %v1663
        %v1665 = vpop.f32.mrf.mxu0
        %v1666 = vadd.f32 0.0, %v1665
        %1667 = vmatmul.bf16.gmra.mxu0 %v1644
        %v1668 = vpop.f32.mrf.mxu0
        %v1669 = vadd.f32 0.0, %v1668
        %v1670 = vpop.f32.mrf.mxu0
        %v1671 = vadd.f32 0.0, %v1670
        %1672 = vmatmul.bf16.gmra.mxu0 %v1647
        %v1673 = vpop.f32.mrf.mxu0
        %v1674 = vadd.f32 0.0, %v1673
        %v1675 = vpop.f32.mrf.mxu0
        %v1676 = vadd.f32 0.0, %v1675
        %1677 = vdwg.mxu0
        %v1678 = vadd.f32 %v1568, %v1659
        %v1679 = vadd.f32 %v1569, %v1661
        %v1680 = vadd.f32 %v1570, %v1664
        %v1681 = vadd.f32 %v1571, %v1666
        %v1682 = vadd.f32 %v1572, %v1669
        %v1683 = vadd.f32 %v1573, %v1671
        %v1684 = vadd.f32 %v1574, %v1674
        %v1685 = vadd.f32 %v1575, %v1676
        %v1686 = vmul.f32 %v965, %v608
        %v1687 = vmul.f32 %v966, %v612
        %v1688 = vmul.f32 %v967, %v616
        %v1689 = vmul.f32 %v968, %v620
        %v1690 = vmul.f32 %v969, %v624
        %v1691 = vmul.f32 %v970, %v628
        %v1692 = vmul.f32 %v971, %v632
        %v1693 = vmul.f32 %v964, %v636
        %v1694 = vpack.c.bf16 %v1687, %v1686
        %v1695 = vpack.c.bf16 %v1689, %v1688
        %v1696 = vpack.c.bf16 %v1691, %v1690
        %v1697 = vpack.c.bf16 %v1693, %v1692
        %s1698 = scalar_lea.vmem %s4, 112
        %v1699 = vld [vmem:[%s1698] sm:$0xf]
        %v1700 = vld [vmem:[%s1698 + $0x4] sm:$0xf]
        %v1701 = vld [vmem:[%s1698 + $0x8] sm:$0xf]
        %v1702 = vld [vmem:[%s1698 + $0xc] sm:$0xf]
        %v1707 = vunpack.c.l.b16 %v1699
        %v1708 = vunpack.c.l.b16 %v1700
        %v1709 = vunpack.c.l.b16 %v1701
        %v1710 = vunpack.c.l.b16 %v1702
        %v1711 = vpack.c.b16 %v1708, %v1707
        %v1712 = vpack.c.b16 %v1710, %v1709
        %v1716 = vsel %vm803, %v1694, 0
        %v1719 = vsel %vm803, %v1695, 0
        %v1722 = vsel %vm803, %v1696, 0
        %v1725 = vsel %vm803, %v1697, 0
        %1727 = vmatpush.bf16.msra.mxu0 0
        %1728 = vmatpush.bf16.msra.mxu0 0
        %1729 = vmatpush.bf16.msra.mxu0 0
        %1730 = vmatpush.bf16.msra.mxu0 0
        %1731 = vmatpush.bf16.msra.mxu0 0
        %1732 = vmatpush.bf16.msra.mxu0 0
        %1733 = vmatpush.bf16.msra.mxu0 %v1712
        %1734 = vmatpush.bf16.msra.mxu0 %v1711
        %1735 = vmatmul.bf16.gmra.mxu0 %v1716
        %v1736 = vpop.f32.mrf.mxu0
        %v1737 = vadd.f32 0.0, %v1736
        %v1738 = vpop.f32.mrf.mxu0
        %v1739 = vadd.f32 0.0, %v1738
        %1740 = vmatmul.bf16.gmra.mxu0 %v1719
        %v1741 = vpop.f32.mrf.mxu0
        %v1742 = vadd.f32 0.0, %v1741
        %v1743 = vpop.f32.mrf.mxu0
        %v1744 = vadd.f32 0.0, %v1743
        %1745 = vmatmul.bf16.gmra.mxu0 %v1722
        %v1746 = vpop.f32.mrf.mxu0
        %v1747 = vadd.f32 0.0, %v1746
        %v1748 = vpop.f32.mrf.mxu0
        %v1749 = vadd.f32 0.0, %v1748
        %1750 = vmatmul.bf16.gmra.mxu0 %v1725
        %v1751 = vpop.f32.mrf.mxu0
        %v1752 = vadd.f32 0.0, %v1751
        %v1753 = vpop.f32.mrf.mxu0
        %v1754 = vadd.f32 0.0, %v1753
        %1755 = vdwg.mxu0
        %v1756 = vadd.f32 %v1678, %v1737
        %v1757 = vadd.f32 %v1679, %v1739
        %v1758 = vadd.f32 %v1680, %v1742
        %v1759 = vadd.f32 %v1681, %v1744
        %v1760 = vadd.f32 %v1682, %v1747
        %v1761 = vadd.f32 %v1683, %v1749
        %v1762 = vadd.f32 %v1684, %v1752
        %v1763 = vadd.f32 %v1685, %v1754
        %v1764 = vmul.f32 %v1205, %v706
        %v1765 = vmul.f32 %v1204, %v710
        %v1766 = vmul.f32 %v1203, %v714
        %v1767 = vmul.f32 %v1202, %v718
        %v1768 = vmul.f32 %v1201, %v722
        %v1769 = vmul.f32 %v1200, %v726
        %v1770 = vmul.f32 %v1207, %v730
        %v1771 = vmul.f32 %v1206, %v734
        %v1772 = vpack.c.bf16 %v1765, %v1764
        %v1773 = vpack.c.bf16 %v1767, %v1766
        %v1774 = vpack.c.bf16 %v1769, %v1768
        %v1775 = vpack.c.bf16 %v1771, %v1770
        %s1776 = scalar_lea.vmem %s4, 128
        %v1777 = vld [vmem:[%s1776] sm:$0xf]
        %v1778 = vld [vmem:[%s1776 + $0x4] sm:$0xf]
        %v1779 = vld [vmem:[%s1776 + $0x8] sm:$0xf]
        %v1780 = vld [vmem:[%s1776 + $0xc] sm:$0xf]
        %v1785 = vunpack.c.l.b16 %v1777
        %v1786 = vunpack.c.l.b16 %v1778
        %v1787 = vunpack.c.l.b16 %v1779
        %v1788 = vunpack.c.l.b16 %v1780
        %v1789 = vpack.c.b16 %v1786, %v1785
        %v1790 = vpack.c.b16 %v1788, %v1787
        %v1794 = vsel %vm803, %v1772, 0
        %v1797 = vsel %vm803, %v1773, 0
        %v1800 = vsel %vm803, %v1774, 0
        %v1803 = vsel %vm803, %v1775, 0
        %1805 = vmatpush.bf16.msra.mxu0 0
        %1806 = vmatpush.bf16.msra.mxu0 0
        %1807 = vmatpush.bf16.msra.mxu0 0
        %1808 = vmatpush.bf16.msra.mxu0 0
        %1809 = vmatpush.bf16.msra.mxu0 0
        %1810 = vmatpush.bf16.msra.mxu0 0
        %1811 = vmatpush.bf16.msra.mxu0 %v1790
        %1812 = vmatpush.bf16.msra.mxu0 %v1789
        %1813 = vmatmul.bf16.gmra.mxu0 %v1794
        %v1814 = vpop.f32.mrf.mxu0
        %v1815 = vadd.f32 0.0, %v1814
        %v1816 = vpop.f32.mrf.mxu0
        %v1817 = vadd.f32 0.0, %v1816
        %1818 = vmatmul.bf16.gmra.mxu0 %v1797
        %v1819 = vpop.f32.mrf.mxu0
        %v1820 = vadd.f32 0.0, %v1819
        %v1821 = vpop.f32.mrf.mxu0
        %v1822 = vadd.f32 0.0, %v1821
        %1823 = vmatmul.bf16.gmra.mxu0 %v1800
        %v1824 = vpop.f32.mrf.mxu0
        %v1825 = vadd.f32 0.0, %v1824
        %v1826 = vpop.f32.mrf.mxu0
        %v1827 = vadd.f32 0.0, %v1826
        %1828 = vmatmul.bf16.gmra.mxu0 %v1803
        %v1829 = vpop.f32.mrf.mxu0
        %v1830 = vadd.f32 0.0, %v1829
        %v1831 = vpop.f32.mrf.mxu0
        %v1832 = vadd.f32 0.0, %v1831
        %1833 = vdwg.mxu0
        %v1834 = vadd.f32 %v1756, %v1815
        %v1835 = vadd.f32 %v1757, %v1817
        %v1836 = vadd.f32 %v1758, %v1820
        %v1837 = vadd.f32 %v1759, %v1822
        %v1838 = vadd.f32 %v1760, %v1825
        %v1839 = vadd.f32 %v1761, %v1827
        %v1840 = vadd.f32 %v1762, %v1830
        %v1841 = vadd.f32 %v1763, %v1832
        %v1842 = vrot.slane %v956, 7
        %v1843 = vrot.slane %v957, 7
        %v1844 = vrot.slane %v958, 7
        %v1845 = vrot.slane %v959, 7
        %v1846 = vrot.slane %v960, 7
        %v1847 = vrot.slane %v961, 7
        %v1848 = vrot.slane %v962, 7
        %v1849 = vrot.slane %v963, 7
        %v1850 = vsel %vm980, %v1848, %v1849
        %v1851 = vsel %vm980, %v1847, %v1848
        %v1852 = vsel %vm980, %v1846, %v1847
        %v1853 = vsel %vm980, %v1845, %v1846
        %v1854 = vsel %vm980, %v1844, %v1845
        %v1855 = vsel %vm980, %v1843, %v1844
        %v1856 = vsel %vm980, %v1842, %v1843
        %v1857 = vsel %vm980, %v1849, %v1842
        %v1858 = vmul.f32 %v1850, %v991
        %v1859 = vmul.f32 %v1857, %v995
        %v1860 = vmul.f32 %v1856, %v999
        %v1861 = vmul.f32 %v1855, %v1003
        %v1862 = vmul.f32 %v1854, %v1007
        %v1863 = vmul.f32 %v1853, %v1011
        %v1864 = vmul.f32 %v1852, %v1015
        %v1865 = vmul.f32 %v1851, %v1019
        %v1866 = vpack.c.bf16 %v1859, %v1858
        %v1867 = vpack.c.bf16 %v1861, %v1860
        %v1868 = vpack.c.bf16 %v1863, %v1862
        %v1869 = vpack.c.bf16 %v1865, %v1864
        %v1870 = vld [vmem:[%s5] sm:$0xf]
        %v1871 = vld [vmem:[%s5 + $0x4] sm:$0xf]
        %v1872 = vld [vmem:[%s5 + $0x8] sm:$0xf]
        %v1873 = vld [vmem:[%s5 + $0xc] sm:$0xf]
        %v1878 = vunpack.c.l.b16 %v1870
        %v1879 = vunpack.c.l.b16 %v1871
        %v1880 = vunpack.c.l.b16 %v1872
        %v1881 = vunpack.c.l.b16 %v1873
        %v1882 = vpack.c.b16 %v1879, %v1878
        %v1883 = vpack.c.b16 %v1881, %v1880
        %v1887 = vsel %vm803, %v1866, 0
        %v1890 = vsel %vm803, %v1867, 0
        %v1893 = vsel %vm803, %v1868, 0
        %v1896 = vsel %vm803, %v1869, 0
        %1898 = vmatpush.bf16.msra.mxu0 0
        %1899 = vmatpush.bf16.msra.mxu0 0
        %1900 = vmatpush.bf16.msra.mxu0 0
        %1901 = vmatpush.bf16.msra.mxu0 0
        %1902 = vmatpush.bf16.msra.mxu0 0
        %1903 = vmatpush.bf16.msra.mxu0 0
        %1904 = vmatpush.bf16.msra.mxu0 %v1883
        %1905 = vmatpush.bf16.msra.mxu0 %v1882
        %1906 = vmatmul.bf16.gmra.mxu0 %v1887
        %v1907 = vpop.f32.mrf.mxu0
        %v1908 = vadd.f32 0.0, %v1907
        %v1909 = vpop.f32.mrf.mxu0
        %v1910 = vadd.f32 0.0, %v1909
        %1911 = vmatmul.bf16.gmra.mxu0 %v1890
        %v1912 = vpop.f32.mrf.mxu0
        %v1913 = vadd.f32 0.0, %v1912
        %v1914 = vpop.f32.mrf.mxu0
        %v1915 = vadd.f32 0.0, %v1914
        %1916 = vmatmul.bf16.gmra.mxu0 %v1893
        %v1917 = vpop.f32.mrf.mxu0
        %v1918 = vadd.f32 0.0, %v1917
        %v1919 = vpop.f32.mrf.mxu0
        %v1920 = vadd.f32 0.0, %v1919
        %1921 = vmatmul.bf16.gmra.mxu0 %v1896
        %v1922 = vpop.f32.mrf.mxu0
        %v1923 = vadd.f32 0.0, %v1922
        %v1924 = vpop.f32.mrf.mxu0
        %v1925 = vadd.f32 0.0, %v1924
        %1926 = vdwg.mxu0
        %v1927 = vadd.f32 %v1834, %v1908
        %v1928 = vadd.f32 %v1835, %v1910
        %v1929 = vadd.f32 %v1836, %v1913
        %v1930 = vadd.f32 %v1837, %v1915
        %v1931 = vadd.f32 %v1838, %v1918
        %v1932 = vadd.f32 %v1839, %v1920
        %v1933 = vadd.f32 %v1840, %v1923
        %v1934 = vadd.f32 %v1841, %v1925
        %v1935 = vmul.f32 %v963, %v1039
        %v1936 = vmul.f32 %v956, %v1043
        %v1937 = vmul.f32 %v957, %v1047
        %v1938 = vmul.f32 %v958, %v1051
        %v1939 = vmul.f32 %v959, %v1055
        %v1940 = vmul.f32 %v960, %v1059
        %v1941 = vmul.f32 %v961, %v1063
        %v1942 = vmul.f32 %v962, %v1067
        %v1943 = vpack.c.bf16 %v1936, %v1935
        %v1944 = vpack.c.bf16 %v1938, %v1937
        %v1945 = vpack.c.bf16 %v1940, %v1939
        %v1946 = vpack.c.bf16 %v1942, %v1941
        %s1947 = scalar_lea.vmem %s5, 16
        %v1948 = vld [vmem:[%s1947] sm:$0xf]
        %v1949 = vld [vmem:[%s1947 + $0x4] sm:$0xf]
        %v1950 = vld [vmem:[%s1947 + $0x8] sm:$0xf]
        %v1951 = vld [vmem:[%s1947 + $0xc] sm:$0xf]
        %v1956 = vunpack.c.l.b16 %v1948
        %v1957 = vunpack.c.l.b16 %v1949
        %v1958 = vunpack.c.l.b16 %v1950
        %v1959 = vunpack.c.l.b16 %v1951
        %v1960 = vpack.c.b16 %v1957, %v1956
        %v1961 = vpack.c.b16 %v1959, %v1958
        %v1965 = vsel %vm803, %v1943, 0
        %v1968 = vsel %vm803, %v1944, 0
        %v1971 = vsel %vm803, %v1945, 0
        %v1974 = vsel %vm803, %v1946, 0
        %1976 = vmatpush.bf16.msra.mxu0 0
        %1977 = vmatpush.bf16.msra.mxu0 0
        %1978 = vmatpush.bf16.msra.mxu0 0
        %1979 = vmatpush.bf16.msra.mxu0 0
        %1980 = vmatpush.bf16.msra.mxu0 0
        %1981 = vmatpush.bf16.msra.mxu0 0
        %1982 = vmatpush.bf16.msra.mxu0 %v1961
        %1983 = vmatpush.bf16.msra.mxu0 %v1960
        %1984 = vmatmul.bf16.gmra.mxu0 %v1965
        %v1985 = vpop.f32.mrf.mxu0
        %v1986 = vadd.f32 0.0, %v1985
        %v1987 = vpop.f32.mrf.mxu0
        %v1988 = vadd.f32 0.0, %v1987
        %1989 = vmatmul.bf16.gmra.mxu0 %v1968
        %v1990 = vpop.f32.mrf.mxu0
        %v1991 = vadd.f32 0.0, %v1990
        %v1992 = vpop.f32.mrf.mxu0
        %v1993 = vadd.f32 0.0, %v1992
        %1994 = vmatmul.bf16.gmra.mxu0 %v1971
        %v1995 = vpop.f32.mrf.mxu0
        %v1996 = vadd.f32 0.0, %v1995
        %v1997 = vpop.f32.mrf.mxu0
        %v1998 = vadd.f32 0.0, %v1997
        %1999 = vmatmul.bf16.gmra.mxu0 %v1974
        %v2000 = vpop.f32.mrf.mxu0
        %v2001 = vadd.f32 0.0, %v2000
        %v2002 = vpop.f32.mrf.mxu0
        %v2003 = vadd.f32 0.0, %v2002
        %2004 = vdwg.mxu0
        %v2005 = vadd.f32 %v1927, %v1986
        %v2006 = vadd.f32 %v1928, %v1988
        %v2007 = vadd.f32 %v1929, %v1991
        %v2008 = vadd.f32 %v1930, %v1993
        %v2009 = vadd.f32 %v1931, %v1996
        %v2010 = vadd.f32 %v1932, %v1998
        %v2011 = vadd.f32 %v1933, %v2001
        %v2012 = vadd.f32 %v1934, %v2003
        %v2013 = vrot.slane %v956, 1
        %v2014 = vrot.slane %v957, 1
        %v2015 = vrot.slane %v958, 1
        %v2016 = vrot.slane %v959, 1
        %v2017 = vrot.slane %v960, 1
        %v2018 = vrot.slane %v961, 1
        %v2019 = vrot.slane %v962, 1
        %v2020 = vrot.slane %v963, 1
        %v2021 = vsel %vm453, %v2019, %v2020
        %v2022 = vsel %vm453, %v2018, %v2019
        %v2023 = vsel %vm453, %v2017, %v2018
        %v2024 = vsel %vm453, %v2016, %v2017
        %v2025 = vsel %vm453, %v2015, %v2016
        %v2026 = vsel %vm453, %v2014, %v2015
        %v2027 = vsel %vm453, %v2013, %v2014
        %v2028 = vsel %vm453, %v2020, %v2013
        %v2029 = vmul.f32 %v2028, %v1210
        %v2030 = vmul.f32 %v2027, %v1214
        %v2031 = vmul.f32 %v2026, %v1218
        %v2032 = vmul.f32 %v2025, %v1222
        %v2033 = vmul.f32 %v2024, %v1226
        %v2034 = vmul.f32 %v2023, %v1230
        %v2035 = vmul.f32 %v2022, %v1234
        %v2036 = vmul.f32 %v2021, %v1238
        %v2037 = vpack.c.bf16 %v2030, %v2029
        %v2038 = vpack.c.bf16 %v2032, %v2031
        %v2039 = vpack.c.bf16 %v2034, %v2033
        %v2040 = vpack.c.bf16 %v2036, %v2035
        %s2041 = scalar_lea.vmem %s5, 32
        %v2042 = vld [vmem:[%s2041] sm:$0xf]
        %v2043 = vld [vmem:[%s2041 + $0x4] sm:$0xf]
        %v2044 = vld [vmem:[%s2041 + $0x8] sm:$0xf]
        %v2045 = vld [vmem:[%s2041 + $0xc] sm:$0xf]
        %v2050 = vunpack.c.l.b16 %v2042
        %v2051 = vunpack.c.l.b16 %v2043
        %v2052 = vunpack.c.l.b16 %v2044
        %v2053 = vunpack.c.l.b16 %v2045
        %v2054 = vpack.c.b16 %v2051, %v2050
        %v2055 = vpack.c.b16 %v2053, %v2052
        %v2059 = vsel %vm803, %v2037, 0
        %v2062 = vsel %vm803, %v2038, 0
        %v2065 = vsel %vm803, %v2039, 0
        %v2068 = vsel %vm803, %v2040, 0
        %2070 = vmatpush.bf16.msra.mxu0 0
        %2071 = vmatpush.bf16.msra.mxu0 0
        %2072 = vmatpush.bf16.msra.mxu0 0
        %2073 = vmatpush.bf16.msra.mxu0 0
        %2074 = vmatpush.bf16.msra.mxu0 0
        %2075 = vmatpush.bf16.msra.mxu0 0
        %2076 = vmatpush.bf16.msra.mxu0 %v2055
        %2077 = vmatpush.bf16.msra.mxu0 %v2054
        %2078 = vmatmul.bf16.gmra.mxu0 %v2059
        %v2079 = vpop.f32.mrf.mxu0
        %v2080 = vadd.f32 0.0, %v2079
        %v2081 = vpop.f32.mrf.mxu0
        %v2082 = vadd.f32 0.0, %v2081
        %2083 = vmatmul.bf16.gmra.mxu0 %v2062
        %v2084 = vpop.f32.mrf.mxu0
        %v2085 = vadd.f32 0.0, %v2084
        %v2086 = vpop.f32.mrf.mxu0
        %v2087 = vadd.f32 0.0, %v2086
        %2088 = vmatmul.bf16.gmra.mxu0 %v2065
        %v2089 = vpop.f32.mrf.mxu0
        %v2090 = vadd.f32 0.0, %v2089
        %v2091 = vpop.f32.mrf.mxu0
        %v2092 = vadd.f32 0.0, %v2091
        %2093 = vmatmul.bf16.gmra.mxu0 %v2068
        %v2094 = vpop.f32.mrf.mxu0
        %v2095 = vadd.f32 0.0, %v2094
        %v2096 = vpop.f32.mrf.mxu0
        %v2097 = vadd.f32 0.0, %v2096
        %2098 = vdwg.mxu0
        %v2099 = vadd.f32 %v2005, %v2080
        %v2100 = vadd.f32 %v2006, %v2082
        %v2101 = vadd.f32 %v2007, %v2085
        %v2102 = vadd.f32 %v2008, %v2087
        %v2103 = vadd.f32 %v2009, %v2090
        %v2104 = vadd.f32 %v2010, %v2092
        %v2105 = vadd.f32 %v2011, %v2095
        %v2106 = vadd.f32 %v2012, %v2097
        %v2107 = vmul.f32 %v1857, %v1320
        %v2108 = vmul.f32 %v1856, %v1324
        %v2109 = vmul.f32 %v1855, %v1328
        %v2110 = vmul.f32 %v1854, %v1332
        %v2111 = vmul.f32 %v1853, %v1336
        %v2112 = vmul.f32 %v1852, %v1340
        %v2113 = vmul.f32 %v1851, %v1344
        %v2114 = vmul.f32 %v1850, %v1348
        %v2115 = vpack.c.bf16 %v2108, %v2107
        %v2116 = vpack.c.bf16 %v2110, %v2109
        %v2117 = vpack.c.bf16 %v2112, %v2111
        %v2118 = vpack.c.bf16 %v2114, %v2113
        %s2119 = scalar_lea.vmem %s5, 48
        %v2120 = vld [vmem:[%s2119] sm:$0xf]
        %v2121 = vld [vmem:[%s2119 + $0x4] sm:$0xf]
        %v2122 = vld [vmem:[%s2119 + $0x8] sm:$0xf]
        %v2123 = vld [vmem:[%s2119 + $0xc] sm:$0xf]
        %v2128 = vunpack.c.l.b16 %v2120
        %v2129 = vunpack.c.l.b16 %v2121
        %v2130 = vunpack.c.l.b16 %v2122
        %v2131 = vunpack.c.l.b16 %v2123
        %v2132 = vpack.c.b16 %v2129, %v2128
        %v2133 = vpack.c.b16 %v2131, %v2130
        %v2137 = vsel %vm803, %v2115, 0
        %v2140 = vsel %vm803, %v2116, 0
        %v2143 = vsel %vm803, %v2117, 0
        %v2146 = vsel %vm803, %v2118, 0
        %2148 = vmatpush.bf16.msra.mxu0 0
        %2149 = vmatpush.bf16.msra.mxu0 0
        %2150 = vmatpush.bf16.msra.mxu0 0
        %2151 = vmatpush.bf16.msra.mxu0 0
        %2152 = vmatpush.bf16.msra.mxu0 0
        %2153 = vmatpush.bf16.msra.mxu0 0
        %2154 = vmatpush.bf16.msra.mxu0 %v2133
        %2155 = vmatpush.bf16.msra.mxu0 %v2132
        %2156 = vmatmul.bf16.gmra.mxu0 %v2137
        %v2157 = vpop.f32.mrf.mxu0
        %v2158 = vadd.f32 0.0, %v2157
        %v2159 = vpop.f32.mrf.mxu0
        %v2160 = vadd.f32 0.0, %v2159
        %2161 = vmatmul.bf16.gmra.mxu0 %v2140
        %v2162 = vpop.f32.mrf.mxu0
        %v2163 = vadd.f32 0.0, %v2162
        %v2164 = vpop.f32.mrf.mxu0
        %v2165 = vadd.f32 0.0, %v2164
        %2166 = vmatmul.bf16.gmra.mxu0 %v2143
        %v2167 = vpop.f32.mrf.mxu0
        %v2168 = vadd.f32 0.0, %v2167
        %v2169 = vpop.f32.mrf.mxu0
        %v2170 = vadd.f32 0.0, %v2169
        %2171 = vmatmul.bf16.gmra.mxu0 %v2146
        %v2172 = vpop.f32.mrf.mxu0
        %v2173 = vadd.f32 0.0, %v2172
        %v2174 = vpop.f32.mrf.mxu0
        %v2175 = vadd.f32 0.0, %v2174
        %2176 = vdwg.mxu0
        %v2177 = vadd.f32 %v2099, %v2158
        %v2178 = vadd.f32 %v2100, %v2160
        %v2179 = vadd.f32 %v2101, %v2163
        %v2180 = vadd.f32 %v2102, %v2165
        %v2181 = vadd.f32 %v2103, %v2168
        %v2182 = vadd.f32 %v2104, %v2170
        %v2183 = vadd.f32 %v2105, %v2173
        %v2184 = vadd.f32 %v2106, %v2175
        %v2185 = vpack.c.bf16 %v957, %v956
        %v2186 = vpack.c.bf16 %v959, %v958
        %v2187 = vpack.c.bf16 %v961, %v960
        %v2188 = vpack.c.bf16 %v963, %v962
        %s2189 = scalar_lea.vmem %s5, 64
        %v2190 = vld [vmem:[%s2189] sm:$0xf]
        %v2191 = vld [vmem:[%s2189 + $0x4] sm:$0xf]
        %v2192 = vld [vmem:[%s2189 + $0x8] sm:$0xf]
        %v2193 = vld [vmem:[%s2189 + $0xc] sm:$0xf]
        %v2198 = vunpack.c.l.b16 %v2190
        %v2199 = vunpack.c.l.b16 %v2191
        %v2200 = vunpack.c.l.b16 %v2192
        %v2201 = vunpack.c.l.b16 %v2193
        %v2202 = vpack.c.b16 %v2199, %v2198
        %v2203 = vpack.c.b16 %v2201, %v2200
        %v2207 = vsel %vm803, %v2185, 0
        %v2210 = vsel %vm803, %v2186, 0
        %v2213 = vsel %vm803, %v2187, 0
        %v2216 = vsel %vm803, %v2188, 0
        %2218 = vmatpush.bf16.msra.mxu0 0
        %2219 = vmatpush.bf16.msra.mxu0 0
        %2220 = vmatpush.bf16.msra.mxu0 0
        %2221 = vmatpush.bf16.msra.mxu0 0
        %2222 = vmatpush.bf16.msra.mxu0 0
        %2223 = vmatpush.bf16.msra.mxu0 0
        %2224 = vmatpush.bf16.msra.mxu0 %v2203
        %2225 = vmatpush.bf16.msra.mxu0 %v2202
        %2226 = vmatmul.bf16.gmra.mxu0 %v2207
        %v2227 = vpop.f32.mrf.mxu0
        %v2228 = vadd.f32 0.0, %v2227
        %v2229 = vpop.f32.mrf.mxu0
        %v2230 = vadd.f32 0.0, %v2229
        %2231 = vmatmul.bf16.gmra.mxu0 %v2210
        %v2232 = vpop.f32.mrf.mxu0
        %v2233 = vadd.f32 0.0, %v2232
        %v2234 = vpop.f32.mrf.mxu0
        %v2235 = vadd.f32 0.0, %v2234
        %2236 = vmatmul.bf16.gmra.mxu0 %v2213
        %v2237 = vpop.f32.mrf.mxu0
        %v2238 = vadd.f32 0.0, %v2237
        %v2239 = vpop.f32.mrf.mxu0
        %v2240 = vadd.f32 0.0, %v2239
        %2241 = vmatmul.bf16.gmra.mxu0 %v2216
        %v2242 = vpop.f32.mrf.mxu0
        %v2243 = vadd.f32 0.0, %v2242
        %v2244 = vpop.f32.mrf.mxu0
        %v2245 = vadd.f32 0.0, %v2244
        %2246 = vdwg.mxu0
        %v2247 = vadd.f32 %v2177, %v2228
        %v2248 = vadd.f32 %v2178, %v2230
        %v2249 = vadd.f32 %v2179, %v2233
        %v2250 = vadd.f32 %v2180, %v2235
        %v2251 = vadd.f32 %v2181, %v2238
        %v2252 = vadd.f32 %v2182, %v2240
        %v2253 = vadd.f32 %v2183, %v2243
        %v2254 = vadd.f32 %v2184, %v2245
        %v2255 = vmul.f32 %v2027, %v465
        %v2256 = vmul.f32 %v2026, %v470
        %v2257 = vmul.f32 %v2025, %v475
        %v2258 = vmul.f32 %v2024, %v480
        %v2259 = vmul.f32 %v2023, %v485
        %v2260 = vmul.f32 %v2022, %v490
        %v2261 = vmul.f32 %v2021, %v495
        %v2262 = vmul.f32 %v2028, %v500
        %v2263 = vpack.c.bf16 %v2256, %v2255
        %v2264 = vpack.c.bf16 %v2258, %v2257
        %v2265 = vpack.c.bf16 %v2260, %v2259
        %v2266 = vpack.c.bf16 %v2262, %v2261
        %s2267 = scalar_lea.vmem %s5, 80
        %v2268 = vld [vmem:[%s2267] sm:$0xf]
        %v2269 = vld [vmem:[%s2267 + $0x4] sm:$0xf]
        %v2270 = vld [vmem:[%s2267 + $0x8] sm:$0xf]
        %v2271 = vld [vmem:[%s2267 + $0xc] sm:$0xf]
        %v2276 = vunpack.c.l.b16 %v2268
        %v2277 = vunpack.c.l.b16 %v2269
        %v2278 = vunpack.c.l.b16 %v2270
        %v2279 = vunpack.c.l.b16 %v2271
        %v2280 = vpack.c.b16 %v2277, %v2276
        %v2281 = vpack.c.b16 %v2279, %v2278
        %v2285 = vsel %vm803, %v2263, 0
        %v2288 = vsel %vm803, %v2264, 0
        %v2291 = vsel %vm803, %v2265, 0
        %v2294 = vsel %vm803, %v2266, 0
        %2296 = vmatpush.bf16.msra.mxu0 0
        %2297 = vmatpush.bf16.msra.mxu0 0
        %2298 = vmatpush.bf16.msra.mxu0 0
        %2299 = vmatpush.bf16.msra.mxu0 0
        %2300 = vmatpush.bf16.msra.mxu0 0
        %2301 = vmatpush.bf16.msra.mxu0 0
        %2302 = vmatpush.bf16.msra.mxu0 %v2281
        %2303 = vmatpush.bf16.msra.mxu0 %v2280
        %2304 = vmatmul.bf16.gmra.mxu0 %v2285
        %v2305 = vpop.f32.mrf.mxu0
        %v2306 = vadd.f32 0.0, %v2305
        %v2307 = vpop.f32.mrf.mxu0
        %v2308 = vadd.f32 0.0, %v2307
        %2309 = vmatmul.bf16.gmra.mxu0 %v2288
        %v2310 = vpop.f32.mrf.mxu0
        %v2311 = vadd.f32 0.0, %v2310
        %v2312 = vpop.f32.mrf.mxu0
        %v2313 = vadd.f32 0.0, %v2312
        %2314 = vmatmul.bf16.gmra.mxu0 %v2291
        %v2315 = vpop.f32.mrf.mxu0
        %v2316 = vadd.f32 0.0, %v2315
        %v2317 = vpop.f32.mrf.mxu0
        %v2318 = vadd.f32 0.0, %v2317
        %2319 = vmatmul.bf16.gmra.mxu0 %v2294
        %v2320 = vpop.f32.mrf.mxu0
        %v2321 = vadd.f32 0.0, %v2320
        %v2322 = vpop.f32.mrf.mxu0
        %v2323 = vadd.f32 0.0, %v2322
        %2324 = vdwg.mxu0
        %v2325 = vadd.f32 %v2247, %v2306
        %v2326 = vadd.f32 %v2248, %v2308
        %v2327 = vadd.f32 %v2249, %v2311
        %v2328 = vadd.f32 %v2250, %v2313
        %v2329 = vadd.f32 %v2251, %v2316
        %v2330 = vadd.f32 %v2252, %v2318
        %v2331 = vadd.f32 %v2253, %v2321
        %v2332 = vadd.f32 %v2254, %v2323
        %v2333 = vmul.f32 %v1856, %v1578
        %v2334 = vmul.f32 %v1855, %v1582
        %v2335 = vmul.f32 %v1854, %v1586
        %v2336 = vmul.f32 %v1853, %v1590
        %v2337 = vmul.f32 %v1852, %v1594
        %v2338 = vmul.f32 %v1851, %v1598
        %v2339 = vmul.f32 %v1850, %v1602
        %v2340 = vmul.f32 %v1857, %v1606
        %v2341 = vpack.c.bf16 %v2334, %v2333
        %v2342 = vpack.c.bf16 %v2336, %v2335
        %v2343 = vpack.c.bf16 %v2338, %v2337
        %v2344 = vpack.c.bf16 %v2340, %v2339
        %s2345 = scalar_lea.vmem %s5, 96
        %v2346 = vld [vmem:[%s2345] sm:$0xf]
        %v2347 = vld [vmem:[%s2345 + $0x4] sm:$0xf]
        %v2348 = vld [vmem:[%s2345 + $0x8] sm:$0xf]
        %v2349 = vld [vmem:[%s2345 + $0xc] sm:$0xf]
        %v2354 = vunpack.c.l.b16 %v2346
        %v2355 = vunpack.c.l.b16 %v2347
        %v2356 = vunpack.c.l.b16 %v2348
        %v2357 = vunpack.c.l.b16 %v2349
        %v2358 = vpack.c.b16 %v2355, %v2354
        %v2359 = vpack.c.b16 %v2357, %v2356
        %v2363 = vsel %vm803, %v2341, 0
        %v2366 = vsel %vm803, %v2342, 0
        %v2369 = vsel %vm803, %v2343, 0
        %v2372 = vsel %vm803, %v2344, 0
        %2374 = vmatpush.bf16.msra.mxu0 0
        %2375 = vmatpush.bf16.msra.mxu0 0
        %2376 = vmatpush.bf16.msra.mxu0 0
        %2377 = vmatpush.bf16.msra.mxu0 0
        %2378 = vmatpush.bf16.msra.mxu0 0
        %2379 = vmatpush.bf16.msra.mxu0 0
        %2380 = vmatpush.bf16.msra.mxu0 %v2359
        %2381 = vmatpush.bf16.msra.mxu0 %v2358
        %2382 = vmatmul.bf16.gmra.mxu0 %v2363
        %v2383 = vpop.f32.mrf.mxu0
        %v2384 = vadd.f32 0.0, %v2383
        %v2385 = vpop.f32.mrf.mxu0
        %v2386 = vadd.f32 0.0, %v2385
        %2387 = vmatmul.bf16.gmra.mxu0 %v2366
        %v2388 = vpop.f32.mrf.mxu0
        %v2389 = vadd.f32 0.0, %v2388
        %v2390 = vpop.f32.mrf.mxu0
        %v2391 = vadd.f32 0.0, %v2390
        %2392 = vmatmul.bf16.gmra.mxu0 %v2369
        %v2393 = vpop.f32.mrf.mxu0
        %v2394 = vadd.f32 0.0, %v2393
        %v2395 = vpop.f32.mrf.mxu0
        %v2396 = vadd.f32 0.0, %v2395
        %2397 = vmatmul.bf16.gmra.mxu0 %v2372
        %v2398 = vpop.f32.mrf.mxu0
        %v2399 = vadd.f32 0.0, %v2398
        %v2400 = vpop.f32.mrf.mxu0
        %v2401 = vadd.f32 0.0, %v2400
        %2402 = vdwg.mxu0
        %v2403 = vadd.f32 %v2325, %v2384
        %v2404 = vadd.f32 %v2326, %v2386
        %v2405 = vadd.f32 %v2327, %v2389
        %v2406 = vadd.f32 %v2328, %v2391
        %v2407 = vadd.f32 %v2329, %v2394
        %v2408 = vadd.f32 %v2330, %v2396
        %v2409 = vadd.f32 %v2331, %v2399
        %v2410 = vadd.f32 %v2332, %v2401
        %v2411 = vmul.f32 %v957, %v608
        %v2412 = vmul.f32 %v958, %v612
        %v2413 = vmul.f32 %v959, %v616
        %v2414 = vmul.f32 %v960, %v620
        %v2415 = vmul.f32 %v961, %v624
        %v2416 = vmul.f32 %v962, %v628
        %v2417 = vmul.f32 %v963, %v632
        %v2418 = vmul.f32 %v956, %v636
        %v2419 = vpack.c.bf16 %v2412, %v2411
        %v2420 = vpack.c.bf16 %v2414, %v2413
        %v2421 = vpack.c.bf16 %v2416, %v2415
        %v2422 = vpack.c.bf16 %v2418, %v2417
        %s2423 = scalar_lea.vmem %s5, 112
        %v2424 = vld [vmem:[%s2423] sm:$0xf]
        %v2425 = vld [vmem:[%s2423 + $0x4] sm:$0xf]
        %v2426 = vld [vmem:[%s2423 + $0x8] sm:$0xf]
        %v2427 = vld [vmem:[%s2423 + $0xc] sm:$0xf]
        %v2432 = vunpack.c.l.b16 %v2424
        %v2433 = vunpack.c.l.b16 %v2425
        %v2434 = vunpack.c.l.b16 %v2426
        %v2435 = vunpack.c.l.b16 %v2427
        %v2436 = vpack.c.b16 %v2433, %v2432
        %v2437 = vpack.c.b16 %v2435, %v2434
        %v2441 = vsel %vm803, %v2419, 0
        %v2444 = vsel %vm803, %v2420, 0
        %v2447 = vsel %vm803, %v2421, 0
        %v2450 = vsel %vm803, %v2422, 0
        %2452 = vmatpush.bf16.msra.mxu0 0
        %2453 = vmatpush.bf16.msra.mxu0 0
        %2454 = vmatpush.bf16.msra.mxu0 0
        %2455 = vmatpush.bf16.msra.mxu0 0
        %2456 = vmatpush.bf16.msra.mxu0 0
        %2457 = vmatpush.bf16.msra.mxu0 0
        %2458 = vmatpush.bf16.msra.mxu0 %v2437
        %2459 = vmatpush.bf16.msra.mxu0 %v2436
        %2460 = vmatmul.bf16.gmra.mxu0 %v2441
        %v2461 = vpop.f32.mrf.mxu0
        %v2462 = vadd.f32 0.0, %v2461
        %v2463 = vpop.f32.mrf.mxu0
        %v2464 = vadd.f32 0.0, %v2463
        %2465 = vmatmul.bf16.gmra.mxu0 %v2444
        %v2466 = vpop.f32.mrf.mxu0
        %v2467 = vadd.f32 0.0, %v2466
        %v2468 = vpop.f32.mrf.mxu0
        %v2469 = vadd.f32 0.0, %v2468
        %2470 = vmatmul.bf16.gmra.mxu0 %v2447
        %v2471 = vpop.f32.mrf.mxu0
        %v2472 = vadd.f32 0.0, %v2471
        %v2473 = vpop.f32.mrf.mxu0
        %v2474 = vadd.f32 0.0, %v2473
        %2475 = vmatmul.bf16.gmra.mxu0 %v2450
        %v2476 = vpop.f32.mrf.mxu0
        %v2477 = vadd.f32 0.0, %v2476
        %v2478 = vpop.f32.mrf.mxu0
        %v2479 = vadd.f32 0.0, %v2478
        %2480 = vdwg.mxu0
        %v2481 = vadd.f32 %v2403, %v2462
        %v2482 = vadd.f32 %v2404, %v2464
        %v2483 = vadd.f32 %v2405, %v2467
        %v2484 = vadd.f32 %v2406, %v2469
        %v2485 = vadd.f32 %v2407, %v2472
        %v2486 = vadd.f32 %v2408, %v2474
        %v2487 = vadd.f32 %v2409, %v2477
        %v2488 = vadd.f32 %v2410, %v2479
        %v2489 = vmul.f32 %v2026, %v706
        %v2490 = vmul.f32 %v2025, %v710
        %v2491 = vmul.f32 %v2024, %v714
        %v2492 = vmul.f32 %v2023, %v718
        %v2493 = vmul.f32 %v2022, %v722
        %v2494 = vmul.f32 %v2021, %v726
        %v2495 = vmul.f32 %v2028, %v730
        %v2496 = vmul.f32 %v2027, %v734
        %v2497 = vpack.c.bf16 %v2490, %v2489
        %v2498 = vpack.c.bf16 %v2492, %v2491
        %v2499 = vpack.c.bf16 %v2494, %v2493
        %v2500 = vpack.c.bf16 %v2496, %v2495
        %s2501 = scalar_lea.vmem %s5, 128
        %v2502 = vld [vmem:[%s2501] sm:$0xf]
        %v2503 = vld [vmem:[%s2501 + $0x4] sm:$0xf]
        %v2504 = vld [vmem:[%s2501 + $0x8] sm:$0xf]
        %v2505 = vld [vmem:[%s2501 + $0xc] sm:$0xf]
        %v2510 = vunpack.c.l.b16 %v2502
        %v2511 = vunpack.c.l.b16 %v2503
        %v2512 = vunpack.c.l.b16 %v2504
        %v2513 = vunpack.c.l.b16 %v2505
        %v2514 = vpack.c.b16 %v2511, %v2510
        %v2515 = vpack.c.b16 %v2513, %v2512
        %v2519 = vsel %vm803, %v2497, 0
        %v2522 = vsel %vm803, %v2498, 0
        %v2525 = vsel %vm803, %v2499, 0
        %v2528 = vsel %vm803, %v2500, 0
        %2530 = vmatpush.bf16.msra.mxu0 0
        %2531 = vmatpush.bf16.msra.mxu0 0
        %2532 = vmatpush.bf16.msra.mxu0 0
        %2533 = vmatpush.bf16.msra.mxu0 0
        %2534 = vmatpush.bf16.msra.mxu0 0
        %2535 = vmatpush.bf16.msra.mxu0 0
        %2536 = vmatpush.bf16.msra.mxu0 %v2515
        %2537 = vmatpush.bf16.msra.mxu0 %v2514
        %2538 = vmatmul.bf16.gmra.mxu0 %v2519
        %v2539 = vpop.f32.mrf.mxu0
        %v2540 = vadd.f32 0.0, %v2539
        %v2541 = vpop.f32.mrf.mxu0
        %v2542 = vadd.f32 0.0, %v2541
        %2543 = vmatmul.bf16.gmra.mxu0 %v2522
        %v2544 = vpop.f32.mrf.mxu0
        %v2545 = vadd.f32 0.0, %v2544
        %v2546 = vpop.f32.mrf.mxu0
        %v2547 = vadd.f32 0.0, %v2546
        %2548 = vmatmul.bf16.gmra.mxu0 %v2525
        %v2549 = vpop.f32.mrf.mxu0
        %v2550 = vadd.f32 0.0, %v2549
        %v2551 = vpop.f32.mrf.mxu0
        %v2552 = vadd.f32 0.0, %v2551
        %2553 = vmatmul.bf16.gmra.mxu0 %v2528
        %v2554 = vpop.f32.mrf.mxu0
        %v2555 = vadd.f32 0.0, %v2554
        %v2556 = vpop.f32.mrf.mxu0
        %v2557 = vadd.f32 0.0, %v2556
        %2558 = vdwg.mxu0
        %v2559 = vadd.f32 %v2481, %v2540
        %v2560 = vadd.f32 %v2482, %v2542
        %v2561 = vadd.f32 %v2483, %v2545
        %v2562 = vadd.f32 %v2484, %v2547
        %v2563 = vadd.f32 %v2485, %v2550
        %v2564 = vadd.f32 %v2486, %v2552
        %v2565 = vadd.f32 %v2487, %v2555
        %v2566 = vadd.f32 %v2488, %v2557
        %s2567 = sld [smem:[#allocation2 + $0x1]]
        %v2568 = vadd.f32 %v2559, %v2560
        %v2569 = vadd.f32 %v2568, %v2561
        %v2570 = vadd.f32 %v2569, %v2562
        %v2571 = vadd.f32 %v2570, %v2563
        %v2572 = vadd.f32 %v2571, %v2564
        %v2573 = vadd.f32 %v2572, %v2565
        %v2574 = vadd.f32 %v2573, %v2566
        %v2575 = vrot.slane %v2574, 4
        %v2576 = vadd.f32 %v2574, %v2575
        %v2577 = vrot.slane %v2576, 2
        %v2578 = vadd.f32 %v2576, %v2577
        %v2579 = vrot.slane %v2578, 1
        %v2580 = vadd.f32 %v2578, %v2579
        %2582 = vrot.lane.b32.xlu0 %v2580, 96
        %v2583 = vpop.permute.xlu0 %2582
        %v2585 = vadd.f32 %v2580, %v2583
        %2586 = vrot.lane.b32.xlu0 %v2580, 64
        %v2587 = vpop.permute.xlu0 %2586
        %v2589 = vadd.f32 %v2585, %v2587
        %2590 = vrot.lane.b32.xlu0 %v2580, 32
        %v2591 = vpop.permute.xlu0 %2590
        %v2593 = vadd.f32 %v2589, %v2591
        %v2594 = vmul.f32 %v2593, 0.00390625
        %2596 = vrot.lane.b32.xlu0 %v2594, 32
        %v2597 = vpop.permute.xlu0 %2596
        %2599 = vrot.lane.b32.xlu0 %v2594, 64
        %v2600 = vpop.permute.xlu0 %2599
        %2602 = vrot.lane.b32.xlu0 %v2594, 96
        %v2603 = vpop.permute.xlu0 %2602
        %v2605 = vsel %vm803, %v2594, %v2597
        %vm2606 = vcmask 523264
        %v2607 = vsel %vm2606, %v2605, %v2600
        %vm2608 = vcmask 785408
        %v2609 = vsel %vm2608, %v2607, %v2603
        %v2610 = vperm.slane %v2609, 0
        %v2611 = vsub.f32 %v2559, %v2610
        %v2612 = vsub.f32 %v2560, %v2610
        %v2613 = vsub.f32 %v2561, %v2610
        %v2614 = vsub.f32 %v2562, %v2610
        %v2615 = vsub.f32 %v2563, %v2610
        %v2616 = vsub.f32 %v2564, %v2610
        %v2617 = vsub.f32 %v2565, %v2610
        %v2618 = vsub.f32 %v2566, %v2610
        %v2619 = vmul.f32 %v2611, %v2611
        %v2620 = vmul.f32 %v2612, %v2612
        %v2621 = vmul.f32 %v2613, %v2613
        %v2622 = vmul.f32 %v2614, %v2614
        %v2623 = vmul.f32 %v2615, %v2615
        %v2624 = vmul.f32 %v2616, %v2616
        %v2625 = vmul.f32 %v2617, %v2617
        %v2626 = vmul.f32 %v2618, %v2618
        %v2627 = vadd.f32 %v2619, %v2620
        %v2628 = vadd.f32 %v2627, %v2621
        %v2629 = vadd.f32 %v2628, %v2622
        %v2630 = vadd.f32 %v2629, %v2623
        %v2631 = vadd.f32 %v2630, %v2624
        %v2632 = vadd.f32 %v2631, %v2625
        %v2633 = vadd.f32 %v2632, %v2626
        %v2634 = vrot.slane %v2633, 4
        %v2635 = vadd.f32 %v2633, %v2634
        %v2636 = vrot.slane %v2635, 2
        %v2637 = vadd.f32 %v2635, %v2636
        %v2638 = vrot.slane %v2637, 1
        %v2639 = vadd.f32 %v2637, %v2638
        %2641 = vrot.lane.b32.xlu0 %v2639, 96
        %v2642 = vpop.permute.xlu0 %2641
        %v2644 = vadd.f32 %v2639, %v2642
        %2645 = vrot.lane.b32.xlu0 %v2639, 64
        %v2646 = vpop.permute.xlu0 %2645
        %v2648 = vadd.f32 %v2644, %v2646
        %2649 = vrot.lane.b32.xlu0 %v2639, 32
        %v2650 = vpop.permute.xlu0 %2649
        %v2652 = vadd.f32 %v2648, %v2650
        %v2653 = vmul.f32 %v2652, 0.00390625
        %v2654 = vadd.f32 %v2653, 1e-05
        %v2655 = vrsqrt.pop %v2654
        %v2656 = vmul.f32 %v2655, %v2654
        %v2657 = vmul.f32 %v2656, %v2655
        %v2658 = vmul.f32 0.5, %v2657
        %v2659 = vsub.f32 1.5, %v2658
        %v2660 = vmul.f32 %v2655, %v2659
        %vm2661 = vweird.f32 %v2654
        %vm2662 = vweird.f32 %v2655
        %vm2663 = vmor %vm2661, %vm2662
        %v2664 = vsel %vm2663, %v2655, %v2660
        %2666 = vrot.lane.b32.xlu0 %v2664, 32
        %v2667 = vpop.permute.xlu0 %2666
        %2669 = vrot.lane.b32.xlu0 %v2664, 64
        %v2670 = vpop.permute.xlu0 %2669
        %2672 = vrot.lane.b32.xlu0 %v2664, 96
        %v2673 = vpop.permute.xlu0 %2672
        %v2675 = vsel %vm803, %v2664, %v2667
        %v2676 = vsel %vm2606, %v2675, %v2670
        %v2677 = vsel %vm2608, %v2676, %v2673
        %v2678 = vperm.slane %v2677, 0
        %v2679 = vmul.f32 %v2611, %v2678
        %v2680 = vmul.f32 %v2612, %v2678
        %v2681 = vmul.f32 %v2613, %v2678
        %v2682 = vmul.f32 %v2614, %v2678
        %v2683 = vmul.f32 %v2615, %v2678
        %v2684 = vmul.f32 %v2616, %v2678
        %v2685 = vmul.f32 %v2617, %v2678
        %v2686 = vmul.f32 %v2618, %v2678
        %vm2687 = vcmp.ge.f32.partialorder %v2679, 0.0
        %vm2688 = vcmp.ge.f32.partialorder %v2680, 0.0
        %vm2689 = vcmp.ge.f32.partialorder %v2681, 0.0
        %vm2690 = vcmp.ge.f32.partialorder %v2682, 0.0
        %vm2691 = vcmp.ge.f32.partialorder %v2683, 0.0
        %vm2692 = vcmp.ge.f32.partialorder %v2684, 0.0
        %vm2693 = vcmp.ge.f32.partialorder %v2685, 0.0
        %vm2694 = vcmp.ge.f32.partialorder %v2686, 0.0
        %v2695 = vstv %s2567
        %v2696 = vmul.f32 %v2695, %v2679
        %v2697 = vmul.f32 %v2695, %v2680
        %v2698 = vmul.f32 %v2695, %v2681
        %v2699 = vmul.f32 %v2695, %v2682
        %v2700 = vmul.f32 %v2695, %v2683
        %v2701 = vmul.f32 %v2695, %v2684
        %v2702 = vmul.f32 %v2695, %v2685
        %v2703 = vmul.f32 %v2695, %v2686
        %v2704 = vsel %vm2687, %v2679, %v2696
        %v2705 = vsel %vm2688, %v2680, %v2697
        %v2706 = vsel %vm2689, %v2681, %v2698
        %v2707 = vsel %vm2690, %v2682, %v2699
        %v2708 = vsel %vm2691, %v2683, %v2700
        %v2709 = vsel %vm2692, %v2684, %v2701
        %v2710 = vsel %vm2693, %v2685, %v2702
        %v2711 = vsel %vm2694, %v2686, %v2703
        %v2712 = vrot.slane %v2704, 7
        %v2713 = vrot.slane %v2705, 7
        %v2714 = vrot.slane %v2706, 7
        %v2715 = vrot.slane %v2707, 7
        %v2716 = vrot.slane %v2708, 7
        %v2717 = vrot.slane %v2709, 7
        %v2718 = vrot.slane %v2710, 7
        %v2719 = vrot.slane %v2711, 7
        %v2720 = vsel %vm980, %v2718, %v2719
        %v2721 = vsel %vm980, %v2717, %v2718
        %v2722 = vsel %vm980, %v2716, %v2717
        %v2723 = vsel %vm980, %v2715, %v2716
        %v2724 = vsel %vm980, %v2714, %v2715
        %v2725 = vsel %vm980, %v2713, %v2714
        %v2726 = vsel %vm980, %v2712, %v2713
        %v2727 = vsel %vm980, %v2719, %v2712
        %v2728 = vmul.f32 %v2720, %v991
        %v2729 = vmul.f32 %v2727, %v995
        %v2730 = vmul.f32 %v2726, %v999
        %v2731 = vmul.f32 %v2725, %v1003
        %v2732 = vmul.f32 %v2724, %v1007
        %v2733 = vmul.f32 %v2723, %v1011
        %v2734 = vmul.f32 %v2722, %v1015
        %v2735 = vmul.f32 %v2721, %v1019
        %v2736 = vpack.c.bf16 %v2729, %v2728
        %v2737 = vpack.c.bf16 %v2731, %v2730
        %v2738 = vpack.c.bf16 %v2733, %v2732
        %v2739 = vpack.c.bf16 %v2735, %v2734
        %v2740 = vld [vmem:[%s6] sm:$0xf]
        %v2741 = vld [vmem:[%s6 + $0x4] sm:$0xf]
        %v2742 = vld [vmem:[%s6 + $0x8] sm:$0xf]
        %v2743 = vld [vmem:[%s6 + $0xc] sm:$0xf]
        %v2744 = vld [vmem:[%s6 + $0x10] sm:$0xf]
        %v2745 = vld [vmem:[%s6 + $0x14] sm:$0xf]
        %v2746 = vld [vmem:[%s6 + $0x18] sm:$0xf]
        %v2747 = vld [vmem:[%s6 + $0x1c] sm:$0xf]
        %v2748 = vld [vmem:[%s6 + $0x20] sm:$0xf]
        %v2749 = vld [vmem:[%s6 + $0x24] sm:$0xf]
        %v2750 = vld [vmem:[%s6 + $0x28] sm:$0xf]
        %v2751 = vld [vmem:[%s6 + $0x2c] sm:$0xf]
        %v2752 = vld [vmem:[%s6 + $0x30] sm:$0xf]
        %v2753 = vld [vmem:[%s6 + $0x34] sm:$0xf]
        %v2754 = vld [vmem:[%s6 + $0x38] sm:$0xf]
        %v2755 = vld [vmem:[%s6 + $0x3c] sm:$0xf]
        %v2756 = vmul.f32 %v2711, %v1039
        %v2757 = vmul.f32 %v2704, %v1043
        %v2758 = vmul.f32 %v2705, %v1047
        %v2759 = vmul.f32 %v2706, %v1051
        %v2760 = vmul.f32 %v2707, %v1055
        %v2761 = vmul.f32 %v2708, %v1059
        %v2762 = vmul.f32 %v2709, %v1063
        %v2763 = vmul.f32 %v2710, %v1067
        %v2764 = vpack.c.bf16 %v2757, %v2756
        %v2765 = vpack.c.bf16 %v2759, %v2758
        %v2766 = vpack.c.bf16 %v2761, %v2760
        %v2767 = vpack.c.bf16 %v2763, %v2762
        %s2768 = scalar_lea.vmem %s6, 64
        %v2769 = vld [vmem:[%s2768] sm:$0xf]
        %v2770 = vld [vmem:[%s2768 + $0x4] sm:$0xf]
        %v2771 = vld [vmem:[%s2768 + $0x8] sm:$0xf]
        %v2772 = vld [vmem:[%s2768 + $0xc] sm:$0xf]
        %v2773 = vld [vmem:[%s2768 + $0x10] sm:$0xf]
        %v2774 = vld [vmem:[%s2768 + $0x14] sm:$0xf]
        %v2775 = vld [vmem:[%s2768 + $0x18] sm:$0xf]
        %v2776 = vld [vmem:[%s2768 + $0x1c] sm:$0xf]
        %v2777 = vld [vmem:[%s2768 + $0x20] sm:$0xf]
        %v2778 = vld [vmem:[%s2768 + $0x24] sm:$0xf]
        %v2779 = vld [vmem:[%s2768 + $0x28] sm:$0xf]
        %v2780 = vld [vmem:[%s2768 + $0x2c] sm:$0xf]
        %v2781 = vld [vmem:[%s2768 + $0x30] sm:$0xf]
        %v2782 = vld [vmem:[%s2768 + $0x34] sm:$0xf]
        %v2783 = vld [vmem:[%s2768 + $0x38] sm:$0xf]
        %v2784 = vld [vmem:[%s2768 + $0x3c] sm:$0xf]
        %v2801 = vunpack.c.l.b16 %v2769
        %v2802 = vunpack.c.l.b16 %v2770
        %v2803 = vunpack.c.l.b16 %v2771
        %v2804 = vunpack.c.l.b16 %v2772
        %v2805 = vunpack.c.l.b16 %v2773
        %v2806 = vunpack.c.l.b16 %v2774
        %v2807 = vunpack.c.l.b16 %v2775
        %v2808 = vunpack.c.l.b16 %v2776
        %v2809 = vunpack.c.l.b16 %v2777
        %v2810 = vunpack.c.l.b16 %v2778
        %v2811 = vunpack.c.l.b16 %v2779
        %v2812 = vunpack.c.l.b16 %v2780
        %v2813 = vunpack.c.l.b16 %v2781
        %v2814 = vunpack.c.l.b16 %v2782
        %v2815 = vunpack.c.l.b16 %v2783
        %v2816 = vunpack.c.l.b16 %v2784
        %v2817 = vpack.c.b16 %v2802, %v2801
        %v2818 = vpack.c.b16 %v2804, %v2803
        %v2819 = vpack.c.b16 %v2806, %v2805
        %v2820 = vpack.c.b16 %v2808, %v2807
        %v2821 = vpack.c.b16 %v2810, %v2809
        %v2822 = vpack.c.b16 %v2812, %v2811
        %v2823 = vpack.c.b16 %v2814, %v2813
        %v2824 = vpack.c.b16 %v2816, %v2815
        %2833 = vmatpush.bf16.msra.mxu0 %v2824
        %2834 = vmatpush.bf16.msra.mxu0 %v2823
        %2835 = vmatpush.bf16.msra.mxu0 %v2822
        %2836 = vmatpush.bf16.msra.mxu0 %v2821
        %2837 = vmatpush.bf16.msra.mxu0 %v2820
        %2838 = vmatpush.bf16.msra.mxu0 %v2819
        %2839 = vmatpush.bf16.msra.mxu0 %v2818
        %2840 = vmatpush.bf16.msra.mxu0 %v2817
        %2841 = vmatmul.bf16.gmra.mxu0 %v2764
        %v2842 = vpop.f32.mrf.mxu0
        %v2843 = vadd.f32 0.0, %v2842
        %v2844 = vpop.f32.mrf.mxu0
        %v2845 = vadd.f32 0.0, %v2844
        %2846 = vmatmul.bf16.gmra.mxu0 %v2765
        %v2847 = vpop.f32.mrf.mxu0
        %v2848 = vadd.f32 0.0, %v2847
        %v2849 = vpop.f32.mrf.mxu0
        %v2850 = vadd.f32 0.0, %v2849
        %2851 = vmatmul.bf16.gmra.mxu0 %v2766
        %v2852 = vpop.f32.mrf.mxu0
        %v2853 = vadd.f32 0.0, %v2852
        %v2854 = vpop.f32.mrf.mxu0
        %v2855 = vadd.f32 0.0, %v2854
        %2856 = vmatmul.bf16.gmra.mxu0 %v2767
        %v2857 = vpop.f32.mrf.mxu0
        %v2858 = vadd.f32 0.0, %v2857
        %v2859 = vpop.f32.mrf.mxu0
        %v2860 = vadd.f32 0.0, %v2859
        %2861 = vdwg.mxu0
        %v2878 = vunpack.c.l.b16 %v2740
        %v2879 = vunpack.c.l.b16 %v2741
        %v2880 = vunpack.c.l.b16 %v2742
        %v2881 = vunpack.c.l.b16 %v2743
        %v2882 = vunpack.c.l.b16 %v2744
        %v2883 = vunpack.c.l.b16 %v2745
        %v2884 = vunpack.c.l.b16 %v2746
        %v2885 = vunpack.c.l.b16 %v2747
        %v2886 = vunpack.c.l.b16 %v2748
        %v2887 = vunpack.c.l.b16 %v2749
        %v2888 = vunpack.c.l.b16 %v2750
        %v2889 = vunpack.c.l.b16 %v2751
        %v2890 = vunpack.c.l.b16 %v2752
        %v2891 = vunpack.c.l.b16 %v2753
        %v2892 = vunpack.c.l.b16 %v2754
        %v2893 = vunpack.c.l.b16 %v2755
        %v2894 = vpack.c.b16 %v2879, %v2878
        %v2895 = vpack.c.b16 %v2881, %v2880
        %v2896 = vpack.c.b16 %v2883, %v2882
        %v2897 = vpack.c.b16 %v2885, %v2884
        %v2898 = vpack.c.b16 %v2887, %v2886
        %v2899 = vpack.c.b16 %v2889, %v2888
        %v2900 = vpack.c.b16 %v2891, %v2890
        %v2901 = vpack.c.b16 %v2893, %v2892
        %2910 = vmatpush.bf16.msra.mxu0 %v2901
        %2911 = vmatpush.bf16.msra.mxu0 %v2900
        %2912 = vmatpush.bf16.msra.mxu0 %v2899
        %2913 = vmatpush.bf16.msra.mxu0 %v2898
        %2914 = vmatpush.bf16.msra.mxu0 %v2897
        %2915 = vmatpush.bf16.msra.mxu0 %v2896
        %2916 = vmatpush.bf16.msra.mxu0 %v2895
        %2917 = vmatpush.bf16.msra.mxu0 %v2894
        %2918 = vmatmul.bf16.gmra.mxu0 %v2736
        %v2919 = vpop.f32.mrf.mxu0
        %v2920 = vadd.f32 %v2843, %v2919
        %v2921 = vpop.f32.mrf.mxu0
        %v2922 = vadd.f32 %v2845, %v2921
        %2923 = vmatmul.bf16.gmra.mxu0 %v2737
        %v2924 = vpop.f32.mrf.mxu0
        %v2925 = vadd.f32 %v2848, %v2924
        %v2926 = vpop.f32.mrf.mxu0
        %v2927 = vadd.f32 %v2850, %v2926
        %2928 = vmatmul.bf16.gmra.mxu0 %v2738
        %v2929 = vpop.f32.mrf.mxu0
        %v2930 = vadd.f32 %v2853, %v2929
        %v2931 = vpop.f32.mrf.mxu0
        %v2932 = vadd.f32 %v2855, %v2931
        %2933 = vmatmul.bf16.gmra.mxu0 %v2739
        %v2934 = vpop.f32.mrf.mxu0
        %v2935 = vadd.f32 %v2858, %v2934
        %v2936 = vpop.f32.mrf.mxu0
        %v2937 = vadd.f32 %v2860, %v2936
        %2938 = vdwg.mxu0
        %v2939 = vrot.slane %v2704, 1
        %v2940 = vrot.slane %v2705, 1
        %v2941 = vrot.slane %v2706, 1
        %v2942 = vrot.slane %v2707, 1
        %v2943 = vrot.slane %v2708, 1
        %v2944 = vrot.slane %v2709, 1
        %v2945 = vrot.slane %v2710, 1
        %v2946 = vrot.slane %v2711, 1
        %v2947 = vsel %vm453, %v2945, %v2946
        %v2948 = vsel %vm453, %v2944, %v2945
        %v2949 = vsel %vm453, %v2943, %v2944
        %v2950 = vsel %vm453, %v2942, %v2943
        %v2951 = vsel %vm453, %v2941, %v2942
        %v2952 = vsel %vm453, %v2940, %v2941
        %v2953 = vsel %vm453, %v2939, %v2940
        %v2954 = vsel %vm453, %v2946, %v2939
        %v2955 = vmul.f32 %v2954, %v1210
        %v2956 = vmul.f32 %v2953, %v1214
        %v2957 = vmul.f32 %v2952, %v1218
        %v2958 = vmul.f32 %v2951, %v1222
        %v2959 = vmul.f32 %v2950, %v1226
        %v2960 = vmul.f32 %v2949, %v1230
        %v2961 = vmul.f32 %v2948, %v1234
        %v2962 = vmul.f32 %v2947, %v1238
        %v2963 = vpack.c.bf16 %v2956, %v2955
        %v2964 = vpack.c.bf16 %v2958, %v2957
        %v2965 = vpack.c.bf16 %v2960, %v2959
        %v2966 = vpack.c.bf16 %v2962, %v2961
        %s2967 = scalar_lea.vmem %s6, 128
        %v2968 = vld [vmem:[%s2967] sm:$0xf]
        %v2969 = vld [vmem:[%s2967 + $0x4] sm:$0xf]
        %v2970 = vld [vmem:[%s2967 + $0x8] sm:$0xf]
        %v2971 = vld [vmem:[%s2967 + $0xc] sm:$0xf]
        %v2972 = vld [vmem:[%s2967 + $0x10] sm:$0xf]
        %v2973 = vld [vmem:[%s2967 + $0x14] sm:$0xf]
        %v2974 = vld [vmem:[%s2967 + $0x18] sm:$0xf]
        %v2975 = vld [vmem:[%s2967 + $0x1c] sm:$0xf]
        %v2976 = vld [vmem:[%s2967 + $0x20] sm:$0xf]
        %v2977 = vld [vmem:[%s2967 + $0x24] sm:$0xf]
        %v2978 = vld [vmem:[%s2967 + $0x28] sm:$0xf]
        %v2979 = vld [vmem:[%s2967 + $0x2c] sm:$0xf]
        %v2980 = vld [vmem:[%s2967 + $0x30] sm:$0xf]
        %v2981 = vld [vmem:[%s2967 + $0x34] sm:$0xf]
        %v2982 = vld [vmem:[%s2967 + $0x38] sm:$0xf]
        %v2983 = vld [vmem:[%s2967 + $0x3c] sm:$0xf]
        %v3000 = vunpack.c.l.b16 %v2968
        %v3001 = vunpack.c.l.b16 %v2969
        %v3002 = vunpack.c.l.b16 %v2970
        %v3003 = vunpack.c.l.b16 %v2971
        %v3004 = vunpack.c.l.b16 %v2972
        %v3005 = vunpack.c.l.b16 %v2973
        %v3006 = vunpack.c.l.b16 %v2974
        %v3007 = vunpack.c.l.b16 %v2975
        %v3008 = vunpack.c.l.b16 %v2976
        %v3009 = vunpack.c.l.b16 %v2977
        %v3010 = vunpack.c.l.b16 %v2978
        %v3011 = vunpack.c.l.b16 %v2979
        %v3012 = vunpack.c.l.b16 %v2980
        %v3013 = vunpack.c.l.b16 %v2981
        %v3014 = vunpack.c.l.b16 %v2982
        %v3015 = vunpack.c.l.b16 %v2983
        %v3016 = vpack.c.b16 %v3001, %v3000
        %v3017 = vpack.c.b16 %v3003, %v3002
        %v3018 = vpack.c.b16 %v3005, %v3004
        %v3019 = vpack.c.b16 %v3007, %v3006
        %v3020 = vpack.c.b16 %v3009, %v3008
        %v3021 = vpack.c.b16 %v3011, %v3010
        %v3022 = vpack.c.b16 %v3013, %v3012
        %v3023 = vpack.c.b16 %v3015, %v3014
        %3032 = vmatpush.bf16.msra.mxu0 %v3023
        %3033 = vmatpush.bf16.msra.mxu0 %v3022
        %3034 = vmatpush.bf16.msra.mxu0 %v3021
        %3035 = vmatpush.bf16.msra.mxu0 %v3020
        %3036 = vmatpush.bf16.msra.mxu0 %v3019
        %3037 = vmatpush.bf16.msra.mxu0 %v3018
        %3038 = vmatpush.bf16.msra.mxu0 %v3017
        %3039 = vmatpush.bf16.msra.mxu0 %v3016
        %3040 = vmatmul.bf16.gmra.mxu0 %v2963
        %v3041 = vpop.f32.mrf.mxu0
        %v3042 = vadd.f32 0.0, %v3041
        %v3043 = vpop.f32.mrf.mxu0
        %v3044 = vadd.f32 0.0, %v3043
        %3045 = vmatmul.bf16.gmra.mxu0 %v2964
        %v3046 = vpop.f32.mrf.mxu0
        %v3047 = vadd.f32 0.0, %v3046
        %v3048 = vpop.f32.mrf.mxu0
        %v3049 = vadd.f32 0.0, %v3048
        %3050 = vmatmul.bf16.gmra.mxu0 %v2965
        %v3051 = vpop.f32.mrf.mxu0
        %v3052 = vadd.f32 0.0, %v3051
        %v3053 = vpop.f32.mrf.mxu0
        %v3054 = vadd.f32 0.0, %v3053
        %3055 = vmatmul.bf16.gmra.mxu0 %v2966
        %v3056 = vpop.f32.mrf.mxu0
        %v3057 = vadd.f32 0.0, %v3056
        %v3058 = vpop.f32.mrf.mxu0
        %v3059 = vadd.f32 0.0, %v3058
        %3060 = vdwg.mxu0
        %v3061 = vadd.f32 %v2920, %v3042
        %v3062 = vadd.f32 %v2922, %v3044
        %v3063 = vadd.f32 %v2925, %v3047
        %v3064 = vadd.f32 %v2927, %v3049
        %v3065 = vadd.f32 %v2930, %v3052
        %v3066 = vadd.f32 %v2932, %v3054
        %v3067 = vadd.f32 %v2935, %v3057
        %v3068 = vadd.f32 %v2937, %v3059
        %v3069 = vmul.f32 %v2727, %v1320
        %v3070 = vmul.f32 %v2726, %v1324
        %v3071 = vmul.f32 %v2725, %v1328
        %v3072 = vmul.f32 %v2724, %v1332
        %v3073 = vmul.f32 %v2723, %v1336
        %v3074 = vmul.f32 %v2722, %v1340
        %v3075 = vmul.f32 %v2721, %v1344
        %v3076 = vmul.f32 %v2720, %v1348
        %v3077 = vpack.c.bf16 %v3070, %v3069
        %v3078 = vpack.c.bf16 %v3072, %v3071
        %v3079 = vpack.c.bf16 %v3074, %v3073
        %v3080 = vpack.c.bf16 %v3076, %v3075
        %s3081 = scalar_lea.vmem %s6, 192
        %v3082 = vld [vmem:[%s3081] sm:$0xf]
        %v3083 = vld [vmem:[%s3081 + $0x4] sm:$0xf]
        %v3084 = vld [vmem:[%s3081 + $0x8] sm:$0xf]
        %v3085 = vld [vmem:[%s3081 + $0xc] sm:$0xf]
        %v3086 = vld [vmem:[%s3081 + $0x10] sm:$0xf]
        %v3087 = vld [vmem:[%s3081 + $0x14] sm:$0xf]
        %v3088 = vld [vmem:[%s3081 + $0x18] sm:$0xf]
        %v3089 = vld [vmem:[%s3081 + $0x1c] sm:$0xf]
        %v3090 = vld [vmem:[%s3081 + $0x20] sm:$0xf]
        %v3091 = vld [vmem:[%s3081 + $0x24] sm:$0xf]
        %v3092 = vld [vmem:[%s3081 + $0x28] sm:$0xf]
        %v3093 = vld [vmem:[%s3081 + $0x2c] sm:$0xf]
        %v3094 = vld [vmem:[%s3081 + $0x30] sm:$0xf]
        %v3095 = vld [vmem:[%s3081 + $0x34] sm:$0xf]
        %v3096 = vld [vmem:[%s3081 + $0x38] sm:$0xf]
        %v3097 = vld [vmem:[%s3081 + $0x3c] sm:$0xf]
        %v3114 = vunpack.c.l.b16 %v3082
        %v3115 = vunpack.c.l.b16 %v3083
        %v3116 = vunpack.c.l.b16 %v3084
        %v3117 = vunpack.c.l.b16 %v3085
        %v3118 = vunpack.c.l.b16 %v3086
        %v3119 = vunpack.c.l.b16 %v3087
        %v3120 = vunpack.c.l.b16 %v3088
        %v3121 = vunpack.c.l.b16 %v3089
        %v3122 = vunpack.c.l.b16 %v3090
        %v3123 = vunpack.c.l.b16 %v3091
        %v3124 = vunpack.c.l.b16 %v3092
        %v3125 = vunpack.c.l.b16 %v3093
        %v3126 = vunpack.c.l.b16 %v3094
        %v3127 = vunpack.c.l.b16 %v3095
        %v3128 = vunpack.c.l.b16 %v3096
        %v3129 = vunpack.c.l.b16 %v3097
        %v3130 = vpack.c.b16 %v3115, %v3114
        %v3131 = vpack.c.b16 %v3117, %v3116
        %v3132 = vpack.c.b16 %v3119, %v3118
        %v3133 = vpack.c.b16 %v3121, %v3120
        %v3134 = vpack.c.b16 %v3123, %v3122
        %v3135 = vpack.c.b16 %v3125, %v3124
        %v3136 = vpack.c.b16 %v3127, %v3126
        %v3137 = vpack.c.b16 %v3129, %v3128
        %3146 = vmatpush.bf16.msra.mxu0 %v3137
        %3147 = vmatpush.bf16.msra.mxu0 %v3136
        %3148 = vmatpush.bf16.msra.mxu0 %v3135
        %3149 = vmatpush.bf16.msra.mxu0 %v3134
        %3150 = vmatpush.bf16.msra.mxu0 %v3133
        %3151 = vmatpush.bf16.msra.mxu0 %v3132
        %3152 = vmatpush.bf16.msra.mxu0 %v3131
        %3153 = vmatpush.bf16.msra.mxu0 %v3130
        %3154 = vmatmul.bf16.gmra.mxu0 %v3077
        %v3155 = vpop.f32.mrf.mxu0
        %v3156 = vadd.f32 0.0, %v3155
        %v3157 = vpop.f32.mrf.mxu0
        %v3158 = vadd.f32 0.0, %v3157
        %3159 = vmatmul.bf16.gmra.mxu0 %v3078
        %v3160 = vpop.f32.mrf.mxu0
        %v3161 = vadd.f32 0.0, %v3160
        %v3162 = vpop.f32.mrf.mxu0
        %v3163 = vadd.f32 0.0, %v3162
        %3164 = vmatmul.bf16.gmra.mxu0 %v3079
        %v3165 = vpop.f32.mrf.mxu0
        %v3166 = vadd.f32 0.0, %v3165
        %v3167 = vpop.f32.mrf.mxu0
        %v3168 = vadd.f32 0.0, %v3167
        %3169 = vmatmul.bf16.gmra.mxu0 %v3080
        %v3170 = vpop.f32.mrf.mxu0
        %v3171 = vadd.f32 0.0, %v3170
        %v3172 = vpop.f32.mrf.mxu0
        %v3173 = vadd.f32 0.0, %v3172
        %3174 = vdwg.mxu0
        %v3175 = vadd.f32 %v3061, %v3156
        %v3176 = vadd.f32 %v3062, %v3158
        %v3177 = vadd.f32 %v3063, %v3161
        %v3178 = vadd.f32 %v3064, %v3163
        %v3179 = vadd.f32 %v3065, %v3166
        %v3180 = vadd.f32 %v3066, %v3168
        %v3181 = vadd.f32 %v3067, %v3171
        %v3182 = vadd.f32 %v3068, %v3173
        %v3183 = vpack.c.bf16 %v2705, %v2704
        %v3184 = vpack.c.bf16 %v2707, %v2706
        %v3185 = vpack.c.bf16 %v2709, %v2708
        %v3186 = vpack.c.bf16 %v2711, %v2710
        %s3187 = scalar_lea.vmem %s6, 256
        %v3188 = vld [vmem:[%s3187] sm:$0xf]
        %v3189 = vld [vmem:[%s3187 + $0x4] sm:$0xf]
        %v3190 = vld [vmem:[%s3187 + $0x8] sm:$0xf]
        %v3191 = vld [vmem:[%s3187 + $0xc] sm:$0xf]
        %v3192 = vld [vmem:[%s3187 + $0x10] sm:$0xf]
        %v3193 = vld [vmem:[%s3187 + $0x14] sm:$0xf]
        %v3194 = vld [vmem:[%s3187 + $0x18] sm:$0xf]
        %v3195 = vld [vmem:[%s3187 + $0x1c] sm:$0xf]
        %v3196 = vld [vmem:[%s3187 + $0x20] sm:$0xf]
        %v3197 = vld [vmem:[%s3187 + $0x24] sm:$0xf]
        %v3198 = vld [vmem:[%s3187 + $0x28] sm:$0xf]
        %v3199 = vld [vmem:[%s3187 + $0x2c] sm:$0xf]
        %v3200 = vld [vmem:[%s3187 + $0x30] sm:$0xf]
        %v3201 = vld [vmem:[%s3187 + $0x34] sm:$0xf]
        %v3202 = vld [vmem:[%s3187 + $0x38] sm:$0xf]
        %v3203 = vld [vmem:[%s3187 + $0x3c] sm:$0xf]
        %v3220 = vunpack.c.l.b16 %v3188
        %v3221 = vunpack.c.l.b16 %v3189
        %v3222 = vunpack.c.l.b16 %v3190
        %v3223 = vunpack.c.l.b16 %v3191
        %v3224 = vunpack.c.l.b16 %v3192
        %v3225 = vunpack.c.l.b16 %v3193
        %v3226 = vunpack.c.l.b16 %v3194
        %v3227 = vunpack.c.l.b16 %v3195
        %v3228 = vunpack.c.l.b16 %v3196
        %v3229 = vunpack.c.l.b16 %v3197
        %v3230 = vunpack.c.l.b16 %v3198
        %v3231 = vunpack.c.l.b16 %v3199
        %v3232 = vunpack.c.l.b16 %v3200
        %v3233 = vunpack.c.l.b16 %v3201
        %v3234 = vunpack.c.l.b16 %v3202
        %v3235 = vunpack.c.l.b16 %v3203
        %v3236 = vpack.c.b16 %v3221, %v3220
        %v3237 = vpack.c.b16 %v3223, %v3222
        %v3238 = vpack.c.b16 %v3225, %v3224
        %v3239 = vpack.c.b16 %v3227, %v3226
        %v3240 = vpack.c.b16 %v3229, %v3228
        %v3241 = vpack.c.b16 %v3231, %v3230
        %v3242 = vpack.c.b16 %v3233, %v3232
        %v3243 = vpack.c.b16 %v3235, %v3234
        %3252 = vmatpush.bf16.msra.mxu0 %v3243
        %3253 = vmatpush.bf16.msra.mxu0 %v3242
        %3254 = vmatpush.bf16.msra.mxu0 %v3241
        %3255 = vmatpush.bf16.msra.mxu0 %v3240
        %3256 = vmatpush.bf16.msra.mxu0 %v3239
        %3257 = vmatpush.bf16.msra.mxu0 %v3238
        %3258 = vmatpush.bf16.msra.mxu0 %v3237
        %3259 = vmatpush.bf16.msra.mxu0 %v3236
        %3260 = vmatmul.bf16.gmra.mxu0 %v3183
        %v3261 = vpop.f32.mrf.mxu0
        %v3262 = vadd.f32 0.0, %v3261
        %v3263 = vpop.f32.mrf.mxu0
        %v3264 = vadd.f32 0.0, %v3263
        %3265 = vmatmul.bf16.gmra.mxu0 %v3184
        %v3266 = vpop.f32.mrf.mxu0
        %v3267 = vadd.f32 0.0, %v3266
        %v3268 = vpop.f32.mrf.mxu0
        %v3269 = vadd.f32 0.0, %v3268
        %3270 = vmatmul.bf16.gmra.mxu0 %v3185
        %v3271 = vpop.f32.mrf.mxu0
        %v3272 = vadd.f32 0.0, %v3271
        %v3273 = vpop.f32.mrf.mxu0
        %v3274 = vadd.f32 0.0, %v3273
        %3275 = vmatmul.bf16.gmra.mxu0 %v3186
        %v3276 = vpop.f32.mrf.mxu0
        %v3277 = vadd.f32 0.0, %v3276
        %v3278 = vpop.f32.mrf.mxu0
        %v3279 = vadd.f32 0.0, %v3278
        %3280 = vdwg.mxu0
        %v3281 = vadd.f32 %v3175, %v3262
        %v3282 = vadd.f32 %v3176, %v3264
        %v3283 = vadd.f32 %v3177, %v3267
        %v3284 = vadd.f32 %v3178, %v3269
        %v3285 = vadd.f32 %v3179, %v3272
        %v3286 = vadd.f32 %v3180, %v3274
        %v3287 = vadd.f32 %v3181, %v3277
        %v3288 = vadd.f32 %v3182, %v3279
        %v3289 = vmul.f32 %v2953, %v465
        %v3290 = vmul.f32 %v2952, %v470
        %v3291 = vmul.f32 %v2951, %v475
        %v3292 = vmul.f32 %v2950, %v480
        %v3293 = vmul.f32 %v2949, %v485
        %v3294 = vmul.f32 %v2948, %v490
        %v3295 = vmul.f32 %v2947, %v495
        %v3296 = vmul.f32 %v2954, %v500
        %v3297 = vpack.c.bf16 %v3290, %v3289
        %v3298 = vpack.c.bf16 %v3292, %v3291
        %v3299 = vpack.c.bf16 %v3294, %v3293
        %v3300 = vpack.c.bf16 %v3296, %v3295
        %s3301 = scalar_lea.vmem %s6, 320
        %v3302 = vld [vmem:[%s3301] sm:$0xf]
        %v3303 = vld [vmem:[%s3301 + $0x4] sm:$0xf]
        %v3304 = vld [vmem:[%s3301 + $0x8] sm:$0xf]
        %v3305 = vld [vmem:[%s3301 + $0xc] sm:$0xf]
        %v3306 = vld [vmem:[%s3301 + $0x10] sm:$0xf]
        %v3307 = vld [vmem:[%s3301 + $0x14] sm:$0xf]
        %v3308 = vld [vmem:[%s3301 + $0x18] sm:$0xf]
        %v3309 = vld [vmem:[%s3301 + $0x1c] sm:$0xf]
        %v3310 = vld [vmem:[%s3301 + $0x20] sm:$0xf]
        %v3311 = vld [vmem:[%s3301 + $0x24] sm:$0xf]
        %v3312 = vld [vmem:[%s3301 + $0x28] sm:$0xf]
        %v3313 = vld [vmem:[%s3301 + $0x2c] sm:$0xf]
        %v3314 = vld [vmem:[%s3301 + $0x30] sm:$0xf]
        %v3315 = vld [vmem:[%s3301 + $0x34] sm:$0xf]
        %v3316 = vld [vmem:[%s3301 + $0x38] sm:$0xf]
        %v3317 = vld [vmem:[%s3301 + $0x3c] sm:$0xf]
        %v3334 = vunpack.c.l.b16 %v3302
        %v3335 = vunpack.c.l.b16 %v3303
        %v3336 = vunpack.c.l.b16 %v3304
        %v3337 = vunpack.c.l.b16 %v3305
        %v3338 = vunpack.c.l.b16 %v3306
        %v3339 = vunpack.c.l.b16 %v3307
        %v3340 = vunpack.c.l.b16 %v3308
        %v3341 = vunpack.c.l.b16 %v3309
        %v3342 = vunpack.c.l.b16 %v3310
        %v3343 = vunpack.c.l.b16 %v3311
        %v3344 = vunpack.c.l.b16 %v3312
        %v3345 = vunpack.c.l.b16 %v3313
        %v3346 = vunpack.c.l.b16 %v3314
        %v3347 = vunpack.c.l.b16 %v3315
        %v3348 = vunpack.c.l.b16 %v3316
        %v3349 = vunpack.c.l.b16 %v3317
        %v3350 = vpack.c.b16 %v3335, %v3334
        %v3351 = vpack.c.b16 %v3337, %v3336
        %v3352 = vpack.c.b16 %v3339, %v3338
        %v3353 = vpack.c.b16 %v3341, %v3340
        %v3354 = vpack.c.b16 %v3343, %v3342
        %v3355 = vpack.c.b16 %v3345, %v3344
        %v3356 = vpack.c.b16 %v3347, %v3346
        %v3357 = vpack.c.b16 %v3349, %v3348
        %3366 = vmatpush.bf16.msra.mxu0 %v3357
        %3367 = vmatpush.bf16.msra.mxu0 %v3356
        %3368 = vmatpush.bf16.msra.mxu0 %v3355
        %3369 = vmatpush.bf16.msra.mxu0 %v3354
        %3370 = vmatpush.bf16.msra.mxu0 %v3353
        %3371 = vmatpush.bf16.msra.mxu0 %v3352
        %3372 = vmatpush.bf16.msra.mxu0 %v3351
        %3373 = vmatpush.bf16.msra.mxu0 %v3350
        %3374 = vmatmul.bf16.gmra.mxu0 %v3297
        %v3375 = vpop.f32.mrf.mxu0
        %v3376 = vadd.f32 0.0, %v3375
        %v3377 = vpop.f32.mrf.mxu0
        %v3378 = vadd.f32 0.0, %v3377
        %3379 = vmatmul.bf16.gmra.mxu0 %v3298
        %v3380 = vpop.f32.mrf.mxu0
        %v3381 = vadd.f32 0.0, %v3380
        %v3382 = vpop.f32.mrf.mxu0
        %v3383 = vadd.f32 0.0, %v3382
        %3384 = vmatmul.bf16.gmra.mxu0 %v3299
        %v3385 = vpop.f32.mrf.mxu0
        %v3386 = vadd.f32 0.0, %v3385
        %v3387 = vpop.f32.mrf.mxu0
        %v3388 = vadd.f32 0.0, %v3387
        %3389 = vmatmul.bf16.gmra.mxu0 %v3300
        %v3390 = vpop.f32.mrf.mxu0
        %v3391 = vadd.f32 0.0, %v3390
        %v3392 = vpop.f32.mrf.mxu0
        %v3393 = vadd.f32 0.0, %v3392
        %3394 = vdwg.mxu0
        %v3395 = vadd.f32 %v3281, %v3376
        %v3396 = vadd.f32 %v3282, %v3378
        %v3397 = vadd.f32 %v3283, %v3381
        %v3398 = vadd.f32 %v3284, %v3383
        %v3399 = vadd.f32 %v3285, %v3386
        %v3400 = vadd.f32 %v3286, %v3388
        %v3401 = vadd.f32 %v3287, %v3391
        %v3402 = vadd.f32 %v3288, %v3393
        %v3403 = vmul.f32 %v2726, %v1578
        %v3404 = vmul.f32 %v2725, %v1582
        %v3405 = vmul.f32 %v2724, %v1586
        %v3406 = vmul.f32 %v2723, %v1590
        %v3407 = vmul.f32 %v2722, %v1594
        %v3408 = vmul.f32 %v2721, %v1598
        %v3409 = vmul.f32 %v2720, %v1602
        %v3410 = vmul.f32 %v2727, %v1606
        %v3411 = vpack.c.bf16 %v3404, %v3403
        %v3412 = vpack.c.bf16 %v3406, %v3405
        %v3413 = vpack.c.bf16 %v3408, %v3407
        %v3414 = vpack.c.bf16 %v3410, %v3409
        %s3415 = scalar_lea.vmem %s6, 384
        %v3416 = vld [vmem:[%s3415] sm:$0xf]
        %v3417 = vld [vmem:[%s3415 + $0x4] sm:$0xf]
        %v3418 = vld [vmem:[%s3415 + $0x8] sm:$0xf]
        %v3419 = vld [vmem:[%s3415 + $0xc] sm:$0xf]
        %v3420 = vld [vmem:[%s3415 + $0x10] sm:$0xf]
        %v3421 = vld [vmem:[%s3415 + $0x14] sm:$0xf]
        %v3422 = vld [vmem:[%s3415 + $0x18] sm:$0xf]
        %v3423 = vld [vmem:[%s3415 + $0x1c] sm:$0xf]
        %v3424 = vld [vmem:[%s3415 + $0x20] sm:$0xf]
        %v3425 = vld [vmem:[%s3415 + $0x24] sm:$0xf]
        %v3426 = vld [vmem:[%s3415 + $0x28] sm:$0xf]
        %v3427 = vld [vmem:[%s3415 + $0x2c] sm:$0xf]
        %v3428 = vld [vmem:[%s3415 + $0x30] sm:$0xf]
        %v3429 = vld [vmem:[%s3415 + $0x34] sm:$0xf]
        %v3430 = vld [vmem:[%s3415 + $0x38] sm:$0xf]
        %v3431 = vld [vmem:[%s3415 + $0x3c] sm:$0xf]
        %v3448 = vunpack.c.l.b16 %v3416
        %v3449 = vunpack.c.l.b16 %v3417
        %v3450 = vunpack.c.l.b16 %v3418
        %v3451 = vunpack.c.l.b16 %v3419
        %v3452 = vunpack.c.l.b16 %v3420
        %v3453 = vunpack.c.l.b16 %v3421
        %v3454 = vunpack.c.l.b16 %v3422
        %v3455 = vunpack.c.l.b16 %v3423
        %v3456 = vunpack.c.l.b16 %v3424
        %v3457 = vunpack.c.l.b16 %v3425
        %v3458 = vunpack.c.l.b16 %v3426
        %v3459 = vunpack.c.l.b16 %v3427
        %v3460 = vunpack.c.l.b16 %v3428
        %v3461 = vunpack.c.l.b16 %v3429
        %v3462 = vunpack.c.l.b16 %v3430
        %v3463 = vunpack.c.l.b16 %v3431
        %v3464 = vpack.c.b16 %v3449, %v3448
        %v3465 = vpack.c.b16 %v3451, %v3450
        %v3466 = vpack.c.b16 %v3453, %v3452
        %v3467 = vpack.c.b16 %v3455, %v3454
        %v3468 = vpack.c.b16 %v3457, %v3456
        %v3469 = vpack.c.b16 %v3459, %v3458
        %v3470 = vpack.c.b16 %v3461, %v3460
        %v3471 = vpack.c.b16 %v3463, %v3462
        %3480 = vmatpush.bf16.msra.mxu0 %v3471
        %3481 = vmatpush.bf16.msra.mxu0 %v3470
        %3482 = vmatpush.bf16.msra.mxu0 %v3469
        %3483 = vmatpush.bf16.msra.mxu0 %v3468
        %3484 = vmatpush.bf16.msra.mxu0 %v3467
        %3485 = vmatpush.bf16.msra.mxu0 %v3466
        %3486 = vmatpush.bf16.msra.mxu0 %v3465
        %3487 = vmatpush.bf16.msra.mxu0 %v3464
        %3488 = vmatmul.bf16.gmra.mxu0 %v3411
        %v3489 = vpop.f32.mrf.mxu0
        %v3490 = vadd.f32 0.0, %v3489
        %v3491 = vpop.f32.mrf.mxu0
        %v3492 = vadd.f32 0.0, %v3491
        %3493 = vmatmul.bf16.gmra.mxu0 %v3412
        %v3494 = vpop.f32.mrf.mxu0
        %v3495 = vadd.f32 0.0, %v3494
        %v3496 = vpop.f32.mrf.mxu0
        %v3497 = vadd.f32 0.0, %v3496
        %3498 = vmatmul.bf16.gmra.mxu0 %v3413
        %v3499 = vpop.f32.mrf.mxu0
        %v3500 = vadd.f32 0.0, %v3499
        %v3501 = vpop.f32.mrf.mxu0
        %v3502 = vadd.f32 0.0, %v3501
        %3503 = vmatmul.bf16.gmra.mxu0 %v3414
        %v3504 = vpop.f32.mrf.mxu0
        %v3505 = vadd.f32 0.0, %v3504
        %v3506 = vpop.f32.mrf.mxu0
        %v3507 = vadd.f32 0.0, %v3506
        %3508 = vdwg.mxu0
        %v3509 = vadd.f32 %v3395, %v3490
        %v3510 = vadd.f32 %v3396, %v3492
        %v3511 = vadd.f32 %v3397, %v3495
        %v3512 = vadd.f32 %v3398, %v3497
        %v3513 = vadd.f32 %v3399, %v3500
        %v3514 = vadd.f32 %v3400, %v3502
        %v3515 = vadd.f32 %v3401, %v3505
        %v3516 = vadd.f32 %v3402, %v3507
        %v3517 = vmul.f32 %v2705, %v608
        %v3518 = vmul.f32 %v2706, %v612
        %v3519 = vmul.f32 %v2707, %v616
        %v3520 = vmul.f32 %v2708, %v620
        %v3521 = vmul.f32 %v2709, %v624
        %v3522 = vmul.f32 %v2710, %v628
        %v3523 = vmul.f32 %v2711, %v632
        %v3524 = vmul.f32 %v2704, %v636
        %v3525 = vpack.c.bf16 %v3518, %v3517
        %v3526 = vpack.c.bf16 %v3520, %v3519
        %v3527 = vpack.c.bf16 %v3522, %v3521
        %v3528 = vpack.c.bf16 %v3524, %v3523
        %s3529 = scalar_lea.vmem %s6, 448
        %v3530 = vld [vmem:[%s3529] sm:$0xf]
        %v3531 = vld [vmem:[%s3529 + $0x4] sm:$0xf]
        %v3532 = vld [vmem:[%s3529 + $0x8] sm:$0xf]
        %v3533 = vld [vmem:[%s3529 + $0xc] sm:$0xf]
        %v3534 = vld [vmem:[%s3529 + $0x10] sm:$0xf]
        %v3535 = vld [vmem:[%s3529 + $0x14] sm:$0xf]
        %v3536 = vld [vmem:[%s3529 + $0x18] sm:$0xf]
        %v3537 = vld [vmem:[%s3529 + $0x1c] sm:$0xf]
        %v3538 = vld [vmem:[%s3529 + $0x20] sm:$0xf]
        %v3539 = vld [vmem:[%s3529 + $0x24] sm:$0xf]
        %v3540 = vld [vmem:[%s3529 + $0x28] sm:$0xf]
        %v3541 = vld [vmem:[%s3529 + $0x2c] sm:$0xf]
        %v3542 = vld [vmem:[%s3529 + $0x30] sm:$0xf]
        %v3543 = vld [vmem:[%s3529 + $0x34] sm:$0xf]
        %v3544 = vld [vmem:[%s3529 + $0x38] sm:$0xf]
        %v3545 = vld [vmem:[%s3529 + $0x3c] sm:$0xf]
        %v3562 = vunpack.c.l.b16 %v3530
        %v3563 = vunpack.c.l.b16 %v3531
        %v3564 = vunpack.c.l.b16 %v3532
        %v3565 = vunpack.c.l.b16 %v3533
        %v3566 = vunpack.c.l.b16 %v3534
        %v3567 = vunpack.c.l.b16 %v3535
        %v3568 = vunpack.c.l.b16 %v3536
        %v3569 = vunpack.c.l.b16 %v3537
        %v3570 = vunpack.c.l.b16 %v3538
        %v3571 = vunpack.c.l.b16 %v3539
        %v3572 = vunpack.c.l.b16 %v3540
        %v3573 = vunpack.c.l.b16 %v3541
        %v3574 = vunpack.c.l.b16 %v3542
        %v3575 = vunpack.c.l.b16 %v3543
        %v3576 = vunpack.c.l.b16 %v3544
        %v3577 = vunpack.c.l.b16 %v3545
        %v3578 = vpack.c.b16 %v3563, %v3562
        %v3579 = vpack.c.b16 %v3565, %v3564
        %v3580 = vpack.c.b16 %v3567, %v3566
        %v3581 = vpack.c.b16 %v3569, %v3568
        %v3582 = vpack.c.b16 %v3571, %v3570
        %v3583 = vpack.c.b16 %v3573, %v3572
        %v3584 = vpack.c.b16 %v3575, %v3574
        %v3585 = vpack.c.b16 %v3577, %v3576
        %3594 = vmatpush.bf16.msra.mxu0 %v3585
        %3595 = vmatpush.bf16.msra.mxu0 %v3584
        %3596 = vmatpush.bf16.msra.mxu0 %v3583
        %3597 = vmatpush.bf16.msra.mxu0 %v3582
        %3598 = vmatpush.bf16.msra.mxu0 %v3581
        %3599 = vmatpush.bf16.msra.mxu0 %v3580
        %3600 = vmatpush.bf16.msra.mxu0 %v3579
        %3601 = vmatpush.bf16.msra.mxu0 %v3578
        %3602 = vmatmul.bf16.gmra.mxu0 %v3525
        %v3603 = vpop.f32.mrf.mxu0
        %v3604 = vadd.f32 0.0, %v3603
        %v3605 = vpop.f32.mrf.mxu0
        %v3606 = vadd.f32 0.0, %v3605
        %3607 = vmatmul.bf16.gmra.mxu0 %v3526
        %v3608 = vpop.f32.mrf.mxu0
        %v3609 = vadd.f32 0.0, %v3608
        %v3610 = vpop.f32.mrf.mxu0
        %v3611 = vadd.f32 0.0, %v3610
        %3612 = vmatmul.bf16.gmra.mxu0 %v3527
        %v3613 = vpop.f32.mrf.mxu0
        %v3614 = vadd.f32 0.0, %v3613
        %v3615 = vpop.f32.mrf.mxu0
        %v3616 = vadd.f32 0.0, %v3615
        %3617 = vmatmul.bf16.gmra.mxu0 %v3528
        %v3618 = vpop.f32.mrf.mxu0
        %v3619 = vadd.f32 0.0, %v3618
        %v3620 = vpop.f32.mrf.mxu0
        %v3621 = vadd.f32 0.0, %v3620
        %3622 = vdwg.mxu0
        %v3623 = vadd.f32 %v3509, %v3604
        %v3624 = vadd.f32 %v3510, %v3606
        %v3625 = vadd.f32 %v3511, %v3609
        %v3626 = vadd.f32 %v3512, %v3611
        %v3627 = vadd.f32 %v3513, %v3614
        %v3628 = vadd.f32 %v3514, %v3616
        %v3629 = vadd.f32 %v3515, %v3619
        %v3630 = vadd.f32 %v3516, %v3621
        %v3631 = vmul.f32 %v2952, %v706
        %v3632 = vmul.f32 %v2951, %v710
        %v3633 = vmul.f32 %v2950, %v714
        %v3634 = vmul.f32 %v2949, %v718
        %v3635 = vmul.f32 %v2948, %v722
        %v3636 = vmul.f32 %v2947, %v726
        %v3637 = vmul.f32 %v2954, %v730
        %v3638 = vmul.f32 %v2953, %v734
        %v3639 = vpack.c.bf16 %v3632, %v3631
        %v3640 = vpack.c.bf16 %v3634, %v3633
        %v3641 = vpack.c.bf16 %v3636, %v3635
        %v3642 = vpack.c.bf16 %v3638, %v3637
        %s3643 = scalar_lea.vmem %s6, 512
        %v3644 = vld [vmem:[%s3643] sm:$0xf]
        %v3645 = vld [vmem:[%s3643 + $0x4] sm:$0xf]
        %v3646 = vld [vmem:[%s3643 + $0x8] sm:$0xf]
        %v3647 = vld [vmem:[%s3643 + $0xc] sm:$0xf]
        %v3648 = vld [vmem:[%s3643 + $0x10] sm:$0xf]
        %v3649 = vld [vmem:[%s3643 + $0x14] sm:$0xf]
        %v3650 = vld [vmem:[%s3643 + $0x18] sm:$0xf]
        %v3651 = vld [vmem:[%s3643 + $0x1c] sm:$0xf]
        %v3652 = vld [vmem:[%s3643 + $0x20] sm:$0xf]
        %v3653 = vld [vmem:[%s3643 + $0x24] sm:$0xf]
        %v3654 = vld [vmem:[%s3643 + $0x28] sm:$0xf]
        %v3655 = vld [vmem:[%s3643 + $0x2c] sm:$0xf]
        %v3656 = vld [vmem:[%s3643 + $0x30] sm:$0xf]
        %v3657 = vld [vmem:[%s3643 + $0x34] sm:$0xf]
        %v3658 = vld [vmem:[%s3643 + $0x38] sm:$0xf]
        %v3659 = vld [vmem:[%s3643 + $0x3c] sm:$0xf]
        %v3676 = vunpack.c.l.b16 %v3644
        %v3677 = vunpack.c.l.b16 %v3645
        %v3678 = vunpack.c.l.b16 %v3646
        %v3679 = vunpack.c.l.b16 %v3647
        %v3680 = vunpack.c.l.b16 %v3648
        %v3681 = vunpack.c.l.b16 %v3649
        %v3682 = vunpack.c.l.b16 %v3650
        %v3683 = vunpack.c.l.b16 %v3651
        %v3684 = vunpack.c.l.b16 %v3652
        %v3685 = vunpack.c.l.b16 %v3653
        %v3686 = vunpack.c.l.b16 %v3654
        %v3687 = vunpack.c.l.b16 %v3655
        %v3688 = vunpack.c.l.b16 %v3656
        %v3689 = vunpack.c.l.b16 %v3657
        %v3690 = vunpack.c.l.b16 %v3658
        %v3691 = vunpack.c.l.b16 %v3659
        %v3692 = vpack.c.b16 %v3677, %v3676
        %v3693 = vpack.c.b16 %v3679, %v3678
        %v3694 = vpack.c.b16 %v3681, %v3680
        %v3695 = vpack.c.b16 %v3683, %v3682
        %v3696 = vpack.c.b16 %v3685, %v3684
        %v3697 = vpack.c.b16 %v3687, %v3686
        %v3698 = vpack.c.b16 %v3689, %v3688
        %v3699 = vpack.c.b16 %v3691, %v3690
        %3708 = vmatpush.bf16.msra.mxu0 %v3699
        %3709 = vmatpush.bf16.msra.mxu0 %v3698
        %3710 = vmatpush.bf16.msra.mxu0 %v3697
        %3711 = vmatpush.bf16.msra.mxu0 %v3696
        %3712 = vmatpush.bf16.msra.mxu0 %v3695
        %3713 = vmatpush.bf16.msra.mxu0 %v3694
        %3714 = vmatpush.bf16.msra.mxu0 %v3693
        %3715 = vmatpush.bf16.msra.mxu0 %v3692
        %3716 = vmatmul.bf16.gmra.mxu0 %v3639
        %v3717 = vpop.f32.mrf.mxu0
        %v3718 = vadd.f32 0.0, %v3717
        %v3719 = vpop.f32.mrf.mxu0
        %v3720 = vadd.f32 0.0, %v3719
        %3721 = vmatmul.bf16.gmra.mxu0 %v3640
        %v3722 = vpop.f32.mrf.mxu0
        %v3723 = vadd.f32 0.0, %v3722
        %v3724 = vpop.f32.mrf.mxu0
        %v3725 = vadd.f32 0.0, %v3724
        %3726 = vmatmul.bf16.gmra.mxu0 %v3641
        %v3727 = vpop.f32.mrf.mxu0
        %v3728 = vadd.f32 0.0, %v3727
        %v3729 = vpop.f32.mrf.mxu0
        %v3730 = vadd.f32 0.0, %v3729
        %3731 = vmatmul.bf16.gmra.mxu0 %v3642
        %v3732 = vpop.f32.mrf.mxu0
        %v3733 = vadd.f32 0.0, %v3732
        %v3734 = vpop.f32.mrf.mxu0
        %v3735 = vadd.f32 0.0, %v3734
        %3736 = vdwg.mxu0
        %v3737 = vadd.f32 %v3623, %v3718
        %v3738 = vadd.f32 %v3624, %v3720
        %v3739 = vadd.f32 %v3625, %v3723
        %v3740 = vadd.f32 %v3626, %v3725
        %v3741 = vadd.f32 %v3627, %v3728
        %v3742 = vadd.f32 %v3628, %v3730
        %v3743 = vadd.f32 %v3629, %v3733
        %v3744 = vadd.f32 %v3630, %v3735
        %s3745 = sld [smem:[#allocation2 + $0x2]]
        %v3746 = vadd.f32 %v3737, %v3738
        %v3747 = vadd.f32 %v3746, %v3739
        %v3748 = vadd.f32 %v3747, %v3740
        %v3749 = vadd.f32 %v3748, %v3741
        %v3750 = vadd.f32 %v3749, %v3742
        %v3751 = vadd.f32 %v3750, %v3743
        %v3752 = vadd.f32 %v3751, %v3744
        %v3753 = vrot.slane %v3752, 4
        %v3754 = vadd.f32 %v3752, %v3753
        %v3755 = vrot.slane %v3754, 2
        %v3756 = vadd.f32 %v3754, %v3755
        %v3757 = vrot.slane %v3756, 1
        %v3758 = vadd.f32 %v3756, %v3757
        %3760 = vrot.lane.b32.xlu0 %v3758, 96
        %v3761 = vpop.permute.xlu0 %3760
        %v3763 = vadd.f32 %v3758, %v3761
        %3764 = vrot.lane.b32.xlu0 %v3758, 64
        %v3765 = vpop.permute.xlu0 %3764
        %v3767 = vadd.f32 %v3763, %v3765
        %3768 = vrot.lane.b32.xlu0 %v3758, 32
        %v3769 = vpop.permute.xlu0 %3768
        %v3771 = vadd.f32 %v3767, %v3769
        %v3772 = vmul.f32 %v3771, 0.00390625
        %3774 = vrot.lane.b32.xlu0 %v3772, 32
        %v3775 = vpop.permute.xlu0 %3774
        %3777 = vrot.lane.b32.xlu0 %v3772, 64
        %v3778 = vpop.permute.xlu0 %3777
        %3780 = vrot.lane.b32.xlu0 %v3772, 96
        %v3781 = vpop.permute.xlu0 %3780
        %v3783 = vsel %vm803, %v3772, %v3775
        %v3784 = vsel %vm2606, %v3783, %v3778
        %v3785 = vsel %vm2608, %v3784, %v3781
        %v3786 = vperm.slane %v3785, 0
        %v3787 = vsub.f32 %v3737, %v3786
        %v3788 = vsub.f32 %v3738, %v3786
        %v3789 = vsub.f32 %v3739, %v3786
        %v3790 = vsub.f32 %v3740, %v3786
        %v3791 = vsub.f32 %v3741, %v3786
        %v3792 = vsub.f32 %v3742, %v3786
        %v3793 = vsub.f32 %v3743, %v3786
        %v3794 = vsub.f32 %v3744, %v3786
        %v3795 = vmul.f32 %v3787, %v3787
        %v3796 = vmul.f32 %v3788, %v3788
        %v3797 = vmul.f32 %v3789, %v3789
        %v3798 = vmul.f32 %v3790, %v3790
        %v3799 = vmul.f32 %v3791, %v3791
        %v3800 = vmul.f32 %v3792, %v3792
        %v3801 = vmul.f32 %v3793, %v3793
        %v3802 = vmul.f32 %v3794, %v3794
        %v3803 = vadd.f32 %v3795, %v3796
        %v3804 = vadd.f32 %v3803, %v3797
        %v3805 = vadd.f32 %v3804, %v3798
        %v3806 = vadd.f32 %v3805, %v3799
        %v3807 = vadd.f32 %v3806, %v3800
        %v3808 = vadd.f32 %v3807, %v3801
        %v3809 = vadd.f32 %v3808, %v3802
        %v3810 = vrot.slane %v3809, 4
        %v3811 = vadd.f32 %v3809, %v3810
        %v3812 = vrot.slane %v3811, 2
        %v3813 = vadd.f32 %v3811, %v3812
        %v3814 = vrot.slane %v3813, 1
        %v3815 = vadd.f32 %v3813, %v3814
        %3817 = vrot.lane.b32.xlu0 %v3815, 96
        %v3818 = vpop.permute.xlu0 %3817
        %v3820 = vadd.f32 %v3815, %v3818
        %3821 = vrot.lane.b32.xlu0 %v3815, 64
        %v3822 = vpop.permute.xlu0 %3821
        %v3824 = vadd.f32 %v3820, %v3822
        %3825 = vrot.lane.b32.xlu0 %v3815, 32
        %v3826 = vpop.permute.xlu0 %3825
        %v3828 = vadd.f32 %v3824, %v3826
        %v3829 = vmul.f32 %v3828, 0.00390625
        %v3830 = vadd.f32 %v3829, 1e-05
        %v3831 = vrsqrt.pop %v3830
        %v3832 = vmul.f32 %v3831, %v3830
        %v3833 = vmul.f32 %v3832, %v3831
        %v3834 = vmul.f32 0.5, %v3833
        %v3835 = vsub.f32 1.5, %v3834
        %v3836 = vmul.f32 %v3831, %v3835
        %vm3837 = vweird.f32 %v3830
        %vm3838 = vweird.f32 %v3831
        %vm3839 = vmor %vm3837, %vm3838
        %v3840 = vsel %vm3839, %v3831, %v3836
        %3842 = vrot.lane.b32.xlu0 %v3840, 32
        %v3843 = vpop.permute.xlu0 %3842
        %3845 = vrot.lane.b32.xlu0 %v3840, 64
        %v3846 = vpop.permute.xlu0 %3845
        %3848 = vrot.lane.b32.xlu0 %v3840, 96
        %v3849 = vpop.permute.xlu0 %3848
        %v3851 = vsel %vm803, %v3840, %v3843
        %v3852 = vsel %vm2606, %v3851, %v3846
        %v3853 = vsel %vm2608, %v3852, %v3849
        %v3854 = vperm.slane %v3853, 0
        %v3855 = vmul.f32 %v3787, %v3854
        %v3856 = vmul.f32 %v3788, %v3854
        %v3857 = vmul.f32 %v3789, %v3854
        %v3858 = vmul.f32 %v3790, %v3854
        %v3859 = vmul.f32 %v3791, %v3854
        %v3860 = vmul.f32 %v3792, %v3854
        %v3861 = vmul.f32 %v3793, %v3854
        %v3862 = vmul.f32 %v3794, %v3854
        %vm3863 = vcmp.ge.f32.partialorder %v3855, 0.0
        %vm3864 = vcmp.ge.f32.partialorder %v3856, 0.0
        %vm3865 = vcmp.ge.f32.partialorder %v3857, 0.0
        %vm3866 = vcmp.ge.f32.partialorder %v3858, 0.0
        %vm3867 = vcmp.ge.f32.partialorder %v3859, 0.0
        %vm3868 = vcmp.ge.f32.partialorder %v3860, 0.0
        %vm3869 = vcmp.ge.f32.partialorder %v3861, 0.0
        %vm3870 = vcmp.ge.f32.partialorder %v3862, 0.0
        %v3871 = vstv %s3745
        %v3872 = vmul.f32 %v3871, %v3855
        %v3873 = vmul.f32 %v3871, %v3856
        %v3874 = vmul.f32 %v3871, %v3857
        %v3875 = vmul.f32 %v3871, %v3858
        %v3876 = vmul.f32 %v3871, %v3859
        %v3877 = vmul.f32 %v3871, %v3860
        %v3878 = vmul.f32 %v3871, %v3861
        %v3879 = vmul.f32 %v3871, %v3862
        %v3880 = vsel %vm3863, %v3855, %v3872
        %v3881 = vsel %vm3864, %v3856, %v3873
        %v3882 = vsel %vm3865, %v3857, %v3874
        %v3883 = vsel %vm3866, %v3858, %v3875
        %v3884 = vsel %vm3867, %v3859, %v3876
        %v3885 = vsel %vm3868, %v3860, %v3877
        %v3886 = vsel %vm3869, %v3861, %v3878
        %v3887 = vsel %vm3870, %v3862, %v3879
        %v3888 = vrot.slane %v3880, 7
        %v3889 = vrot.slane %v3881, 7
        %v3890 = vrot.slane %v3882, 7
        %v3891 = vrot.slane %v3883, 7
        %v3892 = vrot.slane %v3884, 7
        %v3893 = vrot.slane %v3885, 7
        %v3894 = vrot.slane %v3886, 7
        %v3895 = vrot.slane %v3887, 7
        %v3896 = vsel %vm980, %v3894, %v3895
        %v3897 = vsel %vm980, %v3893, %v3894
        %v3898 = vsel %vm980, %v3892, %v3893
        %v3899 = vsel %vm980, %v3891, %v3892
        %v3900 = vsel %vm980, %v3890, %v3891
        %v3901 = vsel %vm980, %v3889, %v3890
        %v3902 = vsel %vm980, %v3888, %v3889
        %v3903 = vsel %vm980, %v3895, %v3888
        %v3904 = vmul.f32 %v3896, %v991
        %v3905 = vmul.f32 %v3903, %v995
        %v3906 = vmul.f32 %v3902, %v999
        %v3907 = vmul.f32 %v3901, %v1003
        %v3908 = vmul.f32 %v3900, %v1007
        %v3909 = vmul.f32 %v3899, %v1011
        %v3910 = vmul.f32 %v3898, %v1015
        %v3911 = vmul.f32 %v3897, %v1019
        %v3912 = vpack.c.bf16 %v3905, %v3904
        %v3913 = vpack.c.bf16 %v3907, %v3906
        %v3914 = vpack.c.bf16 %v3909, %v3908
        %v3915 = vpack.c.bf16 %v3911, %v3910
        %v3916 = vld [vmem:[%s7] sm:$0xf]
        %v3917 = vld [vmem:[%s7 + $0x4] sm:$0xf]
        %v3918 = vld [vmem:[%s7 + $0x8] sm:$0xf]
        %v3919 = vld [vmem:[%s7 + $0xc] sm:$0xf]
        %v3920 = vld [vmem:[%s7 + $0x10] sm:$0xf]
        %v3921 = vld [vmem:[%s7 + $0x14] sm:$0xf]
        %v3922 = vld [vmem:[%s7 + $0x18] sm:$0xf]
        %v3923 = vld [vmem:[%s7 + $0x1c] sm:$0xf]
        %v3924 = vld [vmem:[%s7 + $0x20] sm:$0xf]
        %v3925 = vld [vmem:[%s7 + $0x24] sm:$0xf]
        %v3926 = vld [vmem:[%s7 + $0x28] sm:$0xf]
        %v3927 = vld [vmem:[%s7 + $0x2c] sm:$0xf]
        %v3928 = vld [vmem:[%s7 + $0x30] sm:$0xf]
        %v3929 = vld [vmem:[%s7 + $0x34] sm:$0xf]
        %v3930 = vld [vmem:[%s7 + $0x38] sm:$0xf]
        %v3931 = vld [vmem:[%s7 + $0x3c] sm:$0xf]
        %v3932 = vmul.f32 %v3887, %v1039
        %v3933 = vmul.f32 %v3880, %v1043
        %v3934 = vmul.f32 %v3881, %v1047
        %v3935 = vmul.f32 %v3882, %v1051
        %v3936 = vmul.f32 %v3883, %v1055
        %v3937 = vmul.f32 %v3884, %v1059
        %v3938 = vmul.f32 %v3885, %v1063
        %v3939 = vmul.f32 %v3886, %v1067
        %v3940 = vpack.c.bf16 %v3933, %v3932
        %v3941 = vpack.c.bf16 %v3935, %v3934
        %v3942 = vpack.c.bf16 %v3937, %v3936
        %v3943 = vpack.c.bf16 %v3939, %v3938
        %s3944 = scalar_lea.vmem %s7, 64
        %v3945 = vld [vmem:[%s3944] sm:$0xf]
        %v3946 = vld [vmem:[%s3944 + $0x4] sm:$0xf]
        %v3947 = vld [vmem:[%s3944 + $0x8] sm:$0xf]
        %v3948 = vld [vmem:[%s3944 + $0xc] sm:$0xf]
        %v3949 = vld [vmem:[%s3944 + $0x10] sm:$0xf]
        %v3950 = vld [vmem:[%s3944 + $0x14] sm:$0xf]
        %v3951 = vld [vmem:[%s3944 + $0x18] sm:$0xf]
        %v3952 = vld [vmem:[%s3944 + $0x1c] sm:$0xf]
        %v3953 = vld [vmem:[%s3944 + $0x20] sm:$0xf]
        %v3954 = vld [vmem:[%s3944 + $0x24] sm:$0xf]
        %v3955 = vld [vmem:[%s3944 + $0x28] sm:$0xf]
        %v3956 = vld [vmem:[%s3944 + $0x2c] sm:$0xf]
        %v3957 = vld [vmem:[%s3944 + $0x30] sm:$0xf]
        %v3958 = vld [vmem:[%s3944 + $0x34] sm:$0xf]
        %v3959 = vld [vmem:[%s3944 + $0x38] sm:$0xf]
        %v3960 = vld [vmem:[%s3944 + $0x3c] sm:$0xf]
        %v3977 = vunpack.c.l.b16 %v3945
        %v3978 = vunpack.c.l.b16 %v3946
        %v3979 = vunpack.c.l.b16 %v3947
        %v3980 = vunpack.c.l.b16 %v3948
        %v3981 = vunpack.c.l.b16 %v3949
        %v3982 = vunpack.c.l.b16 %v3950
        %v3983 = vunpack.c.l.b16 %v3951
        %v3984 = vunpack.c.l.b16 %v3952
        %v3985 = vunpack.c.l.b16 %v3953
        %v3986 = vunpack.c.l.b16 %v3954
        %v3987 = vunpack.c.l.b16 %v3955
        %v3988 = vunpack.c.l.b16 %v3956
        %v3989 = vunpack.c.l.b16 %v3957
        %v3990 = vunpack.c.l.b16 %v3958
        %v3991 = vunpack.c.l.b16 %v3959
        %v3992 = vunpack.c.l.b16 %v3960
        %v3993 = vpack.c.b16 %v3978, %v3977
        %v3994 = vpack.c.b16 %v3980, %v3979
        %v3995 = vpack.c.b16 %v3982, %v3981
        %v3996 = vpack.c.b16 %v3984, %v3983
        %v3997 = vpack.c.b16 %v3986, %v3985
        %v3998 = vpack.c.b16 %v3988, %v3987
        %v3999 = vpack.c.b16 %v3990, %v3989
        %v4000 = vpack.c.b16 %v3992, %v3991
        %4009 = vmatpush.bf16.msra.mxu0 %v4000
        %4010 = vmatpush.bf16.msra.mxu0 %v3999
        %4011 = vmatpush.bf16.msra.mxu0 %v3998
        %4012 = vmatpush.bf16.msra.mxu0 %v3997
        %4013 = vmatpush.bf16.msra.mxu0 %v3996
        %4014 = vmatpush.bf16.msra.mxu0 %v3995
        %4015 = vmatpush.bf16.msra.mxu0 %v3994
        %4016 = vmatpush.bf16.msra.mxu0 %v3993
        %4017 = vmatmul.bf16.gmra.mxu0 %v3940
        %v4018 = vpop.f32.mrf.mxu0
        %v4019 = vadd.f32 0.0, %v4018
        %v4020 = vpop.f32.mrf.mxu0
        %v4021 = vadd.f32 0.0, %v4020
        %4022 = vmatmul.bf16.gmra.mxu0 %v3941
        %v4023 = vpop.f32.mrf.mxu0
        %v4024 = vadd.f32 0.0, %v4023
        %v4025 = vpop.f32.mrf.mxu0
        %v4026 = vadd.f32 0.0, %v4025
        %4027 = vmatmul.bf16.gmra.mxu0 %v3942
        %v4028 = vpop.f32.mrf.mxu0
        %v4029 = vadd.f32 0.0, %v4028
        %v4030 = vpop.f32.mrf.mxu0
        %v4031 = vadd.f32 0.0, %v4030
        %4032 = vmatmul.bf16.gmra.mxu0 %v3943
        %v4033 = vpop.f32.mrf.mxu0
        %v4034 = vadd.f32 0.0, %v4033
        %v4035 = vpop.f32.mrf.mxu0
        %v4036 = vadd.f32 0.0, %v4035
        %4037 = vdwg.mxu0
        %v4054 = vunpack.c.l.b16 %v3916
        %v4055 = vunpack.c.l.b16 %v3917
        %v4056 = vunpack.c.l.b16 %v3918
        %v4057 = vunpack.c.l.b16 %v3919
        %v4058 = vunpack.c.l.b16 %v3920
        %v4059 = vunpack.c.l.b16 %v3921
        %v4060 = vunpack.c.l.b16 %v3922
        %v4061 = vunpack.c.l.b16 %v3923
        %v4062 = vunpack.c.l.b16 %v3924
        %v4063 = vunpack.c.l.b16 %v3925
        %v4064 = vunpack.c.l.b16 %v3926
        %v4065 = vunpack.c.l.b16 %v3927
        %v4066 = vunpack.c.l.b16 %v3928
        %v4067 = vunpack.c.l.b16 %v3929
        %v4068 = vunpack.c.l.b16 %v3930
        %v4069 = vunpack.c.l.b16 %v3931
        %v4070 = vpack.c.b16 %v4055, %v4054
        %v4071 = vpack.c.b16 %v4057, %v4056
        %v4072 = vpack.c.b16 %v4059, %v4058
        %v4073 = vpack.c.b16 %v4061, %v4060
        %v4074 = vpack.c.b16 %v4063, %v4062
        %v4075 = vpack.c.b16 %v4065, %v4064
        %v4076 = vpack.c.b16 %v4067, %v4066
        %v4077 = vpack.c.b16 %v4069, %v4068
        %4086 = vmatpush.bf16.msra.mxu0 %v4077
        %4087 = vmatpush.bf16.msra.mxu0 %v4076
        %4088 = vmatpush.bf16.msra.mxu0 %v4075
        %4089 = vmatpush.bf16.msra.mxu0 %v4074
        %4090 = vmatpush.bf16.msra.mxu0 %v4073
        %4091 = vmatpush.bf16.msra.mxu0 %v4072
        %4092 = vmatpush.bf16.msra.mxu0 %v4071
        %4093 = vmatpush.bf16.msra.mxu0 %v4070
        %4094 = vmatmul.bf16.gmra.mxu0 %v3912
        %v4095 = vpop.f32.mrf.mxu0
        %v4096 = vadd.f32 %v4019, %v4095
        %v4097 = vpop.f32.mrf.mxu0
        %v4098 = vadd.f32 %v4021, %v4097
        %4099 = vmatmul.bf16.gmra.mxu0 %v3913
        %v4100 = vpop.f32.mrf.mxu0
        %v4101 = vadd.f32 %v4024, %v4100
        %v4102 = vpop.f32.mrf.mxu0
        %v4103 = vadd.f32 %v4026, %v4102
        %4104 = vmatmul.bf16.gmra.mxu0 %v3914
        %v4105 = vpop.f32.mrf.mxu0
        %v4106 = vadd.f32 %v4029, %v4105
        %v4107 = vpop.f32.mrf.mxu0
        %v4108 = vadd.f32 %v4031, %v4107
        %4109 = vmatmul.bf16.gmra.mxu0 %v3915
        %v4110 = vpop.f32.mrf.mxu0
        %v4111 = vadd.f32 %v4034, %v4110
        %v4112 = vpop.f32.mrf.mxu0
        %v4113 = vadd.f32 %v4036, %v4112
        %4114 = vdwg.mxu0
        %v4115 = vrot.slane %v3880, 1
        %v4116 = vrot.slane %v3881, 1
        %v4117 = vrot.slane %v3882, 1
        %v4118 = vrot.slane %v3883, 1
        %v4119 = vrot.slane %v3884, 1
        %v4120 = vrot.slane %v3885, 1
        %v4121 = vrot.slane %v3886, 1
        %v4122 = vrot.slane %v3887, 1
        %v4123 = vsel %vm453, %v4121, %v4122
        %v4124 = vsel %vm453, %v4120, %v4121
        %v4125 = vsel %vm453, %v4119, %v4120
        %v4126 = vsel %vm453, %v4118, %v4119
        %v4127 = vsel %vm453, %v4117, %v4118
        %v4128 = vsel %vm453, %v4116, %v4117
        %v4129 = vsel %vm453, %v4115, %v4116
        %v4130 = vsel %vm453, %v4122, %v4115
        %v4131 = vmul.f32 %v4130, %v1210
        %v4132 = vmul.f32 %v4129, %v1214
        %v4133 = vmul.f32 %v4128, %v1218
        %v4134 = vmul.f32 %v4127, %v1222
        %v4135 = vmul.f32 %v4126, %v1226
        %v4136 = vmul.f32 %v4125, %v1230
        %v4137 = vmul.f32 %v4124, %v1234
        %v4138 = vmul.f32 %v4123, %v1238
        %v4139 = vpack.c.bf16 %v4132, %v4131
        %v4140 = vpack.c.bf16 %v4134, %v4133
        %v4141 = vpack.c.bf16 %v4136, %v4135
        %v4142 = vpack.c.bf16 %v4138, %v4137
        %s4143 = scalar_lea.vmem %s7, 128
        %v4144 = vld [vmem:[%s4143] sm:$0xf]
        %v4145 = vld [vmem:[%s4143 + $0x4] sm:$0xf]
        %v4146 = vld [vmem:[%s4143 + $0x8] sm:$0xf]
        %v4147 = vld [vmem:[%s4143 + $0xc] sm:$0xf]
        %v4148 = vld [vmem:[%s4143 + $0x10] sm:$0xf]
        %v4149 = vld [vmem:[%s4143 + $0x14] sm:$0xf]
        %v4150 = vld [vmem:[%s4143 + $0x18] sm:$0xf]
        %v4151 = vld [vmem:[%s4143 + $0x1c] sm:$0xf]
        %v4152 = vld [vmem:[%s4143 + $0x20] sm:$0xf]
        %v4153 = vld [vmem:[%s4143 + $0x24] sm:$0xf]
        %v4154 = vld [vmem:[%s4143 + $0x28] sm:$0xf]
        %v4155 = vld [vmem:[%s4143 + $0x2c] sm:$0xf]
        %v4156 = vld [vmem:[%s4143 + $0x30] sm:$0xf]
        %v4157 = vld [vmem:[%s4143 + $0x34] sm:$0xf]
        %v4158 = vld [vmem:[%s4143 + $0x38] sm:$0xf]
        %v4159 = vld [vmem:[%s4143 + $0x3c] sm:$0xf]
        %v4176 = vunpack.c.l.b16 %v4144
        %v4177 = vunpack.c.l.b16 %v4145
        %v4178 = vunpack.c.l.b16 %v4146
        %v4179 = vunpack.c.l.b16 %v4147
        %v4180 = vunpack.c.l.b16 %v4148
        %v4181 = vunpack.c.l.b16 %v4149
        %v4182 = vunpack.c.l.b16 %v4150
        %v4183 = vunpack.c.l.b16 %v4151
        %v4184 = vunpack.c.l.b16 %v4152
        %v4185 = vunpack.c.l.b16 %v4153
        %v4186 = vunpack.c.l.b16 %v4154
        %v4187 = vunpack.c.l.b16 %v4155
        %v4188 = vunpack.c.l.b16 %v4156
        %v4189 = vunpack.c.l.b16 %v4157
        %v4190 = vunpack.c.l.b16 %v4158
        %v4191 = vunpack.c.l.b16 %v4159
        %v4192 = vpack.c.b16 %v4177, %v4176
        %v4193 = vpack.c.b16 %v4179, %v4178
        %v4194 = vpack.c.b16 %v4181, %v4180
        %v4195 = vpack.c.b16 %v4183, %v4182
        %v4196 = vpack.c.b16 %v4185, %v4184
        %v4197 = vpack.c.b16 %v4187, %v4186
        %v4198 = vpack.c.b16 %v4189, %v4188
        %v4199 = vpack.c.b16 %v4191, %v4190
        %4208 = vmatpush.bf16.msra.mxu0 %v4199
        %4209 = vmatpush.bf16.msra.mxu0 %v4198
        %4210 = vmatpush.bf16.msra.mxu0 %v4197
        %4211 = vmatpush.bf16.msra.mxu0 %v4196
        %4212 = vmatpush.bf16.msra.mxu0 %v4195
        %4213 = vmatpush.bf16.msra.mxu0 %v4194
        %4214 = vmatpush.bf16.msra.mxu0 %v4193
        %4215 = vmatpush.bf16.msra.mxu0 %v4192
        %4216 = vmatmul.bf16.gmra.mxu0 %v4139
        %v4217 = vpop.f32.mrf.mxu0
        %v4218 = vadd.f32 0.0, %v4217
        %v4219 = vpop.f32.mrf.mxu0
        %v4220 = vadd.f32 0.0, %v4219
        %4221 = vmatmul.bf16.gmra.mxu0 %v4140
        %v4222 = vpop.f32.mrf.mxu0
        %v4223 = vadd.f32 0.0, %v4222
        %v4224 = vpop.f32.mrf.mxu0
        %v4225 = vadd.f32 0.0, %v4224
        %4226 = vmatmul.bf16.gmra.mxu0 %v4141
        %v4227 = vpop.f32.mrf.mxu0
        %v4228 = vadd.f32 0.0, %v4227
        %v4229 = vpop.f32.mrf.mxu0
        %v4230 = vadd.f32 0.0, %v4229
        %4231 = vmatmul.bf16.gmra.mxu0 %v4142
        %v4232 = vpop.f32.mrf.mxu0
        %v4233 = vadd.f32 0.0, %v4232
        %v4234 = vpop.f32.mrf.mxu0
        %v4235 = vadd.f32 0.0, %v4234
        %4236 = vdwg.mxu0
        %v4237 = vadd.f32 %v4096, %v4218
        %v4238 = vadd.f32 %v4098, %v4220
        %v4239 = vadd.f32 %v4101, %v4223
        %v4240 = vadd.f32 %v4103, %v4225
        %v4241 = vadd.f32 %v4106, %v4228
        %v4242 = vadd.f32 %v4108, %v4230
        %v4243 = vadd.f32 %v4111, %v4233
        %v4244 = vadd.f32 %v4113, %v4235
        %v4245 = vmul.f32 %v3903, %v1320
        %v4246 = vmul.f32 %v3902, %v1324
        %v4247 = vmul.f32 %v3901, %v1328
        %v4248 = vmul.f32 %v3900, %v1332
        %v4249 = vmul.f32 %v3899, %v1336
        %v4250 = vmul.f32 %v3898, %v1340
        %v4251 = vmul.f32 %v3897, %v1344
        %v4252 = vmul.f32 %v3896, %v1348
        %v4253 = vpack.c.bf16 %v4246, %v4245
        %v4254 = vpack.c.bf16 %v4248, %v4247
        %v4255 = vpack.c.bf16 %v4250, %v4249
        %v4256 = vpack.c.bf16 %v4252, %v4251
        %s4257 = scalar_lea.vmem %s7, 192
        %v4258 = vld [vmem:[%s4257] sm:$0xf]
        %v4259 = vld [vmem:[%s4257 + $0x4] sm:$0xf]
        %v4260 = vld [vmem:[%s4257 + $0x8] sm:$0xf]
        %v4261 = vld [vmem:[%s4257 + $0xc] sm:$0xf]
        %v4262 = vld [vmem:[%s4257 + $0x10] sm:$0xf]
        %v4263 = vld [vmem:[%s4257 + $0x14] sm:$0xf]
        %v4264 = vld [vmem:[%s4257 + $0x18] sm:$0xf]
        %v4265 = vld [vmem:[%s4257 + $0x1c] sm:$0xf]
        %v4266 = vld [vmem:[%s4257 + $0x20] sm:$0xf]
        %v4267 = vld [vmem:[%s4257 + $0x24] sm:$0xf]
        %v4268 = vld [vmem:[%s4257 + $0x28] sm:$0xf]
        %v4269 = vld [vmem:[%s4257 + $0x2c] sm:$0xf]
        %v4270 = vld [vmem:[%s4257 + $0x30] sm:$0xf]
        %v4271 = vld [vmem:[%s4257 + $0x34] sm:$0xf]
        %v4272 = vld [vmem:[%s4257 + $0x38] sm:$0xf]
        %v4273 = vld [vmem:[%s4257 + $0x3c] sm:$0xf]
        %v4290 = vunpack.c.l.b16 %v4258
        %v4291 = vunpack.c.l.b16 %v4259
        %v4292 = vunpack.c.l.b16 %v4260
        %v4293 = vunpack.c.l.b16 %v4261
        %v4294 = vunpack.c.l.b16 %v4262
        %v4295 = vunpack.c.l.b16 %v4263
        %v4296 = vunpack.c.l.b16 %v4264
        %v4297 = vunpack.c.l.b16 %v4265
        %v4298 = vunpack.c.l.b16 %v4266
        %v4299 = vunpack.c.l.b16 %v4267
        %v4300 = vunpack.c.l.b16 %v4268
        %v4301 = vunpack.c.l.b16 %v4269
        %v4302 = vunpack.c.l.b16 %v4270
        %v4303 = vunpack.c.l.b16 %v4271
        %v4304 = vunpack.c.l.b16 %v4272
        %v4305 = vunpack.c.l.b16 %v4273
        %v4306 = vpack.c.b16 %v4291, %v4290
        %v4307 = vpack.c.b16 %v4293, %v4292
        %v4308 = vpack.c.b16 %v4295, %v4294
        %v4309 = vpack.c.b16 %v4297, %v4296
        %v4310 = vpack.c.b16 %v4299, %v4298
        %v4311 = vpack.c.b16 %v4301, %v4300
        %v4312 = vpack.c.b16 %v4303, %v4302
        %v4313 = vpack.c.b16 %v4305, %v4304
        %4322 = vmatpush.bf16.msra.mxu0 %v4313
        %4323 = vmatpush.bf16.msra.mxu0 %v4312
        %4324 = vmatpush.bf16.msra.mxu0 %v4311
        %4325 = vmatpush.bf16.msra.mxu0 %v4310
        %4326 = vmatpush.bf16.msra.mxu0 %v4309
        %4327 = vmatpush.bf16.msra.mxu0 %v4308
        %4328 = vmatpush.bf16.msra.mxu0 %v4307
        %4329 = vmatpush.bf16.msra.mxu0 %v4306
        %4330 = vmatmul.bf16.gmra.mxu0 %v4253
        %v4331 = vpop.f32.mrf.mxu0
        %v4332 = vadd.f32 0.0, %v4331
        %v4333 = vpop.f32.mrf.mxu0
        %v4334 = vadd.f32 0.0, %v4333
        %4335 = vmatmul.bf16.gmra.mxu0 %v4254
        %v4336 = vpop.f32.mrf.mxu0
        %v4337 = vadd.f32 0.0, %v4336
        %v4338 = vpop.f32.mrf.mxu0
        %v4339 = vadd.f32 0.0, %v4338
        %4340 = vmatmul.bf16.gmra.mxu0 %v4255
        %v4341 = vpop.f32.mrf.mxu0
        %v4342 = vadd.f32 0.0, %v4341
        %v4343 = vpop.f32.mrf.mxu0
        %v4344 = vadd.f32 0.0, %v4343
        %4345 = vmatmul.bf16.gmra.mxu0 %v4256
        %v4346 = vpop.f32.mrf.mxu0
        %v4347 = vadd.f32 0.0, %v4346
        %v4348 = vpop.f32.mrf.mxu0
        %v4349 = vadd.f32 0.0, %v4348
        %4350 = vdwg.mxu0
        %v4351 = vadd.f32 %v4237, %v4332
        %v4352 = vadd.f32 %v4238, %v4334
        %v4353 = vadd.f32 %v4239, %v4337
        %v4354 = vadd.f32 %v4240, %v4339
        %v4355 = vadd.f32 %v4241, %v4342
        %v4356 = vadd.f32 %v4242, %v4344
        %v4357 = vadd.f32 %v4243, %v4347
        %v4358 = vadd.f32 %v4244, %v4349
        %v4359 = vpack.c.bf16 %v3881, %v3880
        %v4360 = vpack.c.bf16 %v3883, %v3882
        %v4361 = vpack.c.bf16 %v3885, %v3884
        %v4362 = vpack.c.bf16 %v3887, %v3886
        %s4363 = scalar_lea.vmem %s7, 256
        %v4364 = vld [vmem:[%s4363] sm:$0xf]
        %v4365 = vld [vmem:[%s4363 + $0x4] sm:$0xf]
        %v4366 = vld [vmem:[%s4363 + $0x8] sm:$0xf]
        %v4367 = vld [vmem:[%s4363 + $0xc] sm:$0xf]
        %v4368 = vld [vmem:[%s4363 + $0x10] sm:$0xf]
        %v4369 = vld [vmem:[%s4363 + $0x14] sm:$0xf]
        %v4370 = vld [vmem:[%s4363 + $0x18] sm:$0xf]
        %v4371 = vld [vmem:[%s4363 + $0x1c] sm:$0xf]
        %v4372 = vld [vmem:[%s4363 + $0x20] sm:$0xf]
        %v4373 = vld [vmem:[%s4363 + $0x24] sm:$0xf]
        %v4374 = vld [vmem:[%s4363 + $0x28] sm:$0xf]
        %v4375 = vld [vmem:[%s4363 + $0x2c] sm:$0xf]
        %v4376 = vld [vmem:[%s4363 + $0x30] sm:$0xf]
        %v4377 = vld [vmem:[%s4363 + $0x34] sm:$0xf]
        %v4378 = vld [vmem:[%s4363 + $0x38] sm:$0xf]
        %v4379 = vld [vmem:[%s4363 + $0x3c] sm:$0xf]
        %v4396 = vunpack.c.l.b16 %v4364
        %v4397 = vunpack.c.l.b16 %v4365
        %v4398 = vunpack.c.l.b16 %v4366
        %v4399 = vunpack.c.l.b16 %v4367
        %v4400 = vunpack.c.l.b16 %v4368
        %v4401 = vunpack.c.l.b16 %v4369
        %v4402 = vunpack.c.l.b16 %v4370
        %v4403 = vunpack.c.l.b16 %v4371
        %v4404 = vunpack.c.l.b16 %v4372
        %v4405 = vunpack.c.l.b16 %v4373
        %v4406 = vunpack.c.l.b16 %v4374
        %v4407 = vunpack.c.l.b16 %v4375
        %v4408 = vunpack.c.l.b16 %v4376
        %v4409 = vunpack.c.l.b16 %v4377
        %v4410 = vunpack.c.l.b16 %v4378
        %v4411 = vunpack.c.l.b16 %v4379
        %v4412 = vpack.c.b16 %v4397, %v4396
        %v4413 = vpack.c.b16 %v4399, %v4398
        %v4414 = vpack.c.b16 %v4401, %v4400
        %v4415 = vpack.c.b16 %v4403, %v4402
        %v4416 = vpack.c.b16 %v4405, %v4404
        %v4417 = vpack.c.b16 %v4407, %v4406
        %v4418 = vpack.c.b16 %v4409, %v4408
        %v4419 = vpack.c.b16 %v4411, %v4410
        %4428 = vmatpush.bf16.msra.mxu0 %v4419
        %4429 = vmatpush.bf16.msra.mxu0 %v4418
        %4430 = vmatpush.bf16.msra.mxu0 %v4417
        %4431 = vmatpush.bf16.msra.mxu0 %v4416
        %4432 = vmatpush.bf16.msra.mxu0 %v4415
        %4433 = vmatpush.bf16.msra.mxu0 %v4414
        %4434 = vmatpush.bf16.msra.mxu0 %v4413
        %4435 = vmatpush.bf16.msra.mxu0 %v4412
        %4436 = vmatmul.bf16.gmra.mxu0 %v4359
        %v4437 = vpop.f32.mrf.mxu0
        %v4438 = vadd.f32 0.0, %v4437
        %v4439 = vpop.f32.mrf.mxu0
        %v4440 = vadd.f32 0.0, %v4439
        %4441 = vmatmul.bf16.gmra.mxu0 %v4360
        %v4442 = vpop.f32.mrf.mxu0
        %v4443 = vadd.f32 0.0, %v4442
        %v4444 = vpop.f32.mrf.mxu0
        %v4445 = vadd.f32 0.0, %v4444
        %4446 = vmatmul.bf16.gmra.mxu0 %v4361
        %v4447 = vpop.f32.mrf.mxu0
        %v4448 = vadd.f32 0.0, %v4447
        %v4449 = vpop.f32.mrf.mxu0
        %v4450 = vadd.f32 0.0, %v4449
        %4451 = vmatmul.bf16.gmra.mxu0 %v4362
        %v4452 = vpop.f32.mrf.mxu0
        %v4453 = vadd.f32 0.0, %v4452
        %v4454 = vpop.f32.mrf.mxu0
        %v4455 = vadd.f32 0.0, %v4454
        %4456 = vdwg.mxu0
        %v4457 = vadd.f32 %v4351, %v4438
        %v4458 = vadd.f32 %v4352, %v4440
        %v4459 = vadd.f32 %v4353, %v4443
        %v4460 = vadd.f32 %v4354, %v4445
        %v4461 = vadd.f32 %v4355, %v4448
        %v4462 = vadd.f32 %v4356, %v4450
        %v4463 = vadd.f32 %v4357, %v4453
        %v4464 = vadd.f32 %v4358, %v4455
        %v4465 = vmul.f32 %v4129, %v465
        %v4466 = vmul.f32 %v4128, %v470
        %v4467 = vmul.f32 %v4127, %v475
        %v4468 = vmul.f32 %v4126, %v480
        %v4469 = vmul.f32 %v4125, %v485
        %v4470 = vmul.f32 %v4124, %v490
        %v4471 = vmul.f32 %v4123, %v495
        %v4472 = vmul.f32 %v4130, %v500
        %v4473 = vpack.c.bf16 %v4466, %v4465
        %v4474 = vpack.c.bf16 %v4468, %v4467
        %v4475 = vpack.c.bf16 %v4470, %v4469
        %v4476 = vpack.c.bf16 %v4472, %v4471
        %s4477 = scalar_lea.vmem %s7, 320
        %v4478 = vld [vmem:[%s4477] sm:$0xf]
        %v4479 = vld [vmem:[%s4477 + $0x4] sm:$0xf]
        %v4480 = vld [vmem:[%s4477 + $0x8] sm:$0xf]
        %v4481 = vld [vmem:[%s4477 + $0xc] sm:$0xf]
        %v4482 = vld [vmem:[%s4477 + $0x10] sm:$0xf]
        %v4483 = vld [vmem:[%s4477 + $0x14] sm:$0xf]
        %v4484 = vld [vmem:[%s4477 + $0x18] sm:$0xf]
        %v4485 = vld [vmem:[%s4477 + $0x1c] sm:$0xf]
        %v4486 = vld [vmem:[%s4477 + $0x20] sm:$0xf]
        %v4487 = vld [vmem:[%s4477 + $0x24] sm:$0xf]
        %v4488 = vld [vmem:[%s4477 + $0x28] sm:$0xf]
        %v4489 = vld [vmem:[%s4477 + $0x2c] sm:$0xf]
        %v4490 = vld [vmem:[%s4477 + $0x30] sm:$0xf]
        %v4491 = vld [vmem:[%s4477 + $0x34] sm:$0xf]
        %v4492 = vld [vmem:[%s4477 + $0x38] sm:$0xf]
        %v4493 = vld [vmem:[%s4477 + $0x3c] sm:$0xf]
        %v4510 = vunpack.c.l.b16 %v4478
        %v4511 = vunpack.c.l.b16 %v4479
        %v4512 = vunpack.c.l.b16 %v4480
        %v4513 = vunpack.c.l.b16 %v4481
        %v4514 = vunpack.c.l.b16 %v4482
        %v4515 = vunpack.c.l.b16 %v4483
        %v4516 = vunpack.c.l.b16 %v4484
        %v4517 = vunpack.c.l.b16 %v4485
        %v4518 = vunpack.c.l.b16 %v4486
        %v4519 = vunpack.c.l.b16 %v4487
        %v4520 = vunpack.c.l.b16 %v4488
        %v4521 = vunpack.c.l.b16 %v4489
        %v4522 = vunpack.c.l.b16 %v4490
        %v4523 = vunpack.c.l.b16 %v4491
        %v4524 = vunpack.c.l.b16 %v4492
        %v4525 = vunpack.c.l.b16 %v4493
        %v4526 = vpack.c.b16 %v4511, %v4510
        %v4527 = vpack.c.b16 %v4513, %v4512
        %v4528 = vpack.c.b16 %v4515, %v4514
        %v4529 = vpack.c.b16 %v4517, %v4516
        %v4530 = vpack.c.b16 %v4519, %v4518
        %v4531 = vpack.c.b16 %v4521, %v4520
        %v4532 = vpack.c.b16 %v4523, %v4522
        %v4533 = vpack.c.b16 %v4525, %v4524
        %4542 = vmatpush.bf16.msra.mxu0 %v4533
        %4543 = vmatpush.bf16.msra.mxu0 %v4532
        %4544 = vmatpush.bf16.msra.mxu0 %v4531
        %4545 = vmatpush.bf16.msra.mxu0 %v4530
        %4546 = vmatpush.bf16.msra.mxu0 %v4529
        %4547 = vmatpush.bf16.msra.mxu0 %v4528
        %4548 = vmatpush.bf16.msra.mxu0 %v4527
        %4549 = vmatpush.bf16.msra.mxu0 %v4526
        %4550 = vmatmul.bf16.gmra.mxu0 %v4473
        %v4551 = vpop.f32.mrf.mxu0
        %v4552 = vadd.f32 0.0, %v4551
        %v4553 = vpop.f32.mrf.mxu0
        %v4554 = vadd.f32 0.0, %v4553
        %4555 = vmatmul.bf16.gmra.mxu0 %v4474
        %v4556 = vpop.f32.mrf.mxu0
        %v4557 = vadd.f32 0.0, %v4556
        %v4558 = vpop.f32.mrf.mxu0
        %v4559 = vadd.f32 0.0, %v4558
        %4560 = vmatmul.bf16.gmra.mxu0 %v4475
        %v4561 = vpop.f32.mrf.mxu0
        %v4562 = vadd.f32 0.0, %v4561
        %v4563 = vpop.f32.mrf.mxu0
        %v4564 = vadd.f32 0.0, %v4563
        %4565 = vmatmul.bf16.gmra.mxu0 %v4476
        %v4566 = vpop.f32.mrf.mxu0
        %v4567 = vadd.f32 0.0, %v4566
        %v4568 = vpop.f32.mrf.mxu0
        %v4569 = vadd.f32 0.0, %v4568
        %4570 = vdwg.mxu0
        %v4571 = vadd.f32 %v4457, %v4552
        %v4572 = vadd.f32 %v4458, %v4554
        %v4573 = vadd.f32 %v4459, %v4557
        %v4574 = vadd.f32 %v4460, %v4559
        %v4575 = vadd.f32 %v4461, %v4562
        %v4576 = vadd.f32 %v4462, %v4564
        %v4577 = vadd.f32 %v4463, %v4567
        %v4578 = vadd.f32 %v4464, %v4569
        %v4579 = vmul.f32 %v3902, %v1578
        %v4580 = vmul.f32 %v3901, %v1582
        %v4581 = vmul.f32 %v3900, %v1586
        %v4582 = vmul.f32 %v3899, %v1590
        %v4583 = vmul.f32 %v3898, %v1594
        %v4584 = vmul.f32 %v3897, %v1598
        %v4585 = vmul.f32 %v3896, %v1602
        %v4586 = vmul.f32 %v3903, %v1606
        %v4587 = vpack.c.bf16 %v4580, %v4579
        %v4588 = vpack.c.bf16 %v4582, %v4581
        %v4589 = vpack.c.bf16 %v4584, %v4583
        %v4590 = vpack.c.bf16 %v4586, %v4585
        %s4591 = scalar_lea.vmem %s7, 384
        %v4592 = vld [vmem:[%s4591] sm:$0xf]
        %v4593 = vld [vmem:[%s4591 + $0x4] sm:$0xf]
        %v4594 = vld [vmem:[%s4591 + $0x8] sm:$0xf]
        %v4595 = vld [vmem:[%s4591 + $0xc] sm:$0xf]
        %v4596 = vld [vmem:[%s4591 + $0x10] sm:$0xf]
        %v4597 = vld [vmem:[%s4591 + $0x14] sm:$0xf]
        %v4598 = vld [vmem:[%s4591 + $0x18] sm:$0xf]
        %v4599 = vld [vmem:[%s4591 + $0x1c] sm:$0xf]
        %v4600 = vld [vmem:[%s4591 + $0x20] sm:$0xf]
        %v4601 = vld [vmem:[%s4591 + $0x24] sm:$0xf]
        %v4602 = vld [vmem:[%s4591 + $0x28] sm:$0xf]
        %v4603 = vld [vmem:[%s4591 + $0x2c] sm:$0xf]
        %v4604 = vld [vmem:[%s4591 + $0x30] sm:$0xf]
        %v4605 = vld [vmem:[%s4591 + $0x34] sm:$0xf]
        %v4606 = vld [vmem:[%s4591 + $0x38] sm:$0xf]
        %v4607 = vld [vmem:[%s4591 + $0x3c] sm:$0xf]
        %v4624 = vunpack.c.l.b16 %v4592
        %v4625 = vunpack.c.l.b16 %v4593
        %v4626 = vunpack.c.l.b16 %v4594
        %v4627 = vunpack.c.l.b16 %v4595
        %v4628 = vunpack.c.l.b16 %v4596
        %v4629 = vunpack.c.l.b16 %v4597
        %v4630 = vunpack.c.l.b16 %v4598
        %v4631 = vunpack.c.l.b16 %v4599
        %v4632 = vunpack.c.l.b16 %v4600
        %v4633 = vunpack.c.l.b16 %v4601
        %v4634 = vunpack.c.l.b16 %v4602
        %v4635 = vunpack.c.l.b16 %v4603
        %v4636 = vunpack.c.l.b16 %v4604
        %v4637 = vunpack.c.l.b16 %v4605
        %v4638 = vunpack.c.l.b16 %v4606
        %v4639 = vunpack.c.l.b16 %v4607
        %v4640 = vpack.c.b16 %v4625, %v4624
        %v4641 = vpack.c.b16 %v4627, %v4626
        %v4642 = vpack.c.b16 %v4629, %v4628
        %v4643 = vpack.c.b16 %v4631, %v4630
        %v4644 = vpack.c.b16 %v4633, %v4632
        %v4645 = vpack.c.b16 %v4635, %v4634
        %v4646 = vpack.c.b16 %v4637, %v4636
        %v4647 = vpack.c.b16 %v4639, %v4638
        %4656 = vmatpush.bf16.msra.mxu0 %v4647
        %4657 = vmatpush.bf16.msra.mxu0 %v4646
        %4658 = vmatpush.bf16.msra.mxu0 %v4645
        %4659 = vmatpush.bf16.msra.mxu0 %v4644
        %4660 = vmatpush.bf16.msra.mxu0 %v4643
        %4661 = vmatpush.bf16.msra.mxu0 %v4642
        %4662 = vmatpush.bf16.msra.mxu0 %v4641
        %4663 = vmatpush.bf16.msra.mxu0 %v4640
        %4664 = vmatmul.bf16.gmra.mxu0 %v4587
        %v4665 = vpop.f32.mrf.mxu0
        %v4666 = vadd.f32 0.0, %v4665
        %v4667 = vpop.f32.mrf.mxu0
        %v4668 = vadd.f32 0.0, %v4667
        %4669 = vmatmul.bf16.gmra.mxu0 %v4588
        %v4670 = vpop.f32.mrf.mxu0
        %v4671 = vadd.f32 0.0, %v4670
        %v4672 = vpop.f32.mrf.mxu0
        %v4673 = vadd.f32 0.0, %v4672
        %4674 = vmatmul.bf16.gmra.mxu0 %v4589
        %v4675 = vpop.f32.mrf.mxu0
        %v4676 = vadd.f32 0.0, %v4675
        %v4677 = vpop.f32.mrf.mxu0
        %v4678 = vadd.f32 0.0, %v4677
        %4679 = vmatmul.bf16.gmra.mxu0 %v4590
        %v4680 = vpop.f32.mrf.mxu0
        %v4681 = vadd.f32 0.0, %v4680
        %v4682 = vpop.f32.mrf.mxu0
        %v4683 = vadd.f32 0.0, %v4682
        %4684 = vdwg.mxu0
        %v4685 = vadd.f32 %v4571, %v4666
        %v4686 = vadd.f32 %v4572, %v4668
        %v4687 = vadd.f32 %v4573, %v4671
        %v4688 = vadd.f32 %v4574, %v4673
        %v4689 = vadd.f32 %v4575, %v4676
        %v4690 = vadd.f32 %v4576, %v4678
        %v4691 = vadd.f32 %v4577, %v4681
        %v4692 = vadd.f32 %v4578, %v4683
        %v4693 = vmul.f32 %v3881, %v608
        %v4694 = vmul.f32 %v3882, %v612
        %v4695 = vmul.f32 %v3883, %v616
        %v4696 = vmul.f32 %v3884, %v620
        %v4697 = vmul.f32 %v3885, %v624
        %v4698 = vmul.f32 %v3886, %v628
        %v4699 = vmul.f32 %v3887, %v632
        %v4700 = vmul.f32 %v3880, %v636
        %v4701 = vpack.c.bf16 %v4694, %v4693
        %v4702 = vpack.c.bf16 %v4696, %v4695
        %v4703 = vpack.c.bf16 %v4698, %v4697
        %v4704 = vpack.c.bf16 %v4700, %v4699
        %s4705 = scalar_lea.vmem %s7, 448
        %v4706 = vld [vmem:[%s4705] sm:$0xf]
        %v4707 = vld [vmem:[%s4705 + $0x4] sm:$0xf]
        %v4708 = vld [vmem:[%s4705 + $0x8] sm:$0xf]
        %v4709 = vld [vmem:[%s4705 + $0xc] sm:$0xf]
        %v4710 = vld [vmem:[%s4705 + $0x10] sm:$0xf]
        %v4711 = vld [vmem:[%s4705 + $0x14] sm:$0xf]
        %v4712 = vld [vmem:[%s4705 + $0x18] sm:$0xf]
        %v4713 = vld [vmem:[%s4705 + $0x1c] sm:$0xf]
        %v4714 = vld [vmem:[%s4705 + $0x20] sm:$0xf]
        %v4715 = vld [vmem:[%s4705 + $0x24] sm:$0xf]
        %v4716 = vld [vmem:[%s4705 + $0x28] sm:$0xf]
        %v4717 = vld [vmem:[%s4705 + $0x2c] sm:$0xf]
        %v4718 = vld [vmem:[%s4705 + $0x30] sm:$0xf]
        %v4719 = vld [vmem:[%s4705 + $0x34] sm:$0xf]
        %v4720 = vld [vmem:[%s4705 + $0x38] sm:$0xf]
        %v4721 = vld [vmem:[%s4705 + $0x3c] sm:$0xf]
        %v4738 = vunpack.c.l.b16 %v4706
        %v4739 = vunpack.c.l.b16 %v4707
        %v4740 = vunpack.c.l.b16 %v4708
        %v4741 = vunpack.c.l.b16 %v4709
        %v4742 = vunpack.c.l.b16 %v4710
        %v4743 = vunpack.c.l.b16 %v4711
        %v4744 = vunpack.c.l.b16 %v4712
        %v4745 = vunpack.c.l.b16 %v4713
        %v4746 = vunpack.c.l.b16 %v4714
        %v4747 = vunpack.c.l.b16 %v4715
        %v4748 = vunpack.c.l.b16 %v4716
        %v4749 = vunpack.c.l.b16 %v4717
        %v4750 = vunpack.c.l.b16 %v4718
        %v4751 = vunpack.c.l.b16 %v4719
        %v4752 = vunpack.c.l.b16 %v4720
        %v4753 = vunpack.c.l.b16 %v4721
        %v4754 = vpack.c.b16 %v4739, %v4738
        %v4755 = vpack.c.b16 %v4741, %v4740
        %v4756 = vpack.c.b16 %v4743, %v4742
        %v4757 = vpack.c.b16 %v4745, %v4744
        %v4758 = vpack.c.b16 %v4747, %v4746
        %v4759 = vpack.c.b16 %v4749, %v4748
        %v4760 = vpack.c.b16 %v4751, %v4750
        %v4761 = vpack.c.b16 %v4753, %v4752
        %4770 = vmatpush.bf16.msra.mxu0 %v4761
        %4771 = vmatpush.bf16.msra.mxu0 %v4760
        %4772 = vmatpush.bf16.msra.mxu0 %v4759
        %4773 = vmatpush.bf16.msra.mxu0 %v4758
        %4774 = vmatpush.bf16.msra.mxu0 %v4757
        %4775 = vmatpush.bf16.msra.mxu0 %v4756
        %4776 = vmatpush.bf16.msra.mxu0 %v4755
        %4777 = vmatpush.bf16.msra.mxu0 %v4754
        %4778 = vmatmul.bf16.gmra.mxu0 %v4701
        %v4779 = vpop.f32.mrf.mxu0
        %v4780 = vadd.f32 0.0, %v4779
        %v4781 = vpop.f32.mrf.mxu0
        %v4782 = vadd.f32 0.0, %v4781
        %4783 = vmatmul.bf16.gmra.mxu0 %v4702
        %v4784 = vpop.f32.mrf.mxu0
        %v4785 = vadd.f32 0.0, %v4784
        %v4786 = vpop.f32.mrf.mxu0
        %v4787 = vadd.f32 0.0, %v4786
        %4788 = vmatmul.bf16.gmra.mxu0 %v4703
        %v4789 = vpop.f32.mrf.mxu0
        %v4790 = vadd.f32 0.0, %v4789
        %v4791 = vpop.f32.mrf.mxu0
        %v4792 = vadd.f32 0.0, %v4791
        %4793 = vmatmul.bf16.gmra.mxu0 %v4704
        %v4794 = vpop.f32.mrf.mxu0
        %v4795 = vadd.f32 0.0, %v4794
        %v4796 = vpop.f32.mrf.mxu0
        %v4797 = vadd.f32 0.0, %v4796
        %4798 = vdwg.mxu0
        %v4799 = vadd.f32 %v4685, %v4780
        %v4800 = vadd.f32 %v4686, %v4782
        %v4801 = vadd.f32 %v4687, %v4785
        %v4802 = vadd.f32 %v4688, %v4787
        %v4803 = vadd.f32 %v4689, %v4790
        %v4804 = vadd.f32 %v4690, %v4792
        %v4805 = vadd.f32 %v4691, %v4795
        %v4806 = vadd.f32 %v4692, %v4797
        %v4807 = vmul.f32 %v4128, %v706
        %v4808 = vmul.f32 %v4127, %v710
        %v4809 = vmul.f32 %v4126, %v714
        %v4810 = vmul.f32 %v4125, %v718
        %v4811 = vmul.f32 %v4124, %v722
        %v4812 = vmul.f32 %v4123, %v726
        %v4813 = vmul.f32 %v4130, %v730
        %v4814 = vmul.f32 %v4129, %v734
        %v4815 = vpack.c.bf16 %v4808, %v4807
        %v4816 = vpack.c.bf16 %v4810, %v4809
        %v4817 = vpack.c.bf16 %v4812, %v4811
        %v4818 = vpack.c.bf16 %v4814, %v4813
        %s4819 = scalar_lea.vmem %s7, 512
        %v4820 = vld [vmem:[%s4819] sm:$0xf]
        %v4821 = vld [vmem:[%s4819 + $0x4] sm:$0xf]
        %v4822 = vld [vmem:[%s4819 + $0x8] sm:$0xf]
        %v4823 = vld [vmem:[%s4819 + $0xc] sm:$0xf]
        %v4824 = vld [vmem:[%s4819 + $0x10] sm:$0xf]
        %v4825 = vld [vmem:[%s4819 + $0x14] sm:$0xf]
        %v4826 = vld [vmem:[%s4819 + $0x18] sm:$0xf]
        %v4827 = vld [vmem:[%s4819 + $0x1c] sm:$0xf]
        %v4828 = vld [vmem:[%s4819 + $0x20] sm:$0xf]
        %v4829 = vld [vmem:[%s4819 + $0x24] sm:$0xf]
        %v4830 = vld [vmem:[%s4819 + $0x28] sm:$0xf]
        %v4831 = vld [vmem:[%s4819 + $0x2c] sm:$0xf]
        %v4832 = vld [vmem:[%s4819 + $0x30] sm:$0xf]
        %v4833 = vld [vmem:[%s4819 + $0x34] sm:$0xf]
        %v4834 = vld [vmem:[%s4819 + $0x38] sm:$0xf]
        %v4835 = vld [vmem:[%s4819 + $0x3c] sm:$0xf]
        %v4852 = vunpack.c.l.b16 %v4820
        %v4853 = vunpack.c.l.b16 %v4821
        %v4854 = vunpack.c.l.b16 %v4822
        %v4855 = vunpack.c.l.b16 %v4823
        %v4856 = vunpack.c.l.b16 %v4824
        %v4857 = vunpack.c.l.b16 %v4825
        %v4858 = vunpack.c.l.b16 %v4826
        %v4859 = vunpack.c.l.b16 %v4827
        %v4860 = vunpack.c.l.b16 %v4828
        %v4861 = vunpack.c.l.b16 %v4829
        %v4862 = vunpack.c.l.b16 %v4830
        %v4863 = vunpack.c.l.b16 %v4831
        %v4864 = vunpack.c.l.b16 %v4832
        %v4865 = vunpack.c.l.b16 %v4833
        %v4866 = vunpack.c.l.b16 %v4834
        %v4867 = vunpack.c.l.b16 %v4835
        %v4868 = vpack.c.b16 %v4853, %v4852
        %v4869 = vpack.c.b16 %v4855, %v4854
        %v4870 = vpack.c.b16 %v4857, %v4856
        %v4871 = vpack.c.b16 %v4859, %v4858
        %v4872 = vpack.c.b16 %v4861, %v4860
        %v4873 = vpack.c.b16 %v4863, %v4862
        %v4874 = vpack.c.b16 %v4865, %v4864
        %v4875 = vpack.c.b16 %v4867, %v4866
        %4884 = vmatpush.bf16.msra.mxu0 %v4875
        %4885 = vmatpush.bf16.msra.mxu0 %v4874
        %4886 = vmatpush.bf16.msra.mxu0 %v4873
        %4887 = vmatpush.bf16.msra.mxu0 %v4872
        %4888 = vmatpush.bf16.msra.mxu0 %v4871
        %4889 = vmatpush.bf16.msra.mxu0 %v4870
        %4890 = vmatpush.bf16.msra.mxu0 %v4869
        %4891 = vmatpush.bf16.msra.mxu0 %v4868
        %4892 = vmatmul.bf16.gmra.mxu0 %v4815
        %v4893 = vpop.f32.mrf.mxu0
        %v4894 = vadd.f32 0.0, %v4893
        %v4895 = vpop.f32.mrf.mxu0
        %v4896 = vadd.f32 0.0, %v4895
        %4897 = vmatmul.bf16.gmra.mxu0 %v4816
        %v4898 = vpop.f32.mrf.mxu0
        %v4899 = vadd.f32 0.0, %v4898
        %v4900 = vpop.f32.mrf.mxu0
        %v4901 = vadd.f32 0.0, %v4900
        %4902 = vmatmul.bf16.gmra.mxu0 %v4817
        %v4903 = vpop.f32.mrf.mxu0
        %v4904 = vadd.f32 0.0, %v4903
        %v4905 = vpop.f32.mrf.mxu0
        %v4906 = vadd.f32 0.0, %v4905
        %4907 = vmatmul.bf16.gmra.mxu0 %v4818
        %v4908 = vpop.f32.mrf.mxu0
        %v4909 = vadd.f32 0.0, %v4908
        %v4910 = vpop.f32.mrf.mxu0
        %v4911 = vadd.f32 0.0, %v4910
        %4912 = vdwg.mxu0
        %v4913 = vadd.f32 %v4799, %v4894
        %v4914 = vadd.f32 %v4800, %v4896
        %v4915 = vadd.f32 %v4801, %v4899
        %v4916 = vadd.f32 %v4802, %v4901
        %v4917 = vadd.f32 %v4803, %v4904
        %v4918 = vadd.f32 %v4804, %v4906
        %v4919 = vadd.f32 %v4805, %v4909
        %v4920 = vadd.f32 %v4806, %v4911
        %s4921 = sld [smem:[#allocation2 + $0x3]]
        %v4922 = vadd.f32 %v4913, %v4914
        %v4923 = vadd.f32 %v4922, %v4915
        %v4924 = vadd.f32 %v4923, %v4916
        %v4925 = vadd.f32 %v4924, %v4917
        %v4926 = vadd.f32 %v4925, %v4918
        %v4927 = vadd.f32 %v4926, %v4919
        %v4928 = vadd.f32 %v4927, %v4920
        %v4929 = vrot.slane %v4928, 4
        %v4930 = vadd.f32 %v4928, %v4929
        %v4931 = vrot.slane %v4930, 2
        %v4932 = vadd.f32 %v4930, %v4931
        %v4933 = vrot.slane %v4932, 1
        %v4934 = vadd.f32 %v4932, %v4933
        %4936 = vrot.lane.b32.xlu0 %v4934, 96
        %v4937 = vpop.permute.xlu0 %4936
        %v4939 = vadd.f32 %v4934, %v4937
        %4940 = vrot.lane.b32.xlu0 %v4934, 64
        %v4941 = vpop.permute.xlu0 %4940
        %v4943 = vadd.f32 %v4939, %v4941
        %4944 = vrot.lane.b32.xlu0 %v4934, 32
        %v4945 = vpop.permute.xlu0 %4944
        %v4947 = vadd.f32 %v4943, %v4945
        %v4948 = vmul.f32 %v4947, 0.00390625
        %4950 = vrot.lane.b32.xlu0 %v4948, 32
        %v4951 = vpop.permute.xlu0 %4950
        %4953 = vrot.lane.b32.xlu0 %v4948, 64
        %v4954 = vpop.permute.xlu0 %4953
        %4956 = vrot.lane.b32.xlu0 %v4948, 96
        %v4957 = vpop.permute.xlu0 %4956
        %v4959 = vsel %vm803, %v4948, %v4951
        %v4960 = vsel %vm2606, %v4959, %v4954
        %v4961 = vsel %vm2608, %v4960, %v4957
        %v4962 = vperm.slane %v4961, 0
        %v4963 = vsub.f32 %v4913, %v4962
        %v4964 = vsub.f32 %v4914, %v4962
        %v4965 = vsub.f32 %v4915, %v4962
        %v4966 = vsub.f32 %v4916, %v4962
        %v4967 = vsub.f32 %v4917, %v4962
        %v4968 = vsub.f32 %v4918, %v4962
        %v4969 = vsub.f32 %v4919, %v4962
        %v4970 = vsub.f32 %v4920, %v4962
        %v4971 = vmul.f32 %v4963, %v4963
        %v4972 = vmul.f32 %v4964, %v4964
        %v4973 = vmul.f32 %v4965, %v4965
        %v4974 = vmul.f32 %v4966, %v4966
        %v4975 = vmul.f32 %v4967, %v4967
        %v4976 = vmul.f32 %v4968, %v4968
        %v4977 = vmul.f32 %v4969, %v4969
        %v4978 = vmul.f32 %v4970, %v4970
        %v4979 = vadd.f32 %v4971, %v4972
        %v4980 = vadd.f32 %v4979, %v4973
        %v4981 = vadd.f32 %v4980, %v4974
        %v4982 = vadd.f32 %v4981, %v4975
        %v4983 = vadd.f32 %v4982, %v4976
        %v4984 = vadd.f32 %v4983, %v4977
        %v4985 = vadd.f32 %v4984, %v4978
        %v4986 = vrot.slane %v4985, 4
        %v4987 = vadd.f32 %v4985, %v4986
        %v4988 = vrot.slane %v4987, 2
        %v4989 = vadd.f32 %v4987, %v4988
        %v4990 = vrot.slane %v4989, 1
        %v4991 = vadd.f32 %v4989, %v4990
        %4993 = vrot.lane.b32.xlu0 %v4991, 96
        %v4994 = vpop.permute.xlu0 %4993
        %v4996 = vadd.f32 %v4991, %v4994
        %4997 = vrot.lane.b32.xlu0 %v4991, 64
        %v4998 = vpop.permute.xlu0 %4997
        %v5000 = vadd.f32 %v4996, %v4998
        %5001 = vrot.lane.b32.xlu0 %v4991, 32
        %v5002 = vpop.permute.xlu0 %5001
        %v5004 = vadd.f32 %v5000, %v5002
        %v5005 = vmul.f32 %v5004, 0.00390625
        %v5006 = vadd.f32 %v5005, 1e-05
        %v5007 = vrsqrt.pop %v5006
        %v5008 = vmul.f32 %v5007, %v5006
        %v5009 = vmul.f32 %v5008, %v5007
        %v5010 = vmul.f32 0.5, %v5009
        %v5011 = vsub.f32 1.5, %v5010
        %v5012 = vmul.f32 %v5007, %v5011
        %vm5013 = vweird.f32 %v5006
        %vm5014 = vweird.f32 %v5007
        %vm5015 = vmor %vm5013, %vm5014
        %v5016 = vsel %vm5015, %v5007, %v5012
        %5018 = vrot.lane.b32.xlu0 %v5016, 32
        %v5019 = vpop.permute.xlu0 %5018
        %5021 = vrot.lane.b32.xlu0 %v5016, 64
        %v5022 = vpop.permute.xlu0 %5021
        %5024 = vrot.lane.b32.xlu0 %v5016, 96
        %v5025 = vpop.permute.xlu0 %5024
        %v5027 = vsel %vm803, %v5016, %v5019
        %v5028 = vsel %vm2606, %v5027, %v5022
        %v5029 = vsel %vm2608, %v5028, %v5025
        %v5030 = vperm.slane %v5029, 0
        %v5031 = vmul.f32 %v4963, %v5030
        %v5032 = vmul.f32 %v4964, %v5030
        %v5033 = vmul.f32 %v4965, %v5030
        %v5034 = vmul.f32 %v4966, %v5030
        %v5035 = vmul.f32 %v4967, %v5030
        %v5036 = vmul.f32 %v4968, %v5030
        %v5037 = vmul.f32 %v4969, %v5030
        %v5038 = vmul.f32 %v4970, %v5030
        %vm5039 = vcmp.ge.f32.partialorder %v5031, 0.0
        %vm5040 = vcmp.ge.f32.partialorder %v5032, 0.0
        %vm5041 = vcmp.ge.f32.partialorder %v5033, 0.0
        %vm5042 = vcmp.ge.f32.partialorder %v5034, 0.0
        %vm5043 = vcmp.ge.f32.partialorder %v5035, 0.0
        %vm5044 = vcmp.ge.f32.partialorder %v5036, 0.0
        %vm5045 = vcmp.ge.f32.partialorder %v5037, 0.0
        %vm5046 = vcmp.ge.f32.partialorder %v5038, 0.0
        %v5047 = vstv %s4921
        %v5048 = vmul.f32 %v5047, %v5031
        %v5049 = vmul.f32 %v5047, %v5032
        %v5050 = vmul.f32 %v5047, %v5033
        %v5051 = vmul.f32 %v5047, %v5034
        %v5052 = vmul.f32 %v5047, %v5035
        %v5053 = vmul.f32 %v5047, %v5036
        %v5054 = vmul.f32 %v5047, %v5037
        %v5055 = vmul.f32 %v5047, %v5038
        %v5056 = vsel %vm5039, %v5031, %v5048
        %v5057 = vsel %vm5040, %v5032, %v5049
        %v5058 = vsel %vm5041, %v5033, %v5050
        %v5059 = vsel %vm5042, %v5034, %v5051
        %v5060 = vsel %vm5043, %v5035, %v5052
        %v5061 = vsel %vm5044, %v5036, %v5053
        %v5062 = vsel %vm5045, %v5037, %v5054
        %v5063 = vsel %vm5046, %v5038, %v5055
        %v5064 = vld [vmem:[%s8] sm:$0xf]
        %v5065 = vld [vmem:[%s8 + $0x4] sm:$0xf]
        %v5066 = vld [vmem:[%s8 + $0x8] sm:$0xf]
        %v5067 = vld [vmem:[%s8 + $0xc] sm:$0xf]
        %v5068 = vld [vmem:[%s8 + $0x10] sm:$0xf]
        %v5069 = vld [vmem:[%s8 + $0x14] sm:$0xf]
        %v5070 = vld [vmem:[%s8 + $0x18] sm:$0xf]
        %v5071 = vld [vmem:[%s8 + $0x1c] sm:$0xf]
        %v5072 = vld [vmem:[%s8 + $0x20] sm:$0xf]
        %v5073 = vld [vmem:[%s8 + $0x24] sm:$0xf]
        %v5074 = vld [vmem:[%s8 + $0x28] sm:$0xf]
        %v5075 = vld [vmem:[%s8 + $0x2c] sm:$0xf]
        %v5076 = vld [vmem:[%s8 + $0x30] sm:$0xf]
        %v5077 = vld [vmem:[%s8 + $0x34] sm:$0xf]
        %v5078 = vld [vmem:[%s8 + $0x38] sm:$0xf]
        %v5079 = vld [vmem:[%s8 + $0x3c] sm:$0xf]
        %v5080 = vld [vmem:[%s9] sm:$0x1]
        %v5082 = vperm.slane %v5080, 0
        %v5100 = vunpack.c.l.b16 %v5064
        %v5101 = vunpack.c.l.b16 %v5065
        %v5102 = vunpack.c.l.b16 %v5066
        %v5103 = vunpack.c.l.b16 %v5067
        %v5104 = vunpack.c.l.b16 %v5068
        %v5105 = vunpack.c.l.b16 %v5069
        %v5106 = vunpack.c.l.b16 %v5070
        %v5107 = vunpack.c.l.b16 %v5071
        %v5108 = vunpack.c.l.b16 %v5072
        %v5109 = vunpack.c.l.b16 %v5073
        %v5110 = vunpack.c.l.b16 %v5074
        %v5111 = vunpack.c.l.b16 %v5075
        %v5112 = vunpack.c.l.b16 %v5076
        %v5113 = vunpack.c.l.b16 %v5077
        %v5114 = vunpack.c.l.b16 %v5078
        %v5115 = vunpack.c.l.b16 %v5079
        %v5116 = vpack.c.b16 %v5101, %v5100
        %v5117 = vpack.c.b16 %v5103, %v5102
        %v5118 = vpack.c.b16 %v5105, %v5104
        %v5119 = vpack.c.b16 %v5107, %v5106
        %v5120 = vpack.c.b16 %v5109, %v5108
        %v5121 = vpack.c.b16 %v5111, %v5110
        %v5122 = vpack.c.b16 %v5113, %v5112
        %v5123 = vpack.c.b16 %v5115, %v5114
        %5132 = vmatpush.bf16.msra.mxu0 %v5123
        %5133 = vmatpush.bf16.msra.mxu0 %v5122
        %5134 = vmatpush.bf16.msra.mxu0 %v5121
        %5135 = vmatpush.bf16.msra.mxu0 %v5120
        %5136 = vmatpush.bf16.msra.mxu0 %v5119
        %5137 = vmatpush.bf16.msra.mxu0 %v5118
        %5138 = vmatpush.bf16.msra.mxu0 %v5117
        %5139 = vmatpush.bf16.msra.mxu0 %v5116
        %5140 = vmatmul.bf16.gmra.mxu0 %v3183
        %v5141 = vpop.f32.mrf.mxu0
        %v5142 = vadd.f32 %v5082, %v5141
        %v5143 = vpop.f32.mrf.mxu0
        %v5144 = vadd.f32 %v5082, %v5143
        %5145 = vmatmul.bf16.gmra.mxu0 %v3184
        %v5146 = vpop.f32.mrf.mxu0
        %v5147 = vadd.f32 %v5082, %v5146
        %v5148 = vpop.f32.mrf.mxu0
        %v5149 = vadd.f32 %v5082, %v5148
        %5150 = vmatmul.bf16.gmra.mxu0 %v3185
        %v5151 = vpop.f32.mrf.mxu0
        %v5152 = vadd.f32 %v5082, %v5151
        %v5153 = vpop.f32.mrf.mxu0
        %v5154 = vadd.f32 %v5082, %v5153
        %5155 = vmatmul.bf16.gmra.mxu0 %v3186
        %v5156 = vpop.f32.mrf.mxu0
        %v5157 = vadd.f32 %v5082, %v5156
        %v5158 = vpop.f32.mrf.mxu0
        %v5159 = vadd.f32 %v5082, %v5158
        %5160 = vdwg.mxu0
        %v5161 = vadd.f32 %v5142, %v5056
        %v5162 = vadd.f32 %v5144, %v5057
        %v5163 = vadd.f32 %v5147, %v5058
        %v5164 = vadd.f32 %v5149, %v5059
        %v5165 = vadd.f32 %v5152, %v5060
        %v5166 = vadd.f32 %v5154, %v5061
        %v5167 = vadd.f32 %v5157, %v5062
        %v5168 = vadd.f32 %v5159, %v5063
        %5169 = vst [vmem:[%s420] sm:$0xff] %v5161
        %5170 = vst [vmem:[%s420 + $0x8] sm:$0xff] %v5162
        %5171 = vst [vmem:[%s420 + $0x10] sm:$0xff] %v5163
        %5172 = vst [vmem:[%s420 + $0x18] sm:$0xff] %v5164
        %5173 = vst [vmem:[%s420 + $0x20] sm:$0xff] %v5165
        %5174 = vst [vmem:[%s420 + $0x28] sm:$0xff] %v5166
        %5175 = vst [vmem:[%s420 + $0x30] sm:$0xff] %v5167
        %5176 = vst [vmem:[%s420 + $0x38] sm:$0xff] %v5168
        %p5177 = scmp.lt.s32.totalorder %s23, 1
        %s5178 = scalar_select %p5177, %s23, 1
        %s5179 = smul.addr %s5178, 8
        %s5180 = smul.addr %s5179, 8
        %s5181 = scalar_lea.vmem %s11, %s5180
        // Predicated region
        $region69: #{_lambda_.1} parent=63 // pred_check
          %p5182 = pneg %p282
        $region70: #{_lambda_.1} parent=63 // pred_check_branch
          %5184 = sbr.rel (%p5182) target = $region72
        $region71: #{_lambda_.1} parent=63 // pred_region
          _
        $region72: #{_lambda_.1} parent=63 // pred_fallthru
          _
      $region64: #{_lambda_.1} parent=5 // pred_fallthru
        _
      %p5185 = scmp.le.s32.totalorder 2, %s18
      // Predicated region
      $region73: #{_lambda_.1} parent=5 // pred_check
        %p5186 = pneg %p5185
      $region74: #{_lambda_.1} parent=5 // pred_check_branch
        %5188 = sbr.rel (%p5186) target = $region76
      $region75: #{_lambda_.1} parent=5 // pred_region
        %s5189 = ssub.s32 %s18, 2
        // Predicated region
        $region77: #{_lambda_.1} parent=75 // pred_check
          %p5190 = pneg %p288
        $region78: #{_lambda_.1} parent=75 // pred_check_branch
          %5192 = sbr.rel (%p5190) target = $region80
        $region79: #{_lambda_.1} parent=75 // pred_region
          %p5193 = scmp.lt.s32.totalorder %s24, 1
          %s5194 = scalar_select %p5193, %s24, 1
          %s5195 = smul.addr %s5194, 8
          %s5196 = smul.addr %s5195, 8
          %s5197 = scalar_lea.vmem %s11, %s5196
        $region80: #{_lambda_.1} parent=75 // pred_fallthru
          _
      $region76: #{_lambda_.1} parent=5 // pred_fallthru
        _
    $region6: #{_lambda_.1} parent=1 // loop_footer
      %s22 = sadd.s32 1, %s18
    $region7: #{_lambda_.1} parent=1 // loop_footer_branch
      %17 = sbr.rel target = $region3
    $region8: #{_lambda_.1} parent=1 // loop_exit
      _
    %5198 = vsyncpa [#allocation3], 1
    %s5199 = scalar_lea.sflag [#allocation3], 1
    %5200 = vsyncpa %s5199, 1

</llo_original>
